<compile_context>
chip_gen: v7x
topology: tpu7x:2x2x1
jax: 0.10.0
libtpu: 0.0.40
codegen_flags: <defaults>
</compile_context>

<pallas_src>
import jax
import jax.numpy as jnp
from jax import lax
from jax.experimental import pallas as pl
from jax.experimental.pallas import tpu as pltpu

EXPANSION = 4
BN_EPS = 1e-5


def _make_kernel(H, W, Cin, P, stride, has_proj, TH):
    """Builds the fused bottleneck kernel for static shapes."""
    Cout = EXPANSION * P
    s = stride
    Ho, Wo = H // s, W // s
    nRT = Ho // TH
    BH = TH * s                        # input rows covered by one body tile
    Lp = (TH - 1) * s + 3              # rows of (zero-padded) conv2 input needed per tile
    rows_from_body = min(BH, Lp - 1)
    need_bot = (Lp - 1) > BH           # only stride == 1 needs a bottom halo row
    f32, bf16 = jnp.float32, jnp.bfloat16

    def kernel(*refs):
        i = 2
        x_body, x_top = refs[0], refs[1]
        x_bot = None
        if need_bot:
            x_bot = refs[2]
            i = 3
        s1_ref, t1_ref, w1_ref, t2_ref, w2_ref, t3_ref, w3_ref = refs[i:i + 7]
        i += 7
        wsc_ref = None
        if has_proj:
            wsc_ref = refs[i]
            i += 1
        out_ref, padh, tap_buf = refs[i], refs[i + 1], refs[i + 2]

        rt = pl.program_id(1)

        # ---- assemble the Lp-row input window: [top halo, body rows, (bottom halo)] ----
        xb = x_body[...]
        if rows_from_body < BH:
            xb = xb[:rows_from_body]
        pieces = [x_top[...], xb]
        if need_bot:
            pieces.append(x_bot[...])
        xa = jnp.concatenate(pieces, axis=0)                          # (Lp, W, Cin) bf16

        # ---- pre-activation: relu(bn1(x)) in f32 ----
        a0 = jnp.maximum(xa.astype(f32) * s1_ref[...] + t1_ref[...], 0.0)   # (Lp, W, Cin)

        # ---- shortcut -> out_ref early (reduces live f32 residency) ----
        body = a0[1:1 + rows_from_body]                               # (BH, W, Cin)
        if has_proj:
            if s > 1:
                sc_in = lax.slice(body, (0, 0, 0),
                                  ((TH - 1) * s + 1, (Wo - 1) * s + 1, Cin),
                                  (s, s, 1))                          # (TH, Wo, Cin)
            else:
                sc_in = body
            sc = jnp.dot(sc_in.reshape(TH * Wo, Cin).astype(bf16), wsc_ref[...],
                         preferred_element_type=f32)
        else:
            sc = body.reshape(TH * Wo, Cout)                          # identity shortcut
        out_ref[...] = sc.astype(out_ref.dtype)

        # ---- conv1: 1x1 (bn2 scale folded into w1) + bias + relu ----
        c1 = jnp.dot(a0.reshape(Lp * W, Cin).astype(bf16), w1_ref[...],
                     preferred_element_type=f32)
        h = jnp.maximum(c1 + t2_ref[...], 0.0).astype(bf16).reshape(Lp, W, P)

        # ---- zero ONLY the halo of the conv2 input, store interior directly ----
        padh[:, 0:1, :] = jnp.zeros((Lp, 1, P), bf16)
        padh[:, W + 1:W + 2, :] = jnp.zeros((Lp, 1, P), bf16)
        padh[:, 1:W + 1, :] = h

        @pl.when(rt == 0)
        def _():                                                       # top image border
            padh[0:1, 1:W + 1, :] = jnp.zeros((1, W, P), bf16)

        if need_bot:
            @pl.when(rt == nRT - 1)
            def _():                                                   # bottom image border
                padh[Lp - 1:Lp, 1:W + 1, :] = jnp.zeros((1, W, P), bf16)

        # ---- conv2: 3x3/stride as ONE fused K=9P matmul over packed shifted taps ----
        for dy in range(3):
            for dx in range(3):
                k = dy * 3 + dx
                if s == 1:
                    tap = padh[dy:dy + TH, dx:dx + Wo, :]
                else:
                    tap = padh[pl.ds(dy, TH, stride=s), pl.ds(dx, Wo, stride=s), :]
                tap_buf[:, k * P:(k + 1) * P] = tap.reshape(TH * Wo, P)
        c2 = jnp.dot(tap_buf[...], w2_ref[...], preferred_element_type=f32)
        h2 = jnp.maximum(c2 + t3_ref[...], 0.0).astype(bf16)           # (TH*Wo, P)

        # ---- conv3: 1x1, P -> 4P, plus residual add ----
        c3 = jnp.dot(h2, w3_ref[...], preferred_element_type=f32)      # (TH*Wo, Cout)
        out_ref[...] = out_ref[...] + c3.astype(out_ref.dtype)

    return kernel, nRT, BH, Lp, need_bot


def _fold_bn(g, b, m, v):
    scale = g / jnp.sqrt(v + BN_EPS)
    shift = b - m * scale
    return (scale.reshape(1, -1).astype(jnp.float32),
            shift.reshape(1, -1).astype(jnp.float32))


def preact_bottleneck(x_nchw, params, stride):
    """Forward pass of PreActBottleneck. x is NCHW (PyTorch layout)."""
    N, Cin, H, W = x_nchw.shape
    P = params['conv1_w'].shape[0]
    Cout = EXPANSION * P
    s = stride
    has_proj = (s != 1) or (Cin != Cout)
    assert H % s == 0 and W % s == 0, "spatial dims must be divisible by stride"
    Ho, Wo = H // s, W // s

    # output-row tile: prefer 8 (then 16) rows per tile, else the whole image.
    TH = Ho
    for cand in (8, 16):
        if Ho % cand == 0:
            TH = cand
            break

    kernel, nRT, BH, Lp, need_bot = _make_kernel(H, W, Cin, P, s, has_proj, TH)

    # NCHW -> NHWC (channels on lanes), bf16 activations.
    x = jnp.transpose(x_nchw, (0, 2, 3, 1)).astype(jnp.bfloat16)

    s1, t1 = _fold_bn(params['bn1_g'], params['bn1_b'], params['bn1_m'], params['bn1_v'])
    s2, t2 = _fold_bn(params['bn2_g'], params['bn2_b'], params['bn2_m'], params['bn2_v'])
    s3, t3 = _fold_bn(params['bn3_g'], params['bn3_b'], params['bn3_m'], params['bn3_v'])

    # torch OIHW -> matmul layouts; fold BN2/BN3 scales into the preceding conv weights.
    w1 = (params['conv1_w'][:, :, 0, 0].T * s2).astype(jnp.bfloat16)            # (Cin, P)
    w2 = (jnp.transpose(params['conv2_w'], (2, 3, 1, 0)).reshape(9 * P, P)
          * s3).astype(jnp.bfloat16)                                            # (9P, P)
    w3 = params['conv3_w'][:, :, 0, 0].T.astype(jnp.bfloat16)                   # (P, Cout)

    def const_spec(arr):
        nd = arr.ndim
        return pl.BlockSpec(arr.shape, lambda n, rt: (0,) * nd)

    in_specs = [
        # body rows of x for this (batch, row-tile)
        pl.BlockSpec((None, BH, W, Cin), lambda n, rt: (n, rt, 0, 0)),
        # one-row halo above the body (clamped at the image top; zeroed in-kernel there)
        pl.BlockSpec((None, 1, W, Cin),
                     lambda n, rt: (n, jnp.maximum(rt * BH - 1, 0), 0, 0)),
    ]
    inputs = [x, x]
    if need_bot:
        # one-row halo below the body (clamped at the image bottom; zeroed in-kernel there)
        in_specs.append(
            pl.BlockSpec((None, 1, W, Cin),
                         lambda n, rt: (n, jnp.minimum(rt * BH + BH, H - 1), 0, 0)))
        inputs.append(x)

    param_arrays = [s1, t1, w1, t2, w2, t3, w3]
    if has_proj:
        param_arrays.append(params['sc_w'][:, :, 0, 0].T.astype(jnp.bfloat16))  # (Cin, Cout)
    for arr in param_arrays:
        in_specs.append(const_spec(arr))
    inputs.extend(param_arrays)

    grid_spec = pltpu.PrefetchScalarGridSpec(
        num_scalar_prefetch=0,
        grid=(N, nRT),
        in_specs=in_specs,
        out_specs=pl.BlockSpec((None, TH * Wo, Cout), lambda n, rt: (n, rt, 0)),
        scratch_shapes=[
            pltpu.VMEM((Lp, W + 2, P), jnp.bfloat16),       # zero-padded conv2 input
            pltpu.VMEM((TH * Wo, 9 * P), jnp.bfloat16),     # packed 9-tap matrix
        ],
    )

    out = pl.pallas_call(
        kernel,
        out_shape=jax.ShapeDtypeStruct((N, Ho * Wo, Cout), jnp.float32),
        grid_spec=grid_spec,
        compiler_params=pltpu.CompilerParams(
            dimension_semantics=("parallel", "parallel"),
            vmem_limit_bytes=32 * 1024 * 1024),
    )(*inputs)

    out = out.reshape(N, Ho, Wo, Cout)
    return jnp.transpose(out, (0, 3, 1, 2)).astype(jnp.float32)        # back to NCHW


# ---------------- pure-JAX reference (f32 ground truth for the check) ----------------
def reference(x_nchw, params, stride):
    x = jnp.transpose(x_nchw, (0, 2, 3, 1)).astype(jnp.float32)

    def bn(y, g, b, m, v):
        return (y - m) * (g / jnp.sqrt(v + BN_EPS)) + b

    def conv(y, w_oihw, s, pad):
        w = jnp.transpose(w_oihw, (2, 3, 1, 0))                         # HWIO
        return lax.conv_general_dilated(y, w, (s, s), pad,
                                        dimension_numbers=('NHWC', 'HWIO', 'NHWC'))

    out0 = jax.nn.relu(bn(x, params['bn1_g'], params['bn1_b'],
                          params['bn1_m'], params['bn1_v']))
    Cout = EXPANSION * params['conv1_w'].shape[0]
    if stride != 1 or x.shape[-1] != Cout:
        shortcut = conv(out0, params['sc_w'], stride, 'VALID')
    else:
        shortcut = out0
    h = conv(out0, params['conv1_w'], 1, 'VALID')
    h = jax.nn.relu(bn(h, params['bn2_g'], params['bn2_b'],
                       params['bn2_m'], params['bn2_v']))
    h = conv(h, params['conv2_w'], stride, [(1, 1), (1, 1)])
    h = jax.nn.relu(bn(h, params['bn3_g'], params['bn3_b'],
                       params['bn3_m'], params['bn3_v']))
    h = conv(h, params['conv3_w'], 1, 'VALID')
    return jnp.transpose(h + shortcut, (0, 3, 1, 2))


# ---------------- deterministic parameter construction ----------------
def init_params(key, in_planes, planes, stride):
    Cout = EXPANSION * planes
    ks = jax.random.split(key, 4)

    def conv_w(k, cout, cin, kh, kw):
        fan_in = cin * kh * kw
        return jax.random.normal(k, (cout, cin, kh, kw), jnp.float32) / jnp.sqrt(fan_in)

    def bn_p(c):
        a = jnp.arange(c, dtype=jnp.float32)
        return (1.0 + 0.10 * a,      # gamma
                0.05 * a - 0.1,      # beta
                0.02 * a,            # running_mean
                1.0 + 0.03 * a)      # running_var

    g1, b1, m1, v1 = bn_p(in_planes)
    g2, b2, m2, v2 = bn_p(planes)
    g3, b3, m3, v3 = bn_p(planes)
    params = {
        'bn1_g': g1, 'bn1_b': b1, 'bn1_m': m1, 'bn1_v': v1,
        'conv1_w': conv_w(ks[0], planes, in_planes, 1, 1),
        'bn2_g': g2, 'bn2_b': b2, 'bn2_m': m2, 'bn2_v': v2,
        'conv2_w': conv_w(ks[1], planes, planes, 3, 3),
        'bn3_g': g3, 'bn3_b': b3, 'bn3_m': m3, 'bn3_v': v3,
        'conv3_w': conv_w(ks[2], Cout, planes, 1, 1),
    }
    if stride != 1 or in_planes != Cout:
        params['sc_w'] = conv_w(ks[3], Cout, in_planes, 1, 1)
    return params


if __name__ == "__main__":
    key = jax.random.PRNGKey(0)

    # Two small configs consistent with the module (both exercised kernel variants):
    #   A) projection shortcut (in_planes != 4*planes), B) identity shortcut.
    configs = [
        (2, 8, 4, 16, 16, 1),    # N, in_planes, planes, H, W, stride
        (2, 16, 4, 16, 16, 1),
    ]
    for i, (N, in_planes, planes, H, W, stride) in enumerate(configs):
        kx, kp = jax.random.split(jax.random.fold_in(key, i))
        x = jax.random.normal(kx, (N, in_planes, H, W), jnp.float32)   # NCHW like PyTorch
        params = init_params(kp, in_planes, planes, stride)

        out = jax.block_until_ready(preact_bottleneck(x, params, stride))
        ref = reference(x, params, stride)

        assert out.shape == ref.shape == (N, EXPANSION * planes, H // stride, W // stride)
        err = float(jnp.max(jnp.abs(out - ref)))
        scale = float(jnp.max(jnp.abs(ref)))
        rel_l2 = float(jnp.linalg.norm(out - ref) / jnp.linalg.norm(ref))
        assert err <= 2e-2 + 3e-2 * scale, (err, scale)     # bf16-compute tolerance
        assert rel_l2 <= 2e-2, rel_l2

    print("KERNEL_OK")
</pallas_src>

<mosaic_0001>
module attributes {stable_mosaic.version = 11 : i64} {
  func.func @kernel(%arg0: i32, %arg1: i32, %arg2: memref<1x8x16x8xbf16, #tpu.memory_space<vmem>>, %arg3: memref<1x1x16x8xbf16, #tpu.memory_space<vmem>>, %arg4: memref<1x1x16x8xbf16, #tpu.memory_space<vmem>>, %arg5: memref<1x8xf32, #tpu.memory_space<vmem>>, %arg6: memref<1x8xf32, #tpu.memory_space<vmem>>, %arg7: memref<8x4xbf16, #tpu.memory_space<vmem>>, %arg8: memref<1x4xf32, #tpu.memory_space<vmem>>, %arg9: memref<36x4xbf16, #tpu.memory_space<vmem>>, %arg10: memref<1x4xf32, #tpu.memory_space<vmem>>, %arg11: memref<4x16xbf16, #tpu.memory_space<vmem>>, %arg12: memref<8x16xbf16, #tpu.memory_space<vmem>>, %arg13: memref<1x128x16xf32, #tpu.memory_space<vmem>>, %arg14: memref<10x18x4xbf16, #tpu.memory_space<vmem>>, %arg15: memref<128x36xbf16, #tpu.memory_space<vmem>>) attributes {dimension_semantics = [#tpu.dimension_semantics<parallel>, #tpu.dimension_semantics<parallel>], iteration_bounds = array<i64: 2, 2>, scalar_prefetch = 0 : i64, scratch_operands = 2 : i64, tpu.core_type = #tpu.core_type<tc>, window_params = [{transform_indices = @transform_0, window_bounds = array<i64: 1, 8, 16, 8>}, {transform_indices = @transform_1, window_bounds = array<i64: 1, 1, 16, 8>}, {transform_indices = @transform_2, window_bounds = array<i64: 1, 1, 16, 8>}, {pipeline_mode = #tpu.pipeline_mode<synchronous>, transform_indices = @transform_3, window_bounds = array<i64: 1, 8>}, {pipeline_mode = #tpu.pipeline_mode<synchronous>, transform_indices = @transform_4, window_bounds = array<i64: 1, 8>}, {pipeline_mode = #tpu.pipeline_mode<synchronous>, transform_indices = @transform_5, window_bounds = array<i64: 8, 4>}, {pipeline_mode = #tpu.pipeline_mode<synchronous>, transform_indices = @transform_6, window_bounds = array<i64: 1, 4>}, {pipeline_mode = #tpu.pipeline_mode<synchronous>, transform_indices = @transform_7, window_bounds = array<i64: 36, 4>}, {pipeline_mode = #tpu.pipeline_mode<synchronous>, transform_indices = @transform_8, window_bounds = array<i64: 1, 4>}, {pipeline_mode = #tpu.pipeline_mode<synchronous>, transform_indices = @transform_9, window_bounds = array<i64: 4, 16>}, {pipeline_mode = #tpu.pipeline_mode<synchronous>, transform_indices = @transform_10, window_bounds = array<i64: 8, 16>}, {transform_indices = @transform_11, window_bounds = array<i64: 1, 128, 16>}]} {
    %c0 = arith.constant 0 : index
    %c0_0 = arith.constant 0 : index
    %c0_1 = arith.constant 0 : index
    %c0_2 = arith.constant 0 : index
    %0 = vector.load %arg2[%c0, %c0_0, %c0_1, %c0_2] : memref<1x8x16x8xbf16, #tpu.memory_space<vmem>>, vector<1x8x16x8xbf16>
    %1 = vector.shape_cast %0 : vector<1x8x16x8xbf16> to vector<8x16x8xbf16>
    %c0_3 = arith.constant 0 : index
    %c0_4 = arith.constant 0 : index
    %c0_5 = arith.constant 0 : index
    %c0_6 = arith.constant 0 : index
    %2 = vector.load %arg3[%c0_3, %c0_4, %c0_5, %c0_6] : memref<1x1x16x8xbf16, #tpu.memory_space<vmem>>, vector<1x1x16x8xbf16>
    %3 = vector.shape_cast %2 : vector<1x1x16x8xbf16> to vector<1x16x8xbf16>
    %c0_7 = arith.constant 0 : index
    %c0_8 = arith.constant 0 : index
    %c0_9 = arith.constant 0 : index
    %c0_10 = arith.constant 0 : index
    %4 = vector.load %arg4[%c0_7, %c0_8, %c0_9, %c0_10] : memref<1x1x16x8xbf16, #tpu.memory_space<vmem>>, vector<1x1x16x8xbf16>
    %5 = vector.shape_cast %4 : vector<1x1x16x8xbf16> to vector<1x16x8xbf16>
    %6 = tpu.concatenate %3, %1, %5 in 0 : vector<1x16x8xbf16>, vector<8x16x8xbf16>, vector<1x16x8xbf16> -> vector<10x16x8xbf16>
    %7 = arith.extf %6 : vector<10x16x8xbf16> to vector<10x16x8xf32>
    %c0_11 = arith.constant 0 : index
    %c0_12 = arith.constant 0 : index
    %8 = vector.load %arg5[%c0_11, %c0_12] : memref<1x8xf32, #tpu.memory_space<vmem>>, vector<1x8xf32>
    %9 = vector.shape_cast %8 : vector<1x8xf32> to vector<1x1x8xf32>
    %10 = vector.broadcast %9 : vector<1x1x8xf32> to vector<10x16x8xf32>
    %11 = arith.mulf %7, %10 : vector<10x16x8xf32>
    %c0_13 = arith.constant 0 : index
    %c0_14 = arith.constant 0 : index
    %12 = vector.load %arg6[%c0_13, %c0_14] : memref<1x8xf32, #tpu.memory_space<vmem>>, vector<1x8xf32>
    %13 = vector.shape_cast %12 : vector<1x8xf32> to vector<1x1x8xf32>
    %14 = vector.broadcast %13 : vector<1x1x8xf32> to vector<10x16x8xf32>
    %15 = arith.addf %11, %14 : vector<10x16x8xf32>
    %cst = arith.constant 0.000000e+00 : f32
    %16 = vector.broadcast %cst : f32 to vector<10x16x8xf32>
    %17 = arith.maximumf %15, %16 : vector<10x16x8xf32>
    %18 = vector.extract_strided_slice %17 {offsets = [1, 0, 0], sizes = [8, 16, 8], strides = [1, 1, 1]} : vector<10x16x8xf32> to vector<8x16x8xf32>
    %19 = vector.shape_cast %18 : vector<8x16x8xf32> to vector<128x8xf32>
    %20 = arith.truncf %19 : vector<128x8xf32> to vector<128x8xbf16>
    %c0_15 = arith.constant 0 : index
    %c0_16 = arith.constant 0 : index
    %21 = vector.load %arg12[%c0_15, %c0_16] : memref<8x16xbf16, #tpu.memory_space<vmem>>, vector<8x16xbf16>
    %cst_17 = arith.constant dense<0.000000e+00> : vector<128x16xf32>
    %22 = tpu.matmul %20, %21, %cst_17 {dimension_numbers = #tpu.dot_dimension_numbers<[1], [0], [0], [1], [0, 0, 1, 1], [], []>} : vector<128x8xbf16>, vector<8x16xbf16>, vector<128x16xf32> -> vector<128x16xf32>
    %c0_18 = arith.constant 0 : index
    %c0_19 = arith.constant 0 : index
    %c0_20 = arith.constant 0 : index
    %23 = vector.load %arg13[%c0_18, %c0_19, %c0_20] : memref<1x128x16xf32, #tpu.memory_space<vmem>>, vector<1x128x16xf32>
    %24 = vector.shape_cast %23 : vector<1x128x16xf32> to vector<128x16xf32>
    %25 = vector.shape_cast %22 : vector<128x16xf32> to vector<1x128x16xf32>
    tpu.vector_store %arg13[%c0_18, %c0_19, %c0_20], %25 {strides = array<i32>} : memref<1x128x16xf32, #tpu.memory_space<vmem>>, vector<1x128x16xf32>,
    %26 = vector.shape_cast %17 : vector<10x16x8xf32> to vector<160x8xf32>
    %27 = arith.truncf %26 : vector<160x8xf32> to vector<160x8xbf16>
    %c0_21 = arith.constant 0 : index
    %c0_22 = arith.constant 0 : index
    %28 = vector.load %arg7[%c0_21, %c0_22] : memref<8x4xbf16, #tpu.memory_space<vmem>>, vector<8x4xbf16>
    %cst_23 = arith.constant dense<0.000000e+00> : vector<160x4xf32>
    %29 = tpu.matmul %27, %28, %cst_23 {dimension_numbers = #tpu.dot_dimension_numbers<[1], [0], [0], [1], [0, 0, 1, 1], [], []>} : vector<160x8xbf16>, vector<8x4xbf16>, vector<160x4xf32> -> vector<160x4xf32>
    %c0_24 = arith.constant 0 : index
    %c0_25 = arith.constant 0 : index
    %30 = vector.load %arg8[%c0_24, %c0_25] : memref<1x4xf32, #tpu.memory_space<vmem>>, vector<1x4xf32>
    %31 = vector.broadcast %30 : vector<1x4xf32> to vector<160x4xf32>
    %32 = arith.addf %29, %31 : vector<160x4xf32>
    %cst_26 = arith.constant 0.000000e+00 : f32
    %33 = vector.broadcast %cst_26 : f32 to vector<160x4xf32>
    %34 = arith.maximumf %32, %33 : vector<160x4xf32>
    %35 = arith.truncf %34 : vector<160x4xf32> to vector<160x4xbf16>
    %36 = vector.shape_cast %35 : vector<160x4xbf16> to vector<10x16x4xbf16>
    %cst_27 = arith.constant 0.000000e+00 : bf16
    %37 = vector.broadcast %cst_27 : bf16 to vector<10x1x4xbf16>
    %c0_28 = arith.constant 0 : index
    %c0_29 = arith.constant 0 : index
    %c0_30 = arith.constant 0 : index
    %38 = vector.load %arg14[%c0_28, %c0_29, %c0_30] : memref<10x18x4xbf16, #tpu.memory_space<vmem>>, vector<10x1x4xbf16>
    tpu.vector_store %arg14[%c0_28, %c0_29, %c0_30], %37 {strides = array<i32>} : memref<10x18x4xbf16, #tpu.memory_space<vmem>>, vector<10x1x4xbf16>,
    %cst_31 = arith.constant 0.000000e+00 : bf16
    %39 = vector.broadcast %cst_31 : bf16 to vector<10x1x4xbf16>
    %c0_32 = arith.constant 0 : index
    %c17 = arith.constant 17 : index
    %c0_33 = arith.constant 0 : index
    %40 = vector.load %arg14[%c0_32, %c17, %c0_33] : memref<10x18x4xbf16, #tpu.memory_space<vmem>>, vector<10x1x4xbf16>
    tpu.vector_store %arg14[%c0_32, %c17, %c0_33], %39 {strides = array<i32>} : memref<10x18x4xbf16, #tpu.memory_space<vmem>>, vector<10x1x4xbf16>,
    %c0_34 = arith.constant 0 : index
    %c1 = arith.constant 1 : index
    %c0_35 = arith.constant 0 : index
    %41 = vector.load %arg14[%c0_34, %c1, %c0_35] : memref<10x18x4xbf16, #tpu.memory_space<vmem>>, vector<10x16x4xbf16>
    tpu.vector_store %arg14[%c0_34, %c1, %c0_35], %36 {strides = array<i32>} : memref<10x18x4xbf16, #tpu.memory_space<vmem>>, vector<10x16x4xbf16>,
    %c0_i32 = arith.constant 0 : i32
    %42 = arith.cmpi eq, %arg1, %c0_i32 : i32
    %43 = arith.extui %42 : i1 to i32
    %c0_i32_36 = arith.constant 0 : i32
    %44 = arith.cmpi ne, %43, %c0_i32_36 : i32
    scf.if %44 {
      %cst_91 = arith.constant 0.000000e+00 : bf16
      %92 = vector.broadcast %cst_91 : bf16 to vector<1x16x4xbf16>
      %c0_92 = arith.constant 0 : index
      %c1_93 = arith.constant 1 : index
      %c0_94 = arith.constant 0 : index
      %93 = vector.load %arg14[%c0_92, %c1_93, %c0_94] : memref<10x18x4xbf16, #tpu.memory_space<vmem>>, vector<1x16x4xbf16>
      tpu.vector_store %arg14[%c0_92, %c1_93, %c0_94], %92 {strides = array<i32>} : memref<10x18x4xbf16, #tpu.memory_space<vmem>>, vector<1x16x4xbf16>,
    } else {
    }
    %c1_i32 = arith.constant 1 : i32
    %45 = arith.cmpi eq, %arg1, %c1_i32 : i32
    %46 = arith.extui %45 : i1 to i32
    %c0_i32_37 = arith.constant 0 : i32
    %47 = arith.cmpi ne, %46, %c0_i32_37 : i32
    scf.if %47 {
      %cst_91 = arith.constant 0.000000e+00 : bf16
      %92 = vector.broadcast %cst_91 : bf16 to vector<1x16x4xbf16>
      %c9 = arith.constant 9 : index
      %c1_92 = arith.constant 1 : index
      %c0_93 = arith.constant 0 : index
      %93 = vector.load %arg14[%c9, %c1_92, %c0_93] : memref<10x18x4xbf16, #tpu.memory_space<vmem>>, vector<1x16x4xbf16>
      tpu.vector_store %arg14[%c9, %c1_92, %c0_93], %92 {strides = array<i32>} : memref<10x18x4xbf16, #tpu.memory_space<vmem>>, vector<1x16x4xbf16>,
    } else {
    }
    %c0_38 = arith.constant 0 : index
    %c0_39 = arith.constant 0 : index
    %c0_40 = arith.constant 0 : index
    %48 = vector.load %arg14[%c0_38, %c0_39, %c0_40] : memref<10x18x4xbf16, #tpu.memory_space<vmem>>, vector<8x16x4xbf16>
    %49 = vector.shape_cast %48 : vector<8x16x4xbf16> to vector<128x4xbf16>
    %c0_41 = arith.constant 0 : index
    %c0_42 = arith.constant 0 : index
    %50 = vector.load %arg15[%c0_41, %c0_42] : memref<128x36xbf16, #tpu.memory_space<vmem>>, vector<128x4xbf16>
    tpu.vector_store %arg15[%c0_41, %c0_42], %49 {strides = array<i32>} : memref<128x36xbf16, #tpu.memory_space<vmem>>, vector<128x4xbf16>,
    %c0_43 = arith.constant 0 : index
    %c1_44 = arith.constant 1 : index
    %c0_45 = arith.constant 0 : index
    %51 = vector.load %arg14[%c0_43, %c1_44, %c0_45] : memref<10x18x4xbf16, #tpu.memory_space<vmem>>, vector<8x16x4xbf16>
    %52 = vector.shape_cast %51 : vector<8x16x4xbf16> to vector<128x4xbf16>
    %c0_46 = arith.constant 0 : index
    %c4 = arith.constant 4 : index
    %53 = vector.load %arg15[%c0_46, %c4] : memref<128x36xbf16, #tpu.memory_space<vmem>>, vector<128x4xbf16>
    tpu.vector_store %arg15[%c0_46, %c4], %52 {strides = array<i32>} : memref<128x36xbf16, #tpu.memory_space<vmem>>, vector<128x4xbf16>,
    %c0_47 = arith.constant 0 : index
    %c2 = arith.constant 2 : index
    %c0_48 = arith.constant 0 : index
    %54 = vector.load %arg14[%c0_47, %c2, %c0_48] : memref<10x18x4xbf16, #tpu.memory_space<vmem>>, vector<8x16x4xbf16>
    %55 = vector.shape_cast %54 : vector<8x16x4xbf16> to vector<128x4xbf16>
    %c0_49 = arith.constant 0 : index
    %c8 = arith.constant 8 : index
    %56 = vector.load %arg15[%c0_49, %c8] : memref<128x36xbf16, #tpu.memory_space<vmem>>, vector<128x4xbf16>
    tpu.vector_store %arg15[%c0_49, %c8], %55 {strides = array<i32>} : memref<128x36xbf16, #tpu.memory_space<vmem>>, vector<128x4xbf16>,
    %c1_50 = arith.constant 1 : index
    %c0_51 = arith.constant 0 : index
    %c0_52 = arith.constant 0 : index
    %57 = vector.load %arg14[%c1_50, %c0_51, %c0_52] : memref<10x18x4xbf16, #tpu.memory_space<vmem>>, vector<8x16x4xbf16>
    %58 = vector.shape_cast %57 : vector<8x16x4xbf16> to vector<128x4xbf16>
    %c0_53 = arith.constant 0 : index
    %c12 = arith.constant 12 : index
    %59 = vector.load %arg15[%c0_53, %c12] : memref<128x36xbf16, #tpu.memory_space<vmem>>, vector<128x4xbf16>
    tpu.vector_store %arg15[%c0_53, %c12], %58 {strides = array<i32>} : memref<128x36xbf16, #tpu.memory_space<vmem>>, vector<128x4xbf16>,
    %c1_54 = arith.constant 1 : index
    %c1_55 = arith.constant 1 : index
    %c0_56 = arith.constant 0 : index
    %60 = vector.load %arg14[%c1_54, %c1_55, %c0_56] : memref<10x18x4xbf16, #tpu.memory_space<vmem>>, vector<8x16x4xbf16>
    %61 = vector.shape_cast %60 : vector<8x16x4xbf16> to vector<128x4xbf16>
    %c0_57 = arith.constant 0 : index
    %c16 = arith.constant 16 : index
    %62 = vector.load %arg15[%c0_57, %c16] : memref<128x36xbf16, #tpu.memory_space<vmem>>, vector<128x4xbf16>
    tpu.vector_store %arg15[%c0_57, %c16], %61 {strides = array<i32>} : memref<128x36xbf16, #tpu.memory_space<vmem>>, vector<128x4xbf16>,
    %c1_58 = arith.constant 1 : index
    %c2_59 = arith.constant 2 : index
    %c0_60 = arith.constant 0 : index
    %63 = vector.load %arg14[%c1_58, %c2_59, %c0_60] : memref<10x18x4xbf16, #tpu.memory_space<vmem>>, vector<8x16x4xbf16>
    %64 = vector.shape_cast %63 : vector<8x16x4xbf16> to vector<128x4xbf16>
    %c0_61 = arith.constant 0 : index
    %c20 = arith.constant 20 : index
    %65 = vector.load %arg15[%c0_61, %c20] : memref<128x36xbf16, #tpu.memory_space<vmem>>, vector<128x4xbf16>
    tpu.vector_store %arg15[%c0_61, %c20], %64 {strides = array<i32>} : memref<128x36xbf16, #tpu.memory_space<vmem>>, vector<128x4xbf16>,
    %c2_62 = arith.constant 2 : index
    %c0_63 = arith.constant 0 : index
    %c0_64 = arith.constant 0 : index
    %66 = vector.load %arg14[%c2_62, %c0_63, %c0_64] : memref<10x18x4xbf16, #tpu.memory_space<vmem>>, vector<8x16x4xbf16>
    %67 = vector.shape_cast %66 : vector<8x16x4xbf16> to vector<128x4xbf16>
    %c0_65 = arith.constant 0 : index
    %c24 = arith.constant 24 : index
    %68 = vector.load %arg15[%c0_65, %c24] : memref<128x36xbf16, #tpu.memory_space<vmem>>, vector<128x4xbf16>
    tpu.vector_store %arg15[%c0_65, %c24], %67 {strides = array<i32>} : memref<128x36xbf16, #tpu.memory_space<vmem>>, vector<128x4xbf16>,
    %c2_66 = arith.constant 2 : index
    %c1_67 = arith.constant 1 : index
    %c0_68 = arith.constant 0 : index
    %69 = vector.load %arg14[%c2_66, %c1_67, %c0_68] : memref<10x18x4xbf16, #tpu.memory_space<vmem>>, vector<8x16x4xbf16>
    %70 = vector.shape_cast %69 : vector<8x16x4xbf16> to vector<128x4xbf16>
    %c0_69 = arith.constant 0 : index
    %c28 = arith.constant 28 : index
    %71 = vector.load %arg15[%c0_69, %c28] : memref<128x36xbf16, #tpu.memory_space<vmem>>, vector<128x4xbf16>
    tpu.vector_store %arg15[%c0_69, %c28], %70 {strides = array<i32>} : memref<128x36xbf16, #tpu.memory_space<vmem>>, vector<128x4xbf16>,
    %c2_70 = arith.constant 2 : index
    %c2_71 = arith.constant 2 : index
    %c0_72 = arith.constant 0 : index
    %72 = vector.load %arg14[%c2_70, %c2_71, %c0_72] : memref<10x18x4xbf16, #tpu.memory_space<vmem>>, vector<8x16x4xbf16>
    %73 = vector.shape_cast %72 : vector<8x16x4xbf16> to vector<128x4xbf16>
    %c0_73 = arith.constant 0 : index
    %c32 = arith.constant 32 : index
    %74 = vector.load %arg15[%c0_73, %c32] : memref<128x36xbf16, #tpu.memory_space<vmem>>, vector<128x4xbf16>
    tpu.vector_store %arg15[%c0_73, %c32], %73 {strides = array<i32>} : memref<128x36xbf16, #tpu.memory_space<vmem>>, vector<128x4xbf16>,
    %c0_74 = arith.constant 0 : index
    %c0_75 = arith.constant 0 : index
    %75 = vector.load %arg15[%c0_74, %c0_75] : memref<128x36xbf16, #tpu.memory_space<vmem>>, vector<128x36xbf16>
    %c0_76 = arith.constant 0 : index
    %c0_77 = arith.constant 0 : index
    %76 = vector.load %arg9[%c0_76, %c0_77] : memref<36x4xbf16, #tpu.memory_space<vmem>>, vector<36x4xbf16>
    %cst_78 = arith.constant dense<0.000000e+00> : vector<128x4xf32>
    %77 = tpu.matmul %75, %76, %cst_78 {dimension_numbers = #tpu.dot_dimension_numbers<[1], [0], [0], [1], [0, 0, 1, 1], [], []>} : vector<128x36xbf16>, vector<36x4xbf16>, vector<128x4xf32> -> vector<128x4xf32>
    %c0_79 = arith.constant 0 : index
    %c0_80 = arith.constant 0 : index
    %78 = vector.load %arg10[%c0_79, %c0_80] : memref<1x4xf32, #tpu.memory_space<vmem>>, vector<1x4xf32>
    %79 = vector.broadcast %78 : vector<1x4xf32> to vector<128x4xf32>
    %80 = arith.addf %77, %79 : vector<128x4xf32>
    %cst_81 = arith.constant 0.000000e+00 : f32
    %81 = vector.broadcast %cst_81 : f32 to vector<128x4xf32>
    %82 = arith.maximumf %80, %81 : vector<128x4xf32>
    %83 = arith.truncf %82 : vector<128x4xf32> to vector<128x4xbf16>
    %c0_82 = arith.constant 0 : index
    %c0_83 = arith.constant 0 : index
    %84 = vector.load %arg11[%c0_82, %c0_83] : memref<4x16xbf16, #tpu.memory_space<vmem>>, vector<4x16xbf16>
    %cst_84 = arith.constant dense<0.000000e+00> : vector<128x16xf32>
    %85 = tpu.matmul %83, %84, %cst_84 {dimension_numbers = #tpu.dot_dimension_numbers<[1], [0], [0], [1], [0, 0, 1, 1], [], []>} : vector<128x4xbf16>, vector<4x16xbf16>, vector<128x16xf32> -> vector<128x16xf32>
    %c0_85 = arith.constant 0 : index
    %c0_86 = arith.constant 0 : index
    %c0_87 = arith.constant 0 : index
    %86 = vector.load %arg13[%c0_85, %c0_86, %c0_87] : memref<1x128x16xf32, #tpu.memory_space<vmem>>, vector<1x128x16xf32>
    %87 = vector.shape_cast %86 : vector<1x128x16xf32> to vector<128x16xf32>
    %88 = arith.addf %87, %85 : vector<128x16xf32>
    %c0_88 = arith.constant 0 : index
    %c0_89 = arith.constant 0 : index
    %c0_90 = arith.constant 0 : index
    %89 = vector.load %arg13[%c0_88, %c0_89, %c0_90] : memref<1x128x16xf32, #tpu.memory_space<vmem>>, vector<1x128x16xf32>
    %90 = vector.shape_cast %89 : vector<1x128x16xf32> to vector<128x16xf32>
    %91 = vector.shape_cast %88 : vector<128x16xf32> to vector<1x128x16xf32>
    tpu.vector_store %arg13[%c0_88, %c0_89, %c0_90], %91 {strides = array<i32>} : memref<1x128x16xf32, #tpu.memory_space<vmem>>, vector<1x128x16xf32>,
    return
  }
  func.func @transform_0(%arg0: i32, %arg1: i32) -> (i32, i32, i32, i32) {
    %c0_i32 = arith.constant 0 : i32
    %c0_i32_0 = arith.constant 0 : i32
    %c0_i32_1 = arith.constant 0 : i32
    return %arg0, %arg1, %c0_i32, %c0_i32_0 : i32, i32, i32, i32
  }
  func.func @transform_1(%arg0: i32, %arg1: i32) -> (i32, i32, i32, i32) {
    %c8_i32 = arith.constant 8 : i32
    %0 = arith.muli %arg1, %c8_i32 : i32
    %c1_i32 = arith.constant 1 : i32
    %1 = arith.subi %0, %c1_i32 : i32
    %c0_i32 = arith.constant 0 : i32
    %2 = arith.maxsi %1, %c0_i32 : i32
    %c0_i32_0 = arith.constant 0 : i32
    %c0_i32_1 = arith.constant 0 : i32
    %c0_i32_2 = arith.constant 0 : i32
    return %arg0, %2, %c0_i32_0, %c0_i32_1 : i32, i32, i32, i32
  }
  func.func @transform_2(%arg0: i32, %arg1: i32) -> (i32, i32, i32, i32) {
    %c8_i32 = arith.constant 8 : i32
    %0 = arith.muli %arg1, %c8_i32 : i32
    %c8_i32_0 = arith.constant 8 : i32
    %1 = arith.addi %0, %c8_i32_0 : i32
    %c15_i32 = arith.constant 15 : i32
    %2 = arith.minsi %1, %c15_i32 : i32
    %c0_i32 = arith.constant 0 : i32
    %c0_i32_1 = arith.constant 0 : i32
    %c0_i32_2 = arith.constant 0 : i32
    return %arg0, %2, %c0_i32, %c0_i32_1 : i32, i32, i32, i32
  }
  func.func @transform_3(%arg0: i32, %arg1: i32) -> (i32, i32) {
    %c0_i32 = arith.constant 0 : i32
    %c0_i32_0 = arith.constant 0 : i32
    %c0_i32_1 = arith.constant 0 : i32
    return %c0_i32, %c0_i32_0 : i32, i32
  }
  func.func @transform_4(%arg0: i32, %arg1: i32) -> (i32, i32) {
    %c0_i32 = arith.constant 0 : i32
    %c0_i32_0 = arith.constant 0 : i32
    %c0_i32_1 = arith.constant 0 : i32
    return %c0_i32, %c0_i32_0 : i32, i32
  }
  func.func @transform_5(%arg0: i32, %arg1: i32) -> (i32, i32) {
    %c0_i32 = arith.constant 0 : i32
    %c0_i32_0 = arith.constant 0 : i32
    %c0_i32_1 = arith.constant 0 : i32
    return %c0_i32, %c0_i32_0 : i32, i32
  }
  func.func @transform_6(%arg0: i32, %arg1: i32) -> (i32, i32) {
    %c0_i32 = arith.constant 0 : i32
    %c0_i32_0 = arith.constant 0 : i32
    %c0_i32_1 = arith.constant 0 : i32
    return %c0_i32, %c0_i32_0 : i32, i32
  }
  func.func @transform_7(%arg0: i32, %arg1: i32) -> (i32, i32) {
    %c0_i32 = arith.constant 0 : i32
    %c0_i32_0 = arith.constant 0 : i32
    %c0_i32_1 = arith.constant 0 : i32
    return %c0_i32, %c0_i32_0 : i32, i32
  }
  func.func @transform_8(%arg0: i32, %arg1: i32) -> (i32, i32) {
    %c0_i32 = arith.constant 0 : i32
    %c0_i32_0 = arith.constant 0 : i32
    %c0_i32_1 = arith.constant 0 : i32
    return %c0_i32, %c0_i32_0 : i32, i32
  }
  func.func @transform_9(%arg0: i32, %arg1: i32) -> (i32, i32) {
    %c0_i32 = arith.constant 0 : i32
    %c0_i32_0 = arith.constant 0 : i32
    %c0_i32_1 = arith.constant 0 : i32
    return %c0_i32, %c0_i32_0 : i32, i32
  }
  func.func @transform_10(%arg0: i32, %arg1: i32) -> (i32, i32) {
    %c0_i32 = arith.constant 0 : i32
    %c0_i32_0 = arith.constant 0 : i32
    %c0_i32_1 = arith.constant 0 : i32
    return %c0_i32, %c0_i32_0 : i32, i32
  }
  func.func @transform_11(%arg0: i32, %arg1: i32) -> (i32, i32, i32) {
    %c0_i32 = arith.constant 0 : i32
    %c0_i32_0 = arith.constant 0 : i32
    return %arg0, %arg1, %c0_i32 : i32, i32, i32
  }
}

</mosaic_0001>

<llo_original>
// kernel: tpu_custom_call.1
$region0: #{tpu_custom_call.1}
  #allocation0 [shape = 'u32[]', space=smem, size = 0x4, offset = 0x4, fixed_abs, tag = 'smem constant byte address 0x4 - core index']
  #allocation1 [shape = 'u32[144,128]{1,0:T(1,128)}', space=vmem, size = 0x12000, scoped, tag = 'internal scratch']
  #allocation2 [shape = 'bf16[10,18,4]{2,1,0:T(8,128)(2,1)}', space=vmem, size = 0xf000, scoped, tag = 'scratch operand']
  #allocation3 [shape = 'bf16[128,36]{1,0:T(16,128)(2,1)}', space=vmem, size = 0x8000, scoped, tag = 'scratch operand']
  %s0 = inlined_call_operand.vmem [shape: bf16[2,16,16,8], index: 0, kind: input, shape index: {}]
  %s1 = inlined_call_operand.vmem [shape: bf16[2,16,16,8], index: 1, kind: input, shape index: {}]
  %s2 = inlined_call_operand.vmem [shape: bf16[2,16,16,8], index: 2, kind: input, shape index: {}]
  %s3 = inlined_call_operand.vmem [shape: f32[1,8], index: 3, kind: input, shape index: {}]
  %s4 = inlined_call_operand.vmem [shape: f32[1,8], index: 4, kind: input, shape index: {}]
  %s5 = inlined_call_operand.vmem [shape: bf16[8,4], index: 5, kind: input, shape index: {}]
  %s6 = inlined_call_operand.vmem [shape: f32[1,4], index: 6, kind: input, shape index: {}]
  %s7 = inlined_call_operand.vmem [shape: bf16[36,4], index: 7, kind: input, shape index: {}]
  %s8 = inlined_call_operand.vmem [shape: f32[1,4], index: 8, kind: input, shape index: {}]
  %s9 = inlined_call_operand.vmem [shape: bf16[4,16], index: 9, kind: input, shape index: {}]
  %s10 = inlined_call_operand.vmem [shape: bf16[8,16], index: 10, kind: input, shape index: {}]
  %s11 = inlined_call_operand.vmem [shape: f32[2,256,16], index: 11, kind: output, shape index: {}]
  %s12 = sld [smem:[#allocation0]]
  $region85: #{tpu_custom_call.1} parent=0
    _
  %s14 = ssub.s32 1, %s12
  %s15 = scalar_select 0, %s14, %s12
  loop: start=0, step=1, limit=6
  $region2: #{tpu_custom_call.1} parent=0 // loop_pre_header
    _
  $region3: #{tpu_custom_call.1} parent=0 // loop_header
    %s17 = sphi 0, %s21
    %p18 = scmp.ge.s32.totalorder %s17, 6
    %s24 = sphi 0, %s36
    %s25 = sphi 0, %s32
    %s26 = sphi 0, %s24
    %s27 = sphi 0, %s25
    %s28 = sphi 0, %s26
    %s29 = sphi 0, %s27
    %s41 = sphi 0, %s43
    %s44 = sphi 0, %s41
    %s45 = sphi 0, %s44
    %s61 = sphi 0, %s45
    %s77 = sphi 0, %s79
    %s80 = sphi 0, %s77
    %s81 = sphi 0, %s80
    %s97 = sphi 0, %s81
    %s113 = sphi 0, %s115
    %s116 = sphi 0, %s113
    %s117 = sphi 0, %s116
    %s133 = sphi 0, %s117
    %s137 = sphi 0, %s137
    %s139 = sphi 0, %s137
    %s140 = sphi 0, %s139
    %s154 = sphi 0, %s140
    %s158 = sphi 0, %s158
    %s160 = sphi 0, %s158
    %s161 = sphi 0, %s160
    %s175 = sphi 0, %s161
    %s179 = sphi 0, %s179
    %s181 = sphi 0, %s179
    %s182 = sphi 0, %s181
    %s196 = sphi 0, %s182
    %s200 = sphi 0, %s200
    %s202 = sphi 0, %s200
    %s203 = sphi 0, %s202
    %s217 = sphi 0, %s203
    %s221 = sphi 0, %s221
    %s223 = sphi 0, %s221
    %s224 = sphi 0, %s223
    %s238 = sphi 0, %s224
    %s242 = sphi 0, %s242
    %s244 = sphi 0, %s242
    %s245 = sphi 0, %s244
    %s259 = sphi 0, %s245
    %s263 = sphi 0, %s263
    %s265 = sphi 0, %s263
    %s266 = sphi 0, %s265
    %s280 = sphi 0, %s266
    %s284 = sphi 0, %s284
    %s286 = sphi 0, %s284
    %s287 = sphi 0, %s286
    %s301 = sphi 0, %s287
    %s309 = sphi 0, %s311
    %s312 = sphi 0, %s309
    %s313 = sphi 0, %s312
    %s329 = sphi 0, %s313
  $region4: #{tpu_custom_call.1} parent=0 // loop_header_branch
    %20 = sbr.rel (%p18) target = $region8
  $region5: #{tpu_custom_call.1} parent=0 // loop_body
    %s22 = ssub.s32 %s17, 1
    %s23 = ssub.s32 %s17, 2
    %s30 = sadd.s32 1, %s25
    %p31 = scmp.ge.s32.totalorder %s30, 2
    %s32 = scalar_select %p31, 0, %s30
    %s33 = sadd.s32 1, %s24
    %s34 = scalar_select %p31, %s33, %s24
    %p35 = scmp.ge.s32.totalorder %s34, 2
    %s36 = scalar_select %p35, 0, %s34
    %s37 = ssub.s32 %s24, %s36
    %s38 = ssub.s32 %s25, %s32
    %s39 = sor.u32 %s37, %s38
    %p40 = scmp.eq.s32.totalorder %s39, 0
    %s42 = sadd.s32 %s41, 1
    %s43 = scalar_select %p40, %s41, %s42
    %p46 = pneg %p40
    %p47 = scmp.eq.s32.totalorder %s17, 3
    %p48 = por %p46, %p47
    %p49 = scmp.ne.s32.totalorder %s41, %s44
    %p50 = scmp.eq.s32.totalorder %s17, 0
    %p51 = por %p49, %p50
    %p52 = scmp.ne.s32.totalorder %s41, %s44
    %p53 = scmp.eq.s32.totalorder %s22, 3
    %p54 = por %p52, %p53
    %p55 = scmp.ne.s32.totalorder %s44, %s45
    %p56 = scmp.eq.s32.totalorder %s22, 0
    %p57 = por %p55, %p56
    %p58 = scmp.ne.s32.totalorder %s44, %s45
    %p59 = scmp.eq.s32.totalorder %s23, 3
    %p60 = por %p58, %p59
    %p62 = scmp.ne.s32.totalorder %s45, %s61
    %p63 = scmp.eq.s32.totalorder %s23, 0
    %p64 = por %p62, %p63
    %s65 = smul.u32 %s25, 8
    %s66 = ssub.s32 %s65, 1
    %p67 = scmp.gt.s32.totalorder %s66, 0
    %s68 = scalar_select %p67, %s66, 0
    %s69 = smul.u32 %s32, 8
    %s70 = ssub.s32 %s69, 1
    %p71 = scmp.gt.s32.totalorder %s70, 0
    %s72 = scalar_select %p71, %s70, 0
    %s73 = ssub.s32 %s24, %s36
    %s74 = ssub.s32 %s68, %s72
    %s75 = sor.u32 %s73, %s74
    %p76 = scmp.eq.s32.totalorder %s75, 0
    %s78 = sadd.s32 %s77, 1
    %s79 = scalar_select %p76, %s77, %s78
    %p82 = pneg %p76
    %p83 = scmp.eq.s32.totalorder %s17, 3
    %p84 = por %p82, %p83
    %p85 = scmp.ne.s32.totalorder %s77, %s80
    %p86 = scmp.eq.s32.totalorder %s17, 0
    %p87 = por %p85, %p86
    %p88 = scmp.ne.s32.totalorder %s77, %s80
    %p89 = scmp.eq.s32.totalorder %s22, 3
    %p90 = por %p88, %p89
    %p91 = scmp.ne.s32.totalorder %s80, %s81
    %p92 = scmp.eq.s32.totalorder %s22, 0
    %p93 = por %p91, %p92
    %p94 = scmp.ne.s32.totalorder %s80, %s81
    %p95 = scmp.eq.s32.totalorder %s23, 3
    %p96 = por %p94, %p95
    %p98 = scmp.ne.s32.totalorder %s81, %s97
    %p99 = scmp.eq.s32.totalorder %s23, 0
    %p100 = por %p98, %p99
    %s101 = smul.u32 %s25, 8
    %s102 = sadd.s32 %s101, 8
    %p103 = scmp.lt.s32.totalorder %s102, 15
    %s104 = scalar_select %p103, %s102, 15
    %s105 = smul.u32 %s32, 8
    %s106 = sadd.s32 %s105, 8
    %p107 = scmp.lt.s32.totalorder %s106, 15
    %s108 = scalar_select %p107, %s106, 15
    %s109 = ssub.s32 %s24, %s36
    %s110 = ssub.s32 %s104, %s108
    %s111 = sor.u32 %s109, %s110
    %p112 = scmp.eq.s32.totalorder %s111, 0
    %s114 = sadd.s32 %s113, 1
    %s115 = scalar_select %p112, %s113, %s114
    %p118 = pneg %p112
    %p119 = scmp.eq.s32.totalorder %s17, 3
    %p120 = por %p118, %p119
    %p121 = scmp.ne.s32.totalorder %s113, %s116
    %p122 = scmp.eq.s32.totalorder %s17, 0
    %p123 = por %p121, %p122
    %p124 = scmp.ne.s32.totalorder %s113, %s116
    %p125 = scmp.eq.s32.totalorder %s22, 3
    %p126 = por %p124, %p125
    %p127 = scmp.ne.s32.totalorder %s116, %s117
    %p128 = scmp.eq.s32.totalorder %s22, 0
    %p129 = por %p127, %p128
    %p130 = scmp.ne.s32.totalorder %s116, %s117
    %p131 = scmp.eq.s32.totalorder %s23, 3
    %p132 = por %p130, %p131
    %p134 = scmp.ne.s32.totalorder %s117, %s133
    %p135 = scmp.eq.s32.totalorder %s23, 0
    %p136 = por %p134, %p135
    %s138 = sadd.s32 %s137, 1
    %p141 = scmp.eq.s32.totalorder %s17, 3
    %p142 = scmp.ne.s32.totalorder %s137, %s139
    %p143 = scmp.eq.s32.totalorder %s17, 0
    %p144 = por %p142, %p143
    %p145 = scmp.ne.s32.totalorder %s137, %s139
    %p146 = scmp.eq.s32.totalorder %s22, 3
    %p147 = por %p145, %p146
    %p148 = scmp.ne.s32.totalorder %s139, %s140
    %p149 = scmp.eq.s32.totalorder %s22, 0
    %p150 = por %p148, %p149
    %p151 = scmp.ne.s32.totalorder %s139, %s140
    %p152 = scmp.eq.s32.totalorder %s23, 3
    %p153 = por %p151, %p152
    %p155 = scmp.ne.s32.totalorder %s140, %s154
    %p156 = scmp.eq.s32.totalorder %s23, 0
    %p157 = por %p155, %p156
    %s159 = sadd.s32 %s158, 1
    %p162 = scmp.eq.s32.totalorder %s17, 3
    %p163 = scmp.ne.s32.totalorder %s158, %s160
    %p164 = scmp.eq.s32.totalorder %s17, 0
    %p165 = por %p163, %p164
    %p166 = scmp.ne.s32.totalorder %s158, %s160
    %p167 = scmp.eq.s32.totalorder %s22, 3
    %p168 = por %p166, %p167
    %p169 = scmp.ne.s32.totalorder %s160, %s161
    %p170 = scmp.eq.s32.totalorder %s22, 0
    %p171 = por %p169, %p170
    %p172 = scmp.ne.s32.totalorder %s160, %s161
    %p173 = scmp.eq.s32.totalorder %s23, 3
    %p174 = por %p172, %p173
    %p176 = scmp.ne.s32.totalorder %s161, %s175
    %p177 = scmp.eq.s32.totalorder %s23, 0
    %p178 = por %p176, %p177
    %s180 = sadd.s32 %s179, 1
    %p183 = scmp.eq.s32.totalorder %s17, 3
    %p184 = scmp.ne.s32.totalorder %s179, %s181
    %p185 = scmp.eq.s32.totalorder %s17, 0
    %p186 = por %p184, %p185
    %p187 = scmp.ne.s32.totalorder %s179, %s181
    %p188 = scmp.eq.s32.totalorder %s22, 3
    %p189 = por %p187, %p188
    %p190 = scmp.ne.s32.totalorder %s181, %s182
    %p191 = scmp.eq.s32.totalorder %s22, 0
    %p192 = por %p190, %p191
    %p193 = scmp.ne.s32.totalorder %s181, %s182
    %p194 = scmp.eq.s32.totalorder %s23, 3
    %p195 = por %p193, %p194
    %p197 = scmp.ne.s32.totalorder %s182, %s196
    %p198 = scmp.eq.s32.totalorder %s23, 0
    %p199 = por %p197, %p198
    %s201 = sadd.s32 %s200, 1
    %p204 = scmp.eq.s32.totalorder %s17, 3
    %p205 = scmp.ne.s32.totalorder %s200, %s202
    %p206 = scmp.eq.s32.totalorder %s17, 0
    %p207 = por %p205, %p206
    %p208 = scmp.ne.s32.totalorder %s200, %s202
    %p209 = scmp.eq.s32.totalorder %s22, 3
    %p210 = por %p208, %p209
    %p211 = scmp.ne.s32.totalorder %s202, %s203
    %p212 = scmp.eq.s32.totalorder %s22, 0
    %p213 = por %p211, %p212
    %p214 = scmp.ne.s32.totalorder %s202, %s203
    %p215 = scmp.eq.s32.totalorder %s23, 3
    %p216 = por %p214, %p215
    %p218 = scmp.ne.s32.totalorder %s203, %s217
    %p219 = scmp.eq.s32.totalorder %s23, 0
    %p220 = por %p218, %p219
    %s222 = sadd.s32 %s221, 1
    %p225 = scmp.eq.s32.totalorder %s17, 3
    %p226 = scmp.ne.s32.totalorder %s221, %s223
    %p227 = scmp.eq.s32.totalorder %s17, 0
    %p228 = por %p226, %p227
    %p229 = scmp.ne.s32.totalorder %s221, %s223
    %p230 = scmp.eq.s32.totalorder %s22, 3
    %p231 = por %p229, %p230
    %p232 = scmp.ne.s32.totalorder %s223, %s224
    %p233 = scmp.eq.s32.totalorder %s22, 0
    %p234 = por %p232, %p233
    %p235 = scmp.ne.s32.totalorder %s223, %s224
    %p236 = scmp.eq.s32.totalorder %s23, 3
    %p237 = por %p235, %p236
    %p239 = scmp.ne.s32.totalorder %s224, %s238
    %p240 = scmp.eq.s32.totalorder %s23, 0
    %p241 = por %p239, %p240
    %s243 = sadd.s32 %s242, 1
    %p246 = scmp.eq.s32.totalorder %s17, 3
    %p247 = scmp.ne.s32.totalorder %s242, %s244
    %p248 = scmp.eq.s32.totalorder %s17, 0
    %p249 = por %p247, %p248
    %p250 = scmp.ne.s32.totalorder %s242, %s244
    %p251 = scmp.eq.s32.totalorder %s22, 3
    %p252 = por %p250, %p251
    %p253 = scmp.ne.s32.totalorder %s244, %s245
    %p254 = scmp.eq.s32.totalorder %s22, 0
    %p255 = por %p253, %p254
    %p256 = scmp.ne.s32.totalorder %s244, %s245
    %p257 = scmp.eq.s32.totalorder %s23, 3
    %p258 = por %p256, %p257
    %p260 = scmp.ne.s32.totalorder %s245, %s259
    %p261 = scmp.eq.s32.totalorder %s23, 0
    %p262 = por %p260, %p261
    %s264 = sadd.s32 %s263, 1
    %p267 = scmp.eq.s32.totalorder %s17, 3
    %p268 = scmp.ne.s32.totalorder %s263, %s265
    %p269 = scmp.eq.s32.totalorder %s17, 0
    %p270 = por %p268, %p269
    %p271 = scmp.ne.s32.totalorder %s263, %s265
    %p272 = scmp.eq.s32.totalorder %s22, 3
    %p273 = por %p271, %p272
    %p274 = scmp.ne.s32.totalorder %s265, %s266
    %p275 = scmp.eq.s32.totalorder %s22, 0
    %p276 = por %p274, %p275
    %p277 = scmp.ne.s32.totalorder %s265, %s266
    %p278 = scmp.eq.s32.totalorder %s23, 3
    %p279 = por %p277, %p278
    %p281 = scmp.ne.s32.totalorder %s266, %s280
    %p282 = scmp.eq.s32.totalorder %s23, 0
    %p283 = por %p281, %p282
    %s285 = sadd.s32 %s284, 1
    %p288 = scmp.eq.s32.totalorder %s17, 3
    %p289 = scmp.ne.s32.totalorder %s284, %s286
    %p290 = scmp.eq.s32.totalorder %s17, 0
    %p291 = por %p289, %p290
    %p292 = scmp.ne.s32.totalorder %s284, %s286
    %p293 = scmp.eq.s32.totalorder %s22, 3
    %p294 = por %p292, %p293
    %p295 = scmp.ne.s32.totalorder %s286, %s287
    %p296 = scmp.eq.s32.totalorder %s22, 0
    %p297 = por %p295, %p296
    %p298 = scmp.ne.s32.totalorder %s286, %s287
    %p299 = scmp.eq.s32.totalorder %s23, 3
    %p300 = por %p298, %p299
    %p302 = scmp.ne.s32.totalorder %s287, %s301
    %p303 = scmp.eq.s32.totalorder %s23, 0
    %p304 = por %p302, %p303
    %s305 = ssub.s32 %s24, %s36
    %s306 = ssub.s32 %s25, %s32
    %s307 = sor.u32 %s305, %s306
    %p308 = scmp.eq.s32.totalorder %s307, 0
    %s310 = sadd.s32 %s309, 1
    %s311 = scalar_select %p308, %s309, %s310
    %p314 = pneg %p308
    %p315 = scmp.eq.s32.totalorder %s17, 3
    %p316 = por %p314, %p315
    %p317 = scmp.ne.s32.totalorder %s309, %s312
    %p318 = scmp.eq.s32.totalorder %s17, 0
    %p319 = por %p317, %p318
    %p320 = scmp.ne.s32.totalorder %s309, %s312
    %p321 = scmp.eq.s32.totalorder %s22, 3
    %p322 = por %p320, %p321
    %p323 = scmp.ne.s32.totalorder %s312, %s313
    %p324 = scmp.eq.s32.totalorder %s22, 0
    %p325 = por %p323, %p324
    %p326 = scmp.ne.s32.totalorder %s312, %s313
    %p327 = scmp.eq.s32.totalorder %s23, 3
    %p328 = por %p326, %p327
    %p330 = scmp.ne.s32.totalorder %s313, %s329
    %p331 = scmp.eq.s32.totalorder %s23, 0
    %p332 = por %p330, %p331
    %p333 = scmp.le.s32.totalorder 1, %s17
    %p334 = scmp.lt.s32.totalorder %s17, 5
    %p335 = pnand %p333, %p334
    %p336 = pneg %p335
    // Predicated region
    $region9: #{tpu_custom_call.1} parent=5 // pred_check
      _
    $region10: #{tpu_custom_call.1} parent=5 // pred_check_branch
      %338 = sbr.rel (%p335) target = $region12
    $region11: #{tpu_custom_call.1} parent=5 // pred_region
      %s339 = ssub.s32 %s17, 1
      // Predicated region
      $region13: #{tpu_custom_call.1} parent=11 // pred_check
        %p340 = pneg %p150
      $region14: #{tpu_custom_call.1} parent=11 // pred_check_branch
        %342 = sbr.rel (%p340) target = $region16
      $region15: #{tpu_custom_call.1} parent=11 // pred_region
        _
      $region16: #{tpu_custom_call.1} parent=11 // pred_fallthru
        _
      // Predicated region
      $region17: #{tpu_custom_call.1} parent=11 // pred_check
        %p343 = pneg %p171
      $region18: #{tpu_custom_call.1} parent=11 // pred_check_branch
        %345 = sbr.rel (%p343) target = $region20
      $region19: #{tpu_custom_call.1} parent=11 // pred_region
        _
      $region20: #{tpu_custom_call.1} parent=11 // pred_fallthru
        _
      // Predicated region
      $region21: #{tpu_custom_call.1} parent=11 // pred_check
        %p346 = pneg %p192
      $region22: #{tpu_custom_call.1} parent=11 // pred_check_branch
        %348 = sbr.rel (%p346) target = $region24
      $region23: #{tpu_custom_call.1} parent=11 // pred_region
        _
      $region24: #{tpu_custom_call.1} parent=11 // pred_fallthru
        _
      // Predicated region
      $region25: #{tpu_custom_call.1} parent=11 // pred_check
        %p349 = pneg %p213
      $region26: #{tpu_custom_call.1} parent=11 // pred_check_branch
        %351 = sbr.rel (%p349) target = $region28
      $region27: #{tpu_custom_call.1} parent=11 // pred_region
        _
      $region28: #{tpu_custom_call.1} parent=11 // pred_fallthru
        _
      // Predicated region
      $region29: #{tpu_custom_call.1} parent=11 // pred_check
        %p352 = pneg %p234
      $region30: #{tpu_custom_call.1} parent=11 // pred_check_branch
        %354 = sbr.rel (%p352) target = $region32
      $region31: #{tpu_custom_call.1} parent=11 // pred_region
        _
      $region32: #{tpu_custom_call.1} parent=11 // pred_fallthru
        _
      // Predicated region
      $region33: #{tpu_custom_call.1} parent=11 // pred_check
        %p355 = pneg %p255
      $region34: #{tpu_custom_call.1} parent=11 // pred_check_branch
        %357 = sbr.rel (%p355) target = $region36
      $region35: #{tpu_custom_call.1} parent=11 // pred_region
        _
      $region36: #{tpu_custom_call.1} parent=11 // pred_fallthru
        _
      // Predicated region
      $region37: #{tpu_custom_call.1} parent=11 // pred_check
        %p358 = pneg %p276
      $region38: #{tpu_custom_call.1} parent=11 // pred_check_branch
        %360 = sbr.rel (%p358) target = $region40
      $region39: #{tpu_custom_call.1} parent=11 // pred_region
        _
      $region40: #{tpu_custom_call.1} parent=11 // pred_fallthru
        _
      // Predicated region
      $region41: #{tpu_custom_call.1} parent=11 // pred_check
        %p361 = pneg %p297
      $region42: #{tpu_custom_call.1} parent=11 // pred_check_branch
        %363 = sbr.rel (%p361) target = $region44
      $region43: #{tpu_custom_call.1} parent=11 // pred_region
        _
      $region44: #{tpu_custom_call.1} parent=11 // pred_fallthru
        _
    $region12: #{tpu_custom_call.1} parent=5 // pred_fallthru
      _
    %p364 = scmp.lt.s32.totalorder %s17, 4
    // Predicated region
    $region45: #{tpu_custom_call.1} parent=5 // pred_check
      %p365 = pneg %p364
    $region46: #{tpu_custom_call.1} parent=5 // pred_check_branch
      %367 = sbr.rel (%p365) target = $region48
    $region47: #{tpu_custom_call.1} parent=5 // pred_region
      // Predicated region
      $region49: #{tpu_custom_call.1} parent=47 // pred_check
        %p368 = pneg %p51
      $region50: #{tpu_custom_call.1} parent=47 // pred_check_branch
        %370 = sbr.rel (%p368) target = $region52
      $region51: #{tpu_custom_call.1} parent=47 // pred_region
        %s371 = smul.u32 8, %s25
        %p372 = scmp.lt.s32.totalorder %s24, 1
        %s373 = scalar_select %p372, %s24, 1
        %p374 = scmp.lt.s32.totalorder %s371, 15
        %s375 = scalar_select %p374, %s371, 15
        %s376 = smul.addr %s375, 2
        %s377 = smul.addr %s373, 32
        %s378 = sadd.s32 %s376, %s377
        %s379 = smul.addr %s378, 4
        %s380 = scalar_lea.vmem %s0, %s379
        %s381 = smul.u32 8, %s25
      $region52: #{tpu_custom_call.1} parent=47 // pred_fallthru
        _
      // Predicated region
      $region53: #{tpu_custom_call.1} parent=47 // pred_check
        %p382 = pneg %p87
      $region54: #{tpu_custom_call.1} parent=47 // pred_check_branch
        %384 = sbr.rel (%p382) target = $region56
      $region55: #{tpu_custom_call.1} parent=47 // pred_region
        %s385 = smul.u32 %s25, 8
        %s386 = ssub.s32 %s385, 1
        %p387 = scmp.gt.s32.totalorder %s386, 0
        %s388 = scalar_select %p387, %s386, 0
        %p389 = scmp.lt.s32.totalorder %s24, 1
        %s390 = scalar_select %p389, %s24, 1
        %p391 = scmp.lt.s32.totalorder %s388, 15
        %s392 = scalar_select %p391, %s388, 15
        %s393 = smul.addr %s392, 2
        %s394 = smul.addr %s390, 32
        %s395 = sadd.s32 %s393, %s394
        %s396 = smul.addr %s395, 4
        %s397 = scalar_lea.vmem %s1, %s396
        %s398 = smul.u32 %s25, 8
        %s399 = ssub.s32 %s398, 1
        %p400 = scmp.gt.s32.totalorder %s399, 0
        %s401 = scalar_select %p400, %s399, 0
      $region56: #{tpu_custom_call.1} parent=47 // pred_fallthru
        _
      // Predicated region
      $region57: #{tpu_custom_call.1} parent=47 // pred_check
        %p402 = pneg %p123
      $region58: #{tpu_custom_call.1} parent=47 // pred_check_branch
        %404 = sbr.rel (%p402) target = $region60
      $region59: #{tpu_custom_call.1} parent=47 // pred_region
        %s405 = smul.u32 %s25, 8
        %s406 = sadd.s32 %s405, 8
        %p407 = scmp.lt.s32.totalorder %s406, 15
        %s408 = scalar_select %p407, %s406, 15
        %p409 = scmp.lt.s32.totalorder %s24, 1
        %s410 = scalar_select %p409, %s24, 1
        %p411 = scmp.lt.s32.totalorder %s408, 15
        %s412 = scalar_select %p411, %s408, 15
        %s413 = smul.addr %s412, 2
        %s414 = smul.addr %s410, 32
        %s415 = sadd.s32 %s413, %s414
        %s416 = smul.addr %s415, 4
        %s417 = scalar_lea.vmem %s2, %s416
        %s418 = smul.u32 %s25, 8
        %s419 = sadd.s32 %s418, 8
        %p420 = scmp.lt.s32.totalorder %s419, 15
        %s421 = scalar_select %p420, %s419, 15
      $region60: #{tpu_custom_call.1} parent=47 // pred_fallthru
        _
    $region48: #{tpu_custom_call.1} parent=5 // pred_fallthru
      _
    %p422 = scmp.le.s32.totalorder 1, %s17
    %p423 = scmp.lt.s32.totalorder %s17, 5
    %p424 = pnand %p422, %p423
    %p425 = pneg %p424
    // Predicated region
    $region61: #{tpu_custom_call.1} parent=5 // pred_check
      _
    $region62: #{tpu_custom_call.1} parent=5 // pred_check_branch
      %427 = sbr.rel (%p424) target = $region64
    $region63: #{tpu_custom_call.1} parent=5 // pred_region
      %s428 = ssub.s32 %s17, 1
      %s429 = smul.u32 8, %s27
      %p430 = scmp.lt.s32.totalorder %s26, 1
      %s431 = scalar_select %p430, %s26, 1
      %p432 = scmp.lt.s32.totalorder %s429, 15
      %s433 = scalar_select %p432, %s429, 15
      %s434 = smul.addr %s433, 2
      %s435 = smul.addr %s431, 32
      %s436 = sadd.s32 %s434, %s435
      %s437 = smul.addr %s436, 4
      %s438 = scalar_lea.vmem %s0, %s437
      %p439 = pneg %p57
      %p440 = pneg %p54
      %s441 = smul.u32 %s27, 8
      %s442 = ssub.s32 %s441, 1
      %p443 = scmp.gt.s32.totalorder %s442, 0
      %s444 = scalar_select %p443, %s442, 0
      %p445 = scmp.lt.s32.totalorder %s26, 1
      %s446 = scalar_select %p445, %s26, 1
      %p447 = scmp.lt.s32.totalorder %s444, 15
      %s448 = scalar_select %p447, %s444, 15
      %s449 = smul.addr %s448, 2
      %s450 = smul.addr %s446, 32
      %s451 = sadd.s32 %s449, %s450
      %s452 = smul.addr %s451, 4
      %s453 = scalar_lea.vmem %s1, %s452
      %p454 = pneg %p93
      %p455 = pneg %p90
      %s456 = smul.u32 %s27, 8
      %s457 = sadd.s32 %s456, 8
      %p458 = scmp.lt.s32.totalorder %s457, 15
      %s459 = scalar_select %p458, %s457, 15
      %p460 = scmp.lt.s32.totalorder %s26, 1
      %s461 = scalar_select %p460, %s26, 1
      %p462 = scmp.lt.s32.totalorder %s459, 15
      %s463 = scalar_select %p462, %s459, 15
      %s464 = smul.addr %s463, 2
      %s465 = smul.addr %s461, 32
      %s466 = sadd.s32 %s464, %s465
      %s467 = smul.addr %s466, 4
      %s468 = scalar_lea.vmem %s2, %s467
      %p469 = pneg %p129
      %p470 = pneg %p126
      %p471 = pneg %p150
      %p472 = pneg %p147
      %p473 = pneg %p171
      %p474 = pneg %p168
      %p475 = pneg %p192
      %p476 = pneg %p189
      %p477 = pneg %p213
      %p478 = pneg %p210
      %p479 = pneg %p234
      %p480 = pneg %p231
      %p481 = pneg %p255
      %p482 = pneg %p252
      %p483 = pneg %p276
      %p484 = pneg %p273
      %p485 = pneg %p297
      %p486 = pneg %p294
      %p487 = pneg %p325
      %p488 = pneg %p322
      %s489 = smul.u32 16, %s27
      %p490 = scmp.lt.s32.totalorder %s26, 1
      %s491 = scalar_select %p490, %s26, 1
      %p492 = scmp.lt.s32.totalorder %s489, 31
      %s493 = scalar_select %p492, %s489, 31
      %s494 = smul.addr %s491, 32
      %s495 = sadd.s32 %s493, %s494
      %s496 = smul.addr %s495, 8
      %s497 = scalar_lea.vmem %s11, %s496
      %s498 = smul.u32 8, %s27
      %p499 = scmp.lt.s32.totalorder %s26, 1
      %s500 = scalar_select %p499, %s26, 1
      %p501 = scmp.lt.s32.totalorder %s498, 15
      %s502 = scalar_select %p501, %s498, 15
      %s503 = smul.addr %s502, 2
      %s504 = smul.addr %s500, 32
      %s505 = sadd.s32 %s503, %s504
      %s506 = smul.addr %s505, 4
      %s507 = scalar_lea.vmem %s0, %s506
      %s508 = smul.u32 8, %s27
      %s509 = smul.u32 %s27, 8
      %s510 = ssub.s32 %s509, 1
      %p511 = scmp.gt.s32.totalorder %s510, 0
      %s512 = scalar_select %p511, %s510, 0
      %p513 = scmp.lt.s32.totalorder %s26, 1
      %s514 = scalar_select %p513, %s26, 1
      %p515 = scmp.lt.s32.totalorder %s512, 15
      %s516 = scalar_select %p515, %s512, 15
      %s517 = smul.addr %s516, 2
      %s518 = smul.addr %s514, 32
      %s519 = sadd.s32 %s517, %s518
      %s520 = smul.addr %s519, 4
      %s521 = scalar_lea.vmem %s1, %s520
      %s522 = smul.u32 %s27, 8
      %s523 = ssub.s32 %s522, 1
      %p524 = scmp.gt.s32.totalorder %s523, 0
      %s525 = scalar_select %p524, %s523, 0
      %s526 = smul.u32 %s27, 8
      %s527 = sadd.s32 %s526, 8
      %p528 = scmp.lt.s32.totalorder %s527, 15
      %s529 = scalar_select %p528, %s527, 15
      %p530 = scmp.lt.s32.totalorder %s26, 1
      %s531 = scalar_select %p530, %s26, 1
      %p532 = scmp.lt.s32.totalorder %s529, 15
      %s533 = scalar_select %p532, %s529, 15
      %s534 = smul.addr %s533, 2
      %s535 = smul.addr %s531, 32
      %s536 = sadd.s32 %s534, %s535
      %s537 = smul.addr %s536, 4
      %s538 = scalar_lea.vmem %s2, %s537
      %s539 = smul.u32 %s27, 8
      %s540 = sadd.s32 %s539, 8
      %p541 = scmp.lt.s32.totalorder %s540, 15
      %s542 = scalar_select %p541, %s540, 15
      %s543 = smul.u32 16, %s27
      %p544 = scmp.lt.s32.totalorder %s26, 1
      %s545 = scalar_select %p544, %s26, 1
      %p546 = scmp.lt.s32.totalorder %s543, 31
      %s547 = scalar_select %p546, %s543, 31
      %s548 = smul.addr %s545, 32
      %s549 = sadd.s32 %s547, %s548
      %s550 = smul.addr %s549, 8
      %s551 = scalar_lea.vmem %s11, %s550
      %s552 = smul.u32 16, %s27
      %v554 = vld [vmem:[%s507] sm:$0xf]
      %v555 = vld [vmem:[%s507 + $0x4] sm:$0xf]
      %v556 = vld [vmem:[%s507 + $0x8] sm:$0xf]
      %v557 = vld [vmem:[%s507 + $0xc] sm:$0xf]
      %v558 = vld [vmem:[%s507 + $0x10] sm:$0xf]
      %v559 = vld [vmem:[%s507 + $0x14] sm:$0xf]
      %v560 = vld [vmem:[%s507 + $0x18] sm:$0xf]
      %v561 = vld [vmem:[%s507 + $0x1c] sm:$0xf]
      %v562 = vld [vmem:[%s507 + $0x20] sm:$0xf]
      %v563 = vld [vmem:[%s507 + $0x24] sm:$0xf]
      %v564 = vld [vmem:[%s507 + $0x28] sm:$0xf]
      %v565 = vld [vmem:[%s507 + $0x2c] sm:$0xf]
      %v566 = vld [vmem:[%s507 + $0x30] sm:$0xf]
      %v567 = vld [vmem:[%s507 + $0x34] sm:$0xf]
      %v568 = vld [vmem:[%s507 + $0x38] sm:$0xf]
      %v569 = vld [vmem:[%s507 + $0x3c] sm:$0xf]
      %v570 = vld [vmem:[%s521] sm:$0xf]
      %v571 = vld [vmem:[%s521 + $0x4] sm:$0xf]
      %v572 = vld [vmem:[%s538] sm:$0xf]
      %v573 = vld [vmem:[%s538 + $0x4] sm:$0xf]
      %v574 = vunpack.c.l.bf16 %v570
      %v575 = vunpack.c.l.bf16 %v571
      %v576 = vunpack.c.l.bf16 %v554
      %v577 = vunpack.c.l.bf16 %v555
      %v578 = vunpack.c.l.bf16 %v556
      %v579 = vunpack.c.l.bf16 %v557
      %v580 = vunpack.c.l.bf16 %v558
      %v581 = vunpack.c.l.bf16 %v559
      %v582 = vunpack.c.l.bf16 %v560
      %v583 = vunpack.c.l.bf16 %v561
      %v584 = vunpack.c.l.bf16 %v562
      %v585 = vunpack.c.l.bf16 %v563
      %v586 = vunpack.c.l.bf16 %v564
      %v587 = vunpack.c.l.bf16 %v565
      %v588 = vunpack.c.l.bf16 %v566
      %v589 = vunpack.c.l.bf16 %v567
      %v590 = vunpack.c.l.bf16 %v568
      %v591 = vunpack.c.l.bf16 %v569
      %v592 = vunpack.c.l.bf16 %v572
      %v593 = vunpack.c.l.bf16 %v573
      %v594 = vld [vmem:[%s3] sm:$0x1]
      %v596 = vlaneseq
      %v597 = vshrl.u32 %v596, 7
      %v598 = vsub.s32 0, %v597
      %v599 = vrot.slane %v594, %v598
      %v601 = vmul.f32 %v574, %v599
      %v602 = vmul.f32 %v575, %v599
      %v603 = vmul.f32 %v576, %v599
      %v604 = vmul.f32 %v577, %v599
      %v605 = vmul.f32 %v578, %v599
      %v606 = vmul.f32 %v579, %v599
      %v607 = vmul.f32 %v580, %v599
      %v608 = vmul.f32 %v581, %v599
      %v609 = vmul.f32 %v582, %v599
      %v610 = vmul.f32 %v583, %v599
      %v611 = vmul.f32 %v584, %v599
      %v612 = vmul.f32 %v585, %v599
      %v613 = vmul.f32 %v586, %v599
      %v614 = vmul.f32 %v587, %v599
      %v615 = vmul.f32 %v588, %v599
      %v616 = vmul.f32 %v589, %v599
      %v617 = vmul.f32 %v590, %v599
      %v618 = vmul.f32 %v591, %v599
      %v619 = vmul.f32 %v592, %v599
      %v620 = vmul.f32 %v593, %v599
      %v621 = vld [vmem:[%s4] sm:$0x1]
      %v623 = vlaneseq
      %v624 = vshrl.u32 %v623, 7
      %v625 = vsub.s32 0, %v624
      %v626 = vrot.slane %v621, %v625
      %v628 = vadd.f32 %v601, %v626
      %v629 = vadd.f32 %v602, %v626
      %v630 = vadd.f32 %v603, %v626
      %v631 = vadd.f32 %v604, %v626
      %v632 = vadd.f32 %v605, %v626
      %v633 = vadd.f32 %v606, %v626
      %v634 = vadd.f32 %v607, %v626
      %v635 = vadd.f32 %v608, %v626
      %v636 = vadd.f32 %v609, %v626
      %v637 = vadd.f32 %v610, %v626
      %v638 = vadd.f32 %v611, %v626
      %v639 = vadd.f32 %v612, %v626
      %v640 = vadd.f32 %v613, %v626
      %v641 = vadd.f32 %v614, %v626
      %v642 = vadd.f32 %v615, %v626
      %v643 = vadd.f32 %v616, %v626
      %v644 = vadd.f32 %v617, %v626
      %v645 = vadd.f32 %v618, %v626
      %v646 = vadd.f32 %v619, %v626
      %v647 = vadd.f32 %v620, %v626
      %v648 = vmax.f32 %v628, 0.0
      %v649 = vmax.f32 %v629, 0.0
      %v650 = vmax.f32 %v630, 0.0
      %v651 = vmax.f32 %v631, 0.0
      %v652 = vmax.f32 %v632, 0.0
      %v653 = vmax.f32 %v633, 0.0
      %v654 = vmax.f32 %v634, 0.0
      %v655 = vmax.f32 %v635, 0.0
      %v656 = vmax.f32 %v636, 0.0
      %v657 = vmax.f32 %v637, 0.0
      %v658 = vmax.f32 %v638, 0.0
      %v659 = vmax.f32 %v639, 0.0
      %v660 = vmax.f32 %v640, 0.0
      %v661 = vmax.f32 %v641, 0.0
      %v662 = vmax.f32 %v642, 0.0
      %v663 = vmax.f32 %v643, 0.0
      %v664 = vmax.f32 %v644, 0.0
      %v665 = vmax.f32 %v645, 0.0
      %v666 = vmax.f32 %v646, 0.0
      %v667 = vmax.f32 %v647, 0.0
      %v668 = vpack.c.bf16 %v651, %v650
      %v669 = vpack.c.bf16 %v653, %v652
      %v670 = vpack.c.bf16 %v655, %v654
      %v671 = vpack.c.bf16 %v657, %v656
      %v672 = vpack.c.bf16 %v659, %v658
      %v673 = vpack.c.bf16 %v661, %v660
      %v674 = vpack.c.bf16 %v663, %v662
      %v675 = vpack.c.bf16 %v665, %v664
      %v676 = vld [vmem:[%s10] sm:$0xf]
      %vm677 = vcmask 64512
      %v679 = vsel %vm677, %v668, 0
      %v682 = vsel %vm677, %v669, 0
      %v685 = vsel %vm677, %v670, 0
      %v688 = vsel %vm677, %v671, 0
      %v691 = vsel %vm677, %v672, 0
      %v694 = vsel %vm677, %v673, 0
      %v697 = vsel %vm677, %v674, 0
      %v700 = vsel %vm677, %v675, 0
      %vm702 = vcmask 1043456
      %v704 = vsel %vm702, %v676, 0
      %706 = vmatprep.subr.bf16.mxu0 0
      %707 = vmatpush1.bf16.msra.mxu0 %v704
      %708 = vmatprep.subr.bf16.mxu0 0
      %709 = vmatpush1.bf16.msra.mxu0 0
      %710 = vmatprep.subr.bf16.mxu0 0
      %711 = vmatpush1.bf16.msra.mxu0 0
      %712 = vmatprep.subr.bf16.mxu0 0
      %713 = vmatpush1.bf16.msra.mxu0 0
      %714 = vmatprep.subr.bf16.mxu0 0
      %715 = vmatpush1.bf16.msra.mxu0 0
      %716 = vmatprep.subr.bf16.mxu0 0
      %717 = vmatpush1.bf16.msra.mxu0 0
      %718 = vmatprep.subr.bf16.mxu0 0
      %719 = vmatpush1.bf16.msra.mxu0 0
      %720 = vmatprep.subr.bf16.mxu0 0
      %721 = vmatpush1.bf16.msra.mxu0 0
      %722 = vmatprep.subr.bf16.mxu0 0
      %723 = vmatpush1.bf16.msra.mxu0 0
      %724 = vmatprep.subr.bf16.mxu0 0
      %725 = vmatpush1.bf16.msra.mxu0 0
      %726 = vmatprep.subr.bf16.mxu0 0
      %727 = vmatpush1.bf16.msra.mxu0 0
      %728 = vmatprep.subr.bf16.mxu0 0
      %729 = vmatpush1.bf16.msra.mxu0 0
      %730 = vmatprep.subr.bf16.mxu0 0
      %731 = vmatpush1.bf16.msra.mxu0 0
      %732 = vmatprep.subr.bf16.mxu0 0
      %733 = vmatpush1.bf16.msra.mxu0 0
      %734 = vmatprep.subr.bf16.mxu0 0
      %735 = vmatpush1.bf16.msra.mxu0 0
      %736 = vmatprep.subr.bf16.mxu0 0
      %737 = vmatpush1.bf16.msra.mxu0 0
      %738 = vmatprep.mubr.bf16.mxu0 0
      %739 = vmatmul.mubr.bf16.gmra.mrb[0].mxu0 %v679
      %v740 = vpop.f32.mrb[0].mxu0
      %v741 = vadd.f32 0.0, %v740
      %v742 = vpop.f32.mrb[0].mxu0
      %v743 = vpop.f32.mrb[0].mxu0
      %v744 = vadd.f32 0.0, %v743
      %v745 = vpop.f32.mrb[0].mxu0
      %746 = vmatprep.mubr.bf16.mxu0 0
      %747 = vmatmul.mubr.bf16.gmra.mrb[0].mxu0 %v682
      %v748 = vpop.f32.mrb[0].mxu0
      %v749 = vadd.f32 0.0, %v748
      %v750 = vpop.f32.mrb[0].mxu0
      %v751 = vpop.f32.mrb[0].mxu0
      %v752 = vadd.f32 0.0, %v751
      %v753 = vpop.f32.mrb[0].mxu0
      %754 = vmatprep.mubr.bf16.mxu0 0
      %755 = vmatmul.mubr.bf16.gmra.mrb[0].mxu0 %v685
      %v756 = vpop.f32.mrb[0].mxu0
      %v757 = vadd.f32 0.0, %v756
      %v758 = vpop.f32.mrb[0].mxu0
      %v759 = vpop.f32.mrb[0].mxu0
      %v760 = vadd.f32 0.0, %v759
      %v761 = vpop.f32.mrb[0].mxu0
      %762 = vmatprep.mubr.bf16.mxu0 0
      %763 = vmatmul.mubr.bf16.gmra.mrb[0].mxu0 %v688
      %v764 = vpop.f32.mrb[0].mxu0
      %v765 = vadd.f32 0.0, %v764
      %v766 = vpop.f32.mrb[0].mxu0
      %v767 = vpop.f32.mrb[0].mxu0
      %v768 = vadd.f32 0.0, %v767
      %v769 = vpop.f32.mrb[0].mxu0
      %770 = vmatprep.mubr.bf16.mxu0 0
      %771 = vmatmul.mubr.bf16.gmra.mrb[0].mxu0 %v691
      %v772 = vpop.f32.mrb[0].mxu0
      %v773 = vadd.f32 0.0, %v772
      %v774 = vpop.f32.mrb[0].mxu0
      %v775 = vpop.f32.mrb[0].mxu0
      %v776 = vadd.f32 0.0, %v775
      %v777 = vpop.f32.mrb[0].mxu0
      %778 = vmatprep.mubr.bf16.mxu0 0
      %779 = vmatmul.mubr.bf16.gmra.mrb[0].mxu0 %v694
      %v780 = vpop.f32.mrb[0].mxu0
      %v781 = vadd.f32 0.0, %v780
      %v782 = vpop.f32.mrb[0].mxu0
      %v783 = vpop.f32.mrb[0].mxu0
      %v784 = vadd.f32 0.0, %v783
      %v785 = vpop.f32.mrb[0].mxu0
      %786 = vmatprep.mubr.bf16.mxu0 0
      %787 = vmatmul.mubr.bf16.gmra.mrb[0].mxu0 %v697
      %v788 = vpop.f32.mrb[0].mxu0
      %v789 = vadd.f32 0.0, %v788
      %v790 = vpop.f32.mrb[0].mxu0
      %v791 = vpop.f32.mrb[0].mxu0
      %v792 = vadd.f32 0.0, %v791
      %v793 = vpop.f32.mrb[0].mxu0
      %794 = vmatprep.mubr.bf16.mxu0 0
      %795 = vmatmul.mubr.bf16.gmra.mrb[0].mxu0 %v700
      %v796 = vpop.f32.mrb[0].mxu0
      %v797 = vadd.f32 0.0, %v796
      %v798 = vpop.f32.mrb[0].mxu0
      %v799 = vpop.f32.mrb[0].mxu0
      %v800 = vadd.f32 0.0, %v799
      %v801 = vpop.f32.mrb[0].mxu0
      %802 = vdwg.mxu0
      %vm803 = vcmask 130048
      %804 = vst.msk [vmem:[%s551] sm:$0xff] %vm803, %v741
      %805 = vst.msk [vmem:[%s551 + $0x8] sm:$0xff] %vm803, %v744
      %806 = vst.msk [vmem:[%s551 + $0x10] sm:$0xff] %vm803, %v749
      %807 = vst.msk [vmem:[%s551 + $0x18] sm:$0xff] %vm803, %v752
      %808 = vst.msk [vmem:[%s551 + $0x20] sm:$0xff] %vm803, %v757
      %809 = vst.msk [vmem:[%s551 + $0x28] sm:$0xff] %vm803, %v760
      %810 = vst.msk [vmem:[%s551 + $0x30] sm:$0xff] %vm803, %v765
      %811 = vst.msk [vmem:[%s551 + $0x38] sm:$0xff] %vm803, %v768
      %812 = vst.msk [vmem:[%s551 + $0x40] sm:$0xff] %vm803, %v773
      %813 = vst.msk [vmem:[%s551 + $0x48] sm:$0xff] %vm803, %v776
      %814 = vst.msk [vmem:[%s551 + $0x50] sm:$0xff] %vm803, %v781
      %815 = vst.msk [vmem:[%s551 + $0x58] sm:$0xff] %vm803, %v784
      %816 = vst.msk [vmem:[%s551 + $0x60] sm:$0xff] %vm803, %v789
      %817 = vst.msk [vmem:[%s551 + $0x68] sm:$0xff] %vm803, %v792
      %818 = vst.msk [vmem:[%s551 + $0x70] sm:$0xff] %vm803, %v797
      %819 = vst.msk [vmem:[%s551 + $0x78] sm:$0xff] %vm803, %v800
      %v820 = vpack.c.bf16 %v649, %v648
      %v821 = vpack.c.bf16 %v667, %v666
      %v822 = vld [vmem:[%s5] sm:$0xf]
      %v823 = vld [vmem:[%s6] sm:$0x1]
      %v825 = vlaneseq
      %v826 = vshrl.u32 %v825, 7
      %v827 = vsub.s32 0, %v826
      %v828 = vrot.slane %v823, %v827
      %v831 = vsel %vm677, %v820, 0
      %v834 = vsel %vm677, %v821, 0
      %v837 = vsel %vm702, %v822, 0
      %839 = vmatprep.subr.bf16.mxu0 0
      %840 = vmatpush1.bf16.msra.mxu0 %v837
      %841 = vmatprep.subr.bf16.mxu0 0
      %842 = vmatpush1.bf16.msra.mxu0 0
      %843 = vmatprep.subr.bf16.mxu0 0
      %844 = vmatpush1.bf16.msra.mxu0 0
      %845 = vmatprep.subr.bf16.mxu0 0
      %846 = vmatpush1.bf16.msra.mxu0 0
      %847 = vmatprep.subr.bf16.mxu0 0
      %848 = vmatpush1.bf16.msra.mxu0 0
      %849 = vmatprep.subr.bf16.mxu0 0
      %850 = vmatpush1.bf16.msra.mxu0 0
      %851 = vmatprep.subr.bf16.mxu0 0
      %852 = vmatpush1.bf16.msra.mxu0 0
      %853 = vmatprep.subr.bf16.mxu0 0
      %854 = vmatpush1.bf16.msra.mxu0 0
      %855 = vmatprep.subr.bf16.mxu0 0
      %856 = vmatpush1.bf16.msra.mxu0 0
      %857 = vmatprep.subr.bf16.mxu0 0
      %858 = vmatpush1.bf16.msra.mxu0 0
      %859 = vmatprep.subr.bf16.mxu0 0
      %860 = vmatpush1.bf16.msra.mxu0 0
      %861 = vmatprep.subr.bf16.mxu0 0
      %862 = vmatpush1.bf16.msra.mxu0 0
      %863 = vmatprep.subr.bf16.mxu0 0
      %864 = vmatpush1.bf16.msra.mxu0 0
      %865 = vmatprep.subr.bf16.mxu0 0
      %866 = vmatpush1.bf16.msra.mxu0 0
      %867 = vmatprep.subr.bf16.mxu0 0
      %868 = vmatpush1.bf16.msra.mxu0 0
      %869 = vmatprep.subr.bf16.mxu0 0
      %870 = vmatpush1.bf16.msra.mxu0 0
      %871 = vmatprep.mubr.bf16.mxu0 0
      %872 = vmatmul.mubr.bf16.gmra.mrb[0].mxu0 %v831
      %v873 = vpop.f32.mrb[0].mxu0
      %v874 = vadd.f32 %v828, %v873
      %v875 = vpop.f32.mrb[0].mxu0
      %v876 = vpop.f32.mrb[0].mxu0
      %v877 = vadd.f32 %v828, %v876
      %v878 = vpop.f32.mrb[0].mxu0
      %879 = vmatprep.mubr.bf16.mxu0 0
      %880 = vmatmul.mubr.bf16.gmra.mrb[0].mxu0 %v679
      %v881 = vpop.f32.mrb[0].mxu0
      %v882 = vadd.f32 %v828, %v881
      %v883 = vpop.f32.mrb[0].mxu0
      %v884 = vpop.f32.mrb[0].mxu0
      %v885 = vadd.f32 %v828, %v884
      %v886 = vpop.f32.mrb[0].mxu0
      %887 = vmatprep.mubr.bf16.mxu0 0
      %888 = vmatmul.mubr.bf16.gmra.mrb[0].mxu0 %v682
      %v889 = vpop.f32.mrb[0].mxu0
      %v890 = vadd.f32 %v828, %v889
      %v891 = vpop.f32.mrb[0].mxu0
      %v892 = vpop.f32.mrb[0].mxu0
      %v893 = vadd.f32 %v828, %v892
      %v894 = vpop.f32.mrb[0].mxu0
      %895 = vmatprep.mubr.bf16.mxu0 0
      %896 = vmatmul.mubr.bf16.gmra.mrb[0].mxu0 %v685
      %v897 = vpop.f32.mrb[0].mxu0
      %v898 = vadd.f32 %v828, %v897
      %v899 = vpop.f32.mrb[0].mxu0
      %v900 = vpop.f32.mrb[0].mxu0
      %v901 = vadd.f32 %v828, %v900
      %v902 = vpop.f32.mrb[0].mxu0
      %903 = vmatprep.mubr.bf16.mxu0 0
      %904 = vmatmul.mubr.bf16.gmra.mrb[0].mxu0 %v688
      %v905 = vpop.f32.mrb[0].mxu0
      %v906 = vadd.f32 %v828, %v905
      %v907 = vpop.f32.mrb[0].mxu0
      %v908 = vpop.f32.mrb[0].mxu0
      %v909 = vadd.f32 %v828, %v908
      %v910 = vpop.f32.mrb[0].mxu0
      %911 = vmatprep.mubr.bf16.mxu0 0
      %912 = vmatmul.mubr.bf16.gmra.mrb[0].mxu0 %v691
      %v913 = vpop.f32.mrb[0].mxu0
      %v914 = vadd.f32 %v828, %v913
      %v915 = vpop.f32.mrb[0].mxu0
      %v916 = vpop.f32.mrb[0].mxu0
      %v917 = vadd.f32 %v828, %v916
      %v918 = vpop.f32.mrb[0].mxu0
      %919 = vmatprep.mubr.bf16.mxu0 0
      %920 = vmatmul.mubr.bf16.gmra.mrb[0].mxu0 %v694
      %v921 = vpop.f32.mrb[0].mxu0
      %v922 = vadd.f32 %v828, %v921
      %v923 = vpop.f32.mrb[0].mxu0
      %v924 = vpop.f32.mrb[0].mxu0
      %v925 = vadd.f32 %v828, %v924
      %v926 = vpop.f32.mrb[0].mxu0
      %927 = vmatprep.mubr.bf16.mxu0 0
      %928 = vmatmul.mubr.bf16.gmra.mrb[0].mxu0 %v697
      %v929 = vpop.f32.mrb[0].mxu0
      %v930 = vadd.f32 %v828, %v929
      %v931 = vpop.f32.mrb[0].mxu0
      %v932 = vpop.f32.mrb[0].mxu0
      %v933 = vadd.f32 %v828, %v932
      %v934 = vpop.f32.mrb[0].mxu0
      %935 = vmatprep.mubr.bf16.mxu0 0
      %936 = vmatmul.mubr.bf16.gmra.mrb[0].mxu0 %v700
      %v937 = vpop.f32.mrb[0].mxu0
      %v938 = vadd.f32 %v828, %v937
      %v939 = vpop.f32.mrb[0].mxu0
      %v940 = vpop.f32.mrb[0].mxu0
      %v941 = vadd.f32 %v828, %v940
      %v942 = vpop.f32.mrb[0].mxu0
      %943 = vmatprep.mubr.bf16.mxu0 0
      %944 = vmatmul.mubr.bf16.gmra.mrb[0].mxu0 %v834
      %v945 = vpop.f32.mrb[0].mxu0
      %v946 = vadd.f32 %v828, %v945
      %v947 = vpop.f32.mrb[0].mxu0
      %v948 = vpop.f32.mrb[0].mxu0
      %v949 = vadd.f32 %v828, %v948
      %v950 = vpop.f32.mrb[0].mxu0
      %951 = vdwg.mxu0
      %v952 = vmax.f32 %v874, 0.0
      %v953 = vmax.f32 %v877, 0.0
      %v954 = vmax.f32 %v882, 0.0
      %v955 = vmax.f32 %v885, 0.0
      %v956 = vmax.f32 %v890, 0.0
      %v957 = vmax.f32 %v893, 0.0
      %v958 = vmax.f32 %v898, 0.0
      %v959 = vmax.f32 %v901, 0.0
      %v960 = vmax.f32 %v906, 0.0
      %v961 = vmax.f32 %v909, 0.0
      %v962 = vmax.f32 %v914, 0.0
      %v963 = vmax.f32 %v917, 0.0
      %v964 = vmax.f32 %v922, 0.0
      %v965 = vmax.f32 %v925, 0.0
      %v966 = vmax.f32 %v930, 0.0
      %v967 = vmax.f32 %v933, 0.0
      %v968 = vmax.f32 %v938, 0.0
      %v969 = vmax.f32 %v941, 0.0
      %v970 = vmax.f32 %v946, 0.0
      %v971 = vmax.f32 %v949, 0.0
      %v972 = vpack.c.bf16 %v953, %v952
      %v973 = vpack.c.bf16 %v955, %v954
      %v974 = vpack.c.bf16 %v957, %v956
      %v975 = vpack.c.bf16 %v959, %v958
      %v976 = vpack.c.bf16 %v961, %v960
      %v977 = vpack.c.bf16 %v963, %v962
      %v978 = vpack.c.bf16 %v965, %v964
      %v979 = vpack.c.bf16 %v967, %v966
      %v980 = vpack.c.bf16 %v969, %v968
      %v981 = vpack.c.bf16 %v971, %v970
      %vm982 = vcmask 24576
      %vm983 = vsmask.f32 256
      %vm984 = vmand %vm982, %vm983
      %v985 = vld [vmem:[#allocation2] sm:$0x1]
      %v986 = vsel %vm984, 0, %v985
      %987 = vst [vmem:[#allocation2] sm:$0x1] %v986
      %v988 = vld [vmem:[#allocation2 + $0xc] sm:$0x1]
      %v989 = vsel %vm984, 0, %v988
      %990 = vst [vmem:[#allocation2 + $0xc] sm:$0x1] %v989
      %v991 = vld [vmem:[#allocation2 + $0x18] sm:$0x1]
      %v992 = vsel %vm984, 0, %v991
      %993 = vst [vmem:[#allocation2 + $0x18] sm:$0x1] %v992
      %v994 = vld [vmem:[#allocation2 + $0x24] sm:$0x1]
      %v995 = vsel %vm984, 0, %v994
      %996 = vst [vmem:[#allocation2 + $0x24] sm:$0x1] %v995
      %v997 = vld [vmem:[#allocation2 + $0x30] sm:$0x1]
      %v998 = vsel %vm984, 0, %v997
      %999 = vst [vmem:[#allocation2 + $0x30] sm:$0x1] %v998
      %v1000 = vld [vmem:[#allocation2 + $0x3c] sm:$0x1]
      %v1001 = vsel %vm984, 0, %v1000
      %1002 = vst [vmem:[#allocation2 + $0x3c] sm:$0x1] %v1001
      %v1003 = vld [vmem:[#allocation2 + $0x48] sm:$0x1]
      %v1004 = vsel %vm984, 0, %v1003
      %1005 = vst [vmem:[#allocation2 + $0x48] sm:$0x1] %v1004
      %v1006 = vld [vmem:[#allocation2 + $0x54] sm:$0x1]
      %v1007 = vsel %vm984, 0, %v1006
      %1008 = vst [vmem:[#allocation2 + $0x54] sm:$0x1] %v1007
      %v1009 = vld [vmem:[#allocation2 + $0x60] sm:$0x1]
      %v1010 = vsel %vm984, 0, %v1009
      %1011 = vst [vmem:[#allocation2 + $0x60] sm:$0x1] %v1010
      %v1012 = vld [vmem:[#allocation2 + $0x6c] sm:$0x1]
      %v1013 = vsel %vm984, 0, %v1012
      %1014 = vst [vmem:[#allocation2 + $0x6c] sm:$0x1] %v1013
      %vm1015 = vsmask.f32 7938
      %vm1016 = vmand %vm982, %vm1015
      %v1017 = vld [vmem:[#allocation2 + $0x8] sm:$0x1]
      %v1018 = vsel %vm1016, 0, %v1017
      %1019 = vst [vmem:[#allocation2 + $0x8] sm:$0x1] %v1018
      %v1020 = vld [vmem:[#allocation2 + $0x14] sm:$0x1]
      %v1021 = vsel %vm1016, 0, %v1020
      %1022 = vst [vmem:[#allocation2 + $0x14] sm:$0x1] %v1021
      %v1023 = vld [vmem:[#allocation2 + $0x20] sm:$0x1]
      %v1024 = vsel %vm1016, 0, %v1023
      %1025 = vst [vmem:[#allocation2 + $0x20] sm:$0x1] %v1024
      %v1026 = vld [vmem:[#allocation2 + $0x2c] sm:$0x1]
      %v1027 = vsel %vm1016, 0, %v1026
      %1028 = vst [vmem:[#allocation2 + $0x2c] sm:$0x1] %v1027
      %v1029 = vld [vmem:[#allocation2 + $0x38] sm:$0x1]
      %v1030 = vsel %vm1016, 0, %v1029
      %1031 = vst [vmem:[#allocation2 + $0x38] sm:$0x1] %v1030
      %v1032 = vld [vmem:[#allocation2 + $0x44] sm:$0x1]
      %v1033 = vsel %vm1016, 0, %v1032
      %1034 = vst [vmem:[#allocation2 + $0x44] sm:$0x1] %v1033
      %v1035 = vld [vmem:[#allocation2 + $0x50] sm:$0x1]
      %v1036 = vsel %vm1016, 0, %v1035
      %1037 = vst [vmem:[#allocation2 + $0x50] sm:$0x1] %v1036
      %v1038 = vld [vmem:[#allocation2 + $0x5c] sm:$0x1]
      %v1039 = vsel %vm1016, 0, %v1038
      %1040 = vst [vmem:[#allocation2 + $0x5c] sm:$0x1] %v1039
      %v1041 = vld [vmem:[#allocation2 + $0x68] sm:$0x1]
      %v1042 = vsel %vm1016, 0, %v1041
      %1043 = vst [vmem:[#allocation2 + $0x68] sm:$0x1] %v1042
      %v1044 = vld [vmem:[#allocation2 + $0x74] sm:$0x1]
      %v1045 = vsel %vm1016, 0, %v1044
      %1046 = vst [vmem:[#allocation2 + $0x74] sm:$0x1] %v1045
      %v1057 = vunpack.c.l.b16 %v972
      %v1058 = vunpack.c.h.b16 %v972
      %v1059 = vunpack.c.l.b16 %v973
      %v1060 = vunpack.c.h.b16 %v973
      %v1061 = vunpack.c.l.b16 %v974
      %v1062 = vunpack.c.h.b16 %v974
      %v1063 = vunpack.c.l.b16 %v975
      %v1064 = vunpack.c.h.b16 %v975
      %v1065 = vunpack.c.l.b16 %v976
      %v1066 = vunpack.c.h.b16 %v976
      %v1067 = vunpack.c.l.b16 %v977
      %v1068 = vunpack.c.h.b16 %v977
      %v1069 = vunpack.c.l.b16 %v978
      %v1070 = vunpack.c.h.b16 %v978
      %v1071 = vunpack.c.l.b16 %v979
      %v1072 = vunpack.c.h.b16 %v979
      %v1073 = vunpack.c.l.b16 %v980
      %v1074 = vunpack.c.h.b16 %v980
      %v1075 = vunpack.c.l.b16 %v981
      %v1076 = vunpack.c.h.b16 %v981
      %v1077 = vpack.c.b16 %v1057, %v1057
      %v1078 = vpack.c.b16 %v1058, %v1058
      %v1079 = vpack.c.b16 %v1059, %v1059
      %v1080 = vpack.c.b16 %v1060, %v1060
      %v1081 = vpack.c.b16 %v1061, %v1061
      %v1082 = vpack.c.b16 %v1062, %v1062
      %v1083 = vpack.c.b16 %v1063, %v1063
      %v1084 = vpack.c.b16 %v1064, %v1064
      %v1085 = vpack.c.b16 %v1065, %v1065
      %v1086 = vpack.c.b16 %v1066, %v1066
      %v1087 = vpack.c.b16 %v1067, %v1067
      %v1088 = vpack.c.b16 %v1068, %v1068
      %v1089 = vpack.c.b16 %v1069, %v1069
      %v1090 = vpack.c.b16 %v1070, %v1070
      %v1091 = vpack.c.b16 %v1071, %v1071
      %v1092 = vpack.c.b16 %v1072, %v1072
      %v1093 = vpack.c.b16 %v1073, %v1073
      %v1094 = vpack.c.b16 %v1074, %v1074
      %v1095 = vpack.c.b16 %v1075, %v1075
      %v1096 = vpack.c.b16 %v1076, %v1076
      %vm1097 = vsmask.f32 4368
      %vm1098 = vmor %vm983, %vm1097
      %v1100 = vshrl.u32 %v1077, 16
      %v1102 = vrot.slane %v1100, 7
      %v1103 = vshll.u32 %v1077, 16
      %v1105 = vor.u32 %v1102, %v1103
      %v1106 = vrot.slane %v1102, 4
      %v1108 = vshrl.u32 %v1078, 16
      %v1110 = vrot.slane %v1108, 7
      %v1111 = vshll.u32 %v1078, 16
      %v1113 = vor.u32 %v1110, %v1111
      %v1114 = vsel %vm1098, %v1106, %v1113
      %v1115 = vrot.slane %v1110, 4
      %v1117 = vshrl.u32 %v1079, 16
      %v1119 = vrot.slane %v1117, 7
      %v1120 = vshll.u32 %v1079, 16
      %v1122 = vor.u32 %v1119, %v1120
      %v1123 = vrot.slane %v1119, 4
      %v1125 = vshrl.u32 %v1080, 16
      %v1127 = vrot.slane %v1125, 7
      %v1128 = vshll.u32 %v1080, 16
      %v1130 = vor.u32 %v1127, %v1128
      %v1131 = vsel %vm1098, %v1123, %v1130
      %v1132 = vrot.slane %v1127, 4
      %v1134 = vshrl.u32 %v1081, 16
      %v1136 = vrot.slane %v1134, 7
      %v1137 = vshll.u32 %v1081, 16
      %v1139 = vor.u32 %v1136, %v1137
      %v1140 = vrot.slane %v1136, 4
      %v1142 = vshrl.u32 %v1082, 16
      %v1144 = vrot.slane %v1142, 7
      %v1145 = vshll.u32 %v1082, 16
      %v1147 = vor.u32 %v1144, %v1145
      %v1148 = vsel %vm1098, %v1140, %v1147
      %v1149 = vrot.slane %v1144, 4
      %v1151 = vshrl.u32 %v1083, 16
      %v1153 = vrot.slane %v1151, 7
      %v1154 = vshll.u32 %v1083, 16
      %v1156 = vor.u32 %v1153, %v1154
      %v1157 = vrot.slane %v1153, 4
      %v1159 = vshrl.u32 %v1084, 16
      %v1161 = vrot.slane %v1159, 7
      %v1162 = vshll.u32 %v1084, 16
      %v1164 = vor.u32 %v1161, %v1162
      %v1165 = vsel %vm1098, %v1157, %v1164
      %v1166 = vrot.slane %v1161, 4
      %v1168 = vshrl.u32 %v1085, 16
      %v1170 = vrot.slane %v1168, 7
      %v1171 = vshll.u32 %v1085, 16
      %v1173 = vor.u32 %v1170, %v1171
      %v1174 = vrot.slane %v1170, 4
      %v1176 = vshrl.u32 %v1086, 16
      %v1178 = vrot.slane %v1176, 7
      %v1179 = vshll.u32 %v1086, 16
      %v1181 = vor.u32 %v1178, %v1179
      %v1182 = vsel %vm1098, %v1174, %v1181
      %v1183 = vrot.slane %v1178, 4
      %v1185 = vshrl.u32 %v1087, 16
      %v1187 = vrot.slane %v1185, 7
      %v1188 = vshll.u32 %v1087, 16
      %v1190 = vor.u32 %v1187, %v1188
      %v1191 = vrot.slane %v1187, 4
      %v1193 = vshrl.u32 %v1088, 16
      %v1195 = vrot.slane %v1193, 7
      %v1196 = vshll.u32 %v1088, 16
      %v1198 = vor.u32 %v1195, %v1196
      %v1199 = vsel %vm1098, %v1191, %v1198
      %v1200 = vrot.slane %v1195, 4
      %v1202 = vshrl.u32 %v1089, 16
      %v1204 = vrot.slane %v1202, 7
      %v1205 = vshll.u32 %v1089, 16
      %v1207 = vor.u32 %v1204, %v1205
      %v1208 = vrot.slane %v1204, 4
      %v1210 = vshrl.u32 %v1090, 16
      %v1212 = vrot.slane %v1210, 7
      %v1213 = vshll.u32 %v1090, 16
      %v1215 = vor.u32 %v1212, %v1213
      %v1216 = vsel %vm1098, %v1208, %v1215
      %v1217 = vrot.slane %v1212, 4
      %v1219 = vshrl.u32 %v1091, 16
      %v1221 = vrot.slane %v1219, 7
      %v1222 = vshll.u32 %v1091, 16
      %v1224 = vor.u32 %v1221, %v1222
      %v1225 = vrot.slane %v1221, 4
      %v1227 = vshrl.u32 %v1092, 16
      %v1229 = vrot.slane %v1227, 7
      %v1230 = vshll.u32 %v1092, 16
      %v1232 = vor.u32 %v1229, %v1230
      %v1233 = vsel %vm1098, %v1225, %v1232
      %v1234 = vrot.slane %v1229, 4
      %v1236 = vshrl.u32 %v1093, 16
      %v1238 = vrot.slane %v1236, 7
      %v1239 = vshll.u32 %v1093, 16
      %v1241 = vor.u32 %v1238, %v1239
      %v1242 = vrot.slane %v1238, 4
      %v1244 = vshrl.u32 %v1094, 16
      %v1246 = vrot.slane %v1244, 7
      %v1247 = vshll.u32 %v1094, 16
      %v1249 = vor.u32 %v1246, %v1247
      %v1250 = vsel %vm1098, %v1242, %v1249
      %v1251 = vrot.slane %v1246, 4
      %v1253 = vshrl.u32 %v1095, 16
      %v1255 = vrot.slane %v1253, 7
      %v1256 = vshll.u32 %v1095, 16
      %v1258 = vor.u32 %v1255, %v1256
      %v1259 = vrot.slane %v1255, 4
      %v1261 = vshrl.u32 %v1096, 16
      %v1263 = vrot.slane %v1261, 7
      %v1264 = vshll.u32 %v1096, 16
      %v1266 = vor.u32 %v1263, %v1264
      %v1267 = vsel %vm1098, %v1259, %v1266
      %v1268 = vrot.slane %v1263, 4
      %vm1299 = vcmask 27648
      %vm1300 = vmand %vm1299, %vm1015
      %v1301 = vld [vmem:[#allocation2] sm:$0xf]
      %v1302 = vsel %vm1300, %v1105, %v1301
      %1303 = vst [vmem:[#allocation2] sm:$0xf] %v1302
      %vm1304 = vcmask 27648
      %1305 = vst.msk [vmem:[#allocation2 + $0x4] sm:$0xf] %vm1304, %v1114
      %v1306 = vld [vmem:[#allocation2 + $0x8] sm:$0x1]
      %v1307 = vsel %vm984, %v1115, %v1306
      %1308 = vst [vmem:[#allocation2 + $0x8] sm:$0x1] %v1307
      %v1309 = vld [vmem:[#allocation2 + $0xc] sm:$0xf]
      %v1310 = vsel %vm1300, %v1122, %v1309
      %1311 = vst [vmem:[#allocation2 + $0xc] sm:$0xf] %v1310
      %1312 = vst.msk [vmem:[#allocation2 + $0x10] sm:$0xf] %vm1304, %v1131
      %v1313 = vld [vmem:[#allocation2 + $0x14] sm:$0x1]
      %v1314 = vsel %vm984, %v1132, %v1313
      %1315 = vst [vmem:[#allocation2 + $0x14] sm:$0x1] %v1314
      %v1316 = vld [vmem:[#allocation2 + $0x18] sm:$0xf]
      %v1317 = vsel %vm1300, %v1139, %v1316
      %1318 = vst [vmem:[#allocation2 + $0x18] sm:$0xf] %v1317
      %1319 = vst.msk [vmem:[#allocation2 + $0x1c] sm:$0xf] %vm1304, %v1148
      %v1320 = vld [vmem:[#allocation2 + $0x20] sm:$0x1]
      %v1321 = vsel %vm984, %v1149, %v1320
      %1322 = vst [vmem:[#allocation2 + $0x20] sm:$0x1] %v1321
      %v1323 = vld [vmem:[#allocation2 + $0x24] sm:$0xf]
      %v1324 = vsel %vm1300, %v1156, %v1323
      %1325 = vst [vmem:[#allocation2 + $0x24] sm:$0xf] %v1324
      %1326 = vst.msk [vmem:[#allocation2 + $0x28] sm:$0xf] %vm1304, %v1165
      %v1327 = vld [vmem:[#allocation2 + $0x2c] sm:$0x1]
      %v1328 = vsel %vm984, %v1166, %v1327
      %1329 = vst [vmem:[#allocation2 + $0x2c] sm:$0x1] %v1328
      %v1330 = vld [vmem:[#allocation2 + $0x30] sm:$0xf]
      %v1331 = vsel %vm1300, %v1173, %v1330
      %1332 = vst [vmem:[#allocation2 + $0x30] sm:$0xf] %v1331
      %1333 = vst.msk [vmem:[#allocation2 + $0x34] sm:$0xf] %vm1304, %v1182
      %v1334 = vld [vmem:[#allocation2 + $0x38] sm:$0x1]
      %v1335 = vsel %vm984, %v1183, %v1334
      %1336 = vst [vmem:[#allocation2 + $0x38] sm:$0x1] %v1335
      %v1337 = vld [vmem:[#allocation2 + $0x3c] sm:$0xf]
      %v1338 = vsel %vm1300, %v1190, %v1337
      %1339 = vst [vmem:[#allocation2 + $0x3c] sm:$0xf] %v1338
      %1340 = vst.msk [vmem:[#allocation2 + $0x40] sm:$0xf] %vm1304, %v1199
      %v1341 = vld [vmem:[#allocation2 + $0x44] sm:$0x1]
      %v1342 = vsel %vm984, %v1200, %v1341
      %1343 = vst [vmem:[#allocation2 + $0x44] sm:$0x1] %v1342
      %v1344 = vld [vmem:[#allocation2 + $0x48] sm:$0xf]
      %v1345 = vsel %vm1300, %v1207, %v1344
      %1346 = vst [vmem:[#allocation2 + $0x48] sm:$0xf] %v1345
      %1347 = vst.msk [vmem:[#allocation2 + $0x4c] sm:$0xf] %vm1304, %v1216
      %v1348 = vld [vmem:[#allocation2 + $0x50] sm:$0x1]
      %v1349 = vsel %vm984, %v1217, %v1348
      %1350 = vst [vmem:[#allocation2 + $0x50] sm:$0x1] %v1349
      %v1351 = vld [vmem:[#allocation2 + $0x54] sm:$0xf]
      %v1352 = vsel %vm1300, %v1224, %v1351
      %1353 = vst [vmem:[#allocation2 + $0x54] sm:$0xf] %v1352
      %1354 = vst.msk [vmem:[#allocation2 + $0x58] sm:$0xf] %vm1304, %v1233
      %v1355 = vld [vmem:[#allocation2 + $0x5c] sm:$0x1]
      %v1356 = vsel %vm984, %v1234, %v1355
      %1357 = vst [vmem:[#allocation2 + $0x5c] sm:$0x1] %v1356
      %v1358 = vld [vmem:[#allocation2 + $0x60] sm:$0xf]
      %v1359 = vsel %vm1300, %v1241, %v1358
      %1360 = vst [vmem:[#allocation2 + $0x60] sm:$0xf] %v1359
      %1361 = vst.msk [vmem:[#allocation2 + $0x64] sm:$0xf] %vm1304, %v1250
      %v1362 = vld [vmem:[#allocation2 + $0x68] sm:$0x1]
      %v1363 = vsel %vm984, %v1251, %v1362
      %1364 = vst [vmem:[#allocation2 + $0x68] sm:$0x1] %v1363
      %v1365 = vld [vmem:[#allocation2 + $0x6c] sm:$0xf]
      %v1366 = vsel %vm1300, %v1258, %v1365
      %1367 = vst [vmem:[#allocation2 + $0x6c] sm:$0xf] %v1366
      %1368 = vst.msk [vmem:[#allocation2 + $0x70] sm:$0xf] %vm1304, %v1267
      %v1369 = vld [vmem:[#allocation2 + $0x74] sm:$0x1]
      %v1370 = vsel %vm984, %v1268, %v1369
      %1371 = vst [vmem:[#allocation2 + $0x74] sm:$0x1] %v1370
      %p1372 = scmp.eq.s32.totalorder %s27, 0
      // Predicated region
      $region65: #{tpu_custom_call.1} parent=63 // pred_check
        %p1373 = pneg %p1372
      $region66: #{tpu_custom_call.1} parent=63 // pred_check_branch
        %1375 = sbr.rel (%p1373) target = $region68
      $region67: #{tpu_custom_call.1} parent=63 // pred_region
        %v1376 = vld [vmem:[#allocation2] sm:$0xf]
        %v1377 = vsel %vm1300, 0, %v1376
        %1378 = vst [vmem:[#allocation2] sm:$0xf] %v1377
        %1379 = vst.msk [vmem:[#allocation2 + $0x4] sm:$0xf] %vm1304, 0
        %v1380 = vld [vmem:[#allocation2 + $0x8] sm:$0x1]
        %v1381 = vsel %vm984, 0, %v1380
        %1382 = vst [vmem:[#allocation2 + $0x8] sm:$0x1] %v1381
      $region68: #{tpu_custom_call.1} parent=63 // pred_fallthru
        _
      %p1383 = scmp.eq.s32.totalorder %s27, 1
      // Predicated region
      $region69: #{tpu_custom_call.1} parent=63 // pred_check
        %p1384 = pneg %p1383
      $region70: #{tpu_custom_call.1} parent=63 // pred_check_branch
        %1386 = sbr.rel (%p1384) target = $region72
      $region71: #{tpu_custom_call.1} parent=63 // pred_region
        %s1387 = scalar_lea.vmem [#allocation2], 108
        %v1388 = vld [vmem:[%s1387] sm:$0xf]
        %v1389 = vsel %vm1300, 0, %v1388
        %1390 = vst [vmem:[%s1387] sm:$0xf] %v1389
        %1391 = vst.msk [vmem:[%s1387 + $0x4] sm:$0xf] %vm1304, 0
        %v1392 = vld [vmem:[%s1387 + $0x8] sm:$0x1]
        %v1393 = vsel %vm984, 0, %v1392
        %1394 = vst [vmem:[%s1387 + $0x8] sm:$0x1] %v1393
      $region72: #{tpu_custom_call.1} parent=63 // pred_fallthru
        _
      %v1395 = vld [vmem:[#allocation2] sm:$0xf]
      %v1396 = vld [vmem:[#allocation2 + $0x4] sm:$0xf]
      %v1397 = vld [vmem:[#allocation2 + $0xc] sm:$0xf]
      %v1398 = vld [vmem:[#allocation2 + $0x10] sm:$0xf]
      %v1399 = vld [vmem:[#allocation2 + $0x18] sm:$0xf]
      %v1400 = vld [vmem:[#allocation2 + $0x1c] sm:$0xf]
      %v1401 = vld [vmem:[#allocation2 + $0x24] sm:$0xf]
      %v1402 = vld [vmem:[#allocation2 + $0x28] sm:$0xf]
      %v1403 = vld [vmem:[#allocation2 + $0x30] sm:$0xf]
      %v1404 = vld [vmem:[#allocation2 + $0x34] sm:$0xf]
      %v1405 = vld [vmem:[#allocation2 + $0x3c] sm:$0xf]
      %v1406 = vld [vmem:[#allocation2 + $0x40] sm:$0xf]
      %v1407 = vld [vmem:[#allocation2 + $0x48] sm:$0xf]
      %v1408 = vld [vmem:[#allocation2 + $0x4c] sm:$0xf]
      %v1409 = vld [vmem:[#allocation2 + $0x54] sm:$0xf]
      %v1410 = vld [vmem:[#allocation2 + $0x58] sm:$0xf]
      %v1427 = vunpack.c.l.b16 %v1395
      %v1428 = vunpack.c.l.b16 %v1396
      %v1429 = vunpack.c.l.b16 %v1397
      %v1430 = vunpack.c.l.b16 %v1398
      %v1431 = vunpack.c.l.b16 %v1399
      %v1432 = vunpack.c.l.b16 %v1400
      %v1433 = vunpack.c.l.b16 %v1401
      %v1434 = vunpack.c.l.b16 %v1402
      %v1435 = vunpack.c.l.b16 %v1403
      %v1436 = vunpack.c.l.b16 %v1404
      %v1437 = vunpack.c.l.b16 %v1405
      %v1438 = vunpack.c.l.b16 %v1406
      %v1439 = vunpack.c.l.b16 %v1407
      %v1440 = vunpack.c.l.b16 %v1408
      %v1441 = vunpack.c.l.b16 %v1409
      %v1442 = vunpack.c.l.b16 %v1410
      %v1443 = vpack.c.b16 %v1428, %v1427
      %v1444 = vpack.c.b16 %v1430, %v1429
      %v1445 = vpack.c.b16 %v1432, %v1431
      %v1446 = vpack.c.b16 %v1434, %v1433
      %v1447 = vpack.c.b16 %v1436, %v1435
      %v1448 = vpack.c.b16 %v1438, %v1437
      %v1449 = vpack.c.b16 %v1440, %v1439
      %v1450 = vpack.c.b16 %v1442, %v1441
      %vm1459 = vcmask 31744
      %1460 = vst.msk [vmem:[#allocation3] sm:$0xff] %vm1459, %v1443
      %1461 = vst.msk [vmem:[#allocation3 + $0x8] sm:$0xff] %vm1459, %v1444
      %1462 = vst.msk [vmem:[#allocation3 + $0x10] sm:$0xff] %vm1459, %v1445
      %1463 = vst.msk [vmem:[#allocation3 + $0x18] sm:$0xff] %vm1459, %v1446
      %1464 = vst.msk [vmem:[#allocation3 + $0x20] sm:$0xff] %vm1459, %v1447
      %1465 = vst.msk [vmem:[#allocation3 + $0x28] sm:$0xff] %vm1459, %v1448
      %1466 = vst.msk [vmem:[#allocation3 + $0x30] sm:$0xff] %vm1459, %v1449
      %1467 = vst.msk [vmem:[#allocation3 + $0x38] sm:$0xff] %vm1459, %v1450
      %v1468 = vld [vmem:[#allocation2] sm:$0xf]
      %v1469 = vld [vmem:[#allocation2 + $0x4] sm:$0xf]
      %v1470 = vld [vmem:[#allocation2 + $0x8] sm:$0x1]
      %v1471 = vld [vmem:[#allocation2 + $0xc] sm:$0xf]
      %v1472 = vld [vmem:[#allocation2 + $0x10] sm:$0xf]
      %v1473 = vld [vmem:[#allocation2 + $0x14] sm:$0x1]
      %v1474 = vld [vmem:[#allocation2 + $0x18] sm:$0xf]
      %v1475 = vld [vmem:[#allocation2 + $0x1c] sm:$0xf]
      %v1476 = vld [vmem:[#allocation2 + $0x20] sm:$0x1]
      %v1477 = vld [vmem:[#allocation2 + $0x24] sm:$0xf]
      %v1478 = vld [vmem:[#allocation2 + $0x28] sm:$0xf]
      %v1479 = vld [vmem:[#allocation2 + $0x2c] sm:$0x1]
      %v1480 = vld [vmem:[#allocation2 + $0x30] sm:$0xf]
      %v1481 = vld [vmem:[#allocation2 + $0x34] sm:$0xf]
      %v1482 = vld [vmem:[#allocation2 + $0x38] sm:$0x1]
      %v1483 = vld [vmem:[#allocation2 + $0x3c] sm:$0xf]
      %v1484 = vld [vmem:[#allocation2 + $0x40] sm:$0xf]
      %v1485 = vld [vmem:[#allocation2 + $0x44] sm:$0x1]
      %v1486 = vld [vmem:[#allocation2 + $0x48] sm:$0xf]
      %v1487 = vld [vmem:[#allocation2 + $0x4c] sm:$0xf]
      %v1488 = vld [vmem:[#allocation2 + $0x50] sm:$0x1]
      %v1489 = vld [vmem:[#allocation2 + $0x54] sm:$0xf]
      %v1490 = vld [vmem:[#allocation2 + $0x58] sm:$0xf]
      %v1491 = vld [vmem:[#allocation2 + $0x5c] sm:$0x1]
      %vm1492 = vsmask.f32 3328
      %vm1493 = vsmask.f32 7440
      %vm1494 = vmor %vm1492, %vm1493
      %v1496 = vshrl.u32 %v1468, 16
      %v1498 = vrot.slane %v1496, 4
      %v1499 = vshll.u32 %v1468, 16
      %v1501 = vrot.slane %v1499, 5
      %v1502 = vor.u32 %v1498, %v1501
      %v1503 = vrot.slane %v1502, 4
      %v1505 = vshll.u32 %v1469, 16
      %v1507 = vrot.slane %v1505, 5
      %v1508 = vsel %vm1494, %v1503, %v1507
      %v1509 = vshrl.u32 %v1469, 16
      %v1511 = vrot.slane %v1509, 4
      %v1512 = vor.u32 %v1511, %v1507
      %v1513 = vrot.slane %v1512, 4
      %v1515 = vshll.u32 %v1470, 16
      %v1517 = vrot.slane %v1515, 5
      %v1518 = vsel %vm1494, %v1513, %v1517
      %v1520 = vshrl.u32 %v1471, 16
      %v1522 = vrot.slane %v1520, 4
      %v1523 = vshll.u32 %v1471, 16
      %v1525 = vrot.slane %v1523, 5
      %v1526 = vor.u32 %v1522, %v1525
      %v1527 = vrot.slane %v1526, 4
      %v1529 = vshll.u32 %v1472, 16
      %v1531 = vrot.slane %v1529, 5
      %v1532 = vsel %vm1494, %v1527, %v1531
      %v1533 = vshrl.u32 %v1472, 16
      %v1535 = vrot.slane %v1533, 4
      %v1536 = vor.u32 %v1535, %v1531
      %v1537 = vrot.slane %v1536, 4
      %v1539 = vshll.u32 %v1473, 16
      %v1541 = vrot.slane %v1539, 5
      %v1542 = vsel %vm1494, %v1537, %v1541
      %v1544 = vshrl.u32 %v1474, 16
      %v1546 = vrot.slane %v1544, 4
      %v1547 = vshll.u32 %v1474, 16
      %v1549 = vrot.slane %v1547, 5
      %v1550 = vor.u32 %v1546, %v1549
      %v1551 = vrot.slane %v1550, 4
      %v1553 = vshll.u32 %v1475, 16
      %v1555 = vrot.slane %v1553, 5
      %v1556 = vsel %vm1494, %v1551, %v1555
      %v1557 = vshrl.u32 %v1475, 16
      %v1559 = vrot.slane %v1557, 4
      %v1560 = vor.u32 %v1559, %v1555
      %v1561 = vrot.slane %v1560, 4
      %v1563 = vshll.u32 %v1476, 16
      %v1565 = vrot.slane %v1563, 5
      %v1566 = vsel %vm1494, %v1561, %v1565
      %v1568 = vshrl.u32 %v1477, 16
      %v1570 = vrot.slane %v1568, 4
      %v1571 = vshll.u32 %v1477, 16
      %v1573 = vrot.slane %v1571, 5
      %v1574 = vor.u32 %v1570, %v1573
      %v1575 = vrot.slane %v1574, 4
      %v1577 = vshll.u32 %v1478, 16
      %v1579 = vrot.slane %v1577, 5
      %v1580 = vsel %vm1494, %v1575, %v1579
      %v1581 = vshrl.u32 %v1478, 16
      %v1583 = vrot.slane %v1581, 4
      %v1584 = vor.u32 %v1583, %v1579
      %v1585 = vrot.slane %v1584, 4
      %v1587 = vshll.u32 %v1479, 16
      %v1589 = vrot.slane %v1587, 5
      %v1590 = vsel %vm1494, %v1585, %v1589
      %v1592 = vshrl.u32 %v1480, 16
      %v1594 = vrot.slane %v1592, 4
      %v1595 = vshll.u32 %v1480, 16
      %v1597 = vrot.slane %v1595, 5
      %v1598 = vor.u32 %v1594, %v1597
      %v1599 = vrot.slane %v1598, 4
      %v1601 = vshll.u32 %v1481, 16
      %v1603 = vrot.slane %v1601, 5
      %v1604 = vsel %vm1494, %v1599, %v1603
      %v1605 = vshrl.u32 %v1481, 16
      %v1607 = vrot.slane %v1605, 4
      %v1608 = vor.u32 %v1607, %v1603
      %v1609 = vrot.slane %v1608, 4
      %v1611 = vshll.u32 %v1482, 16
      %v1613 = vrot.slane %v1611, 5
      %v1614 = vsel %vm1494, %v1609, %v1613
      %v1616 = vshrl.u32 %v1483, 16
      %v1618 = vrot.slane %v1616, 4
      %v1619 = vshll.u32 %v1483, 16
      %v1621 = vrot.slane %v1619, 5
      %v1622 = vor.u32 %v1618, %v1621
      %v1623 = vrot.slane %v1622, 4
      %v1625 = vshll.u32 %v1484, 16
      %v1627 = vrot.slane %v1625, 5
      %v1628 = vsel %vm1494, %v1623, %v1627
      %v1629 = vshrl.u32 %v1484, 16
      %v1631 = vrot.slane %v1629, 4
      %v1632 = vor.u32 %v1631, %v1627
      %v1633 = vrot.slane %v1632, 4
      %v1635 = vshll.u32 %v1485, 16
      %v1637 = vrot.slane %v1635, 5
      %v1638 = vsel %vm1494, %v1633, %v1637
      %v1640 = vshrl.u32 %v1486, 16
      %v1642 = vrot.slane %v1640, 4
      %v1643 = vshll.u32 %v1486, 16
      %v1645 = vrot.slane %v1643, 5
      %v1646 = vor.u32 %v1642, %v1645
      %v1647 = vrot.slane %v1646, 4
      %v1649 = vshll.u32 %v1487, 16
      %v1651 = vrot.slane %v1649, 5
      %v1652 = vsel %vm1494, %v1647, %v1651
      %v1653 = vshrl.u32 %v1487, 16
      %v1655 = vrot.slane %v1653, 4
      %v1656 = vor.u32 %v1655, %v1651
      %v1657 = vrot.slane %v1656, 4
      %v1659 = vshll.u32 %v1488, 16
      %v1661 = vrot.slane %v1659, 5
      %v1662 = vsel %vm1494, %v1657, %v1661
      %v1664 = vshrl.u32 %v1489, 16
      %v1666 = vrot.slane %v1664, 4
      %v1667 = vshll.u32 %v1489, 16
      %v1669 = vrot.slane %v1667, 5
      %v1670 = vor.u32 %v1666, %v1669
      %v1671 = vrot.slane %v1670, 4
      %v1673 = vshll.u32 %v1490, 16
      %v1675 = vrot.slane %v1673, 5
      %v1676 = vsel %vm1494, %v1671, %v1675
      %v1677 = vshrl.u32 %v1490, 16
      %v1679 = vrot.slane %v1677, 4
      %v1680 = vor.u32 %v1679, %v1675
      %v1681 = vrot.slane %v1680, 4
      %v1683 = vshll.u32 %v1491, 16
      %v1685 = vrot.slane %v1683, 5
      %v1686 = vsel %vm1494, %v1681, %v1685
      %v1687 = vunpack.c.l.b16 %v1508
      %v1688 = vunpack.c.l.b16 %v1518
      %v1689 = vunpack.c.l.b16 %v1532
      %v1690 = vunpack.c.l.b16 %v1542
      %v1691 = vunpack.c.l.b16 %v1556
      %v1692 = vunpack.c.l.b16 %v1566
      %v1693 = vunpack.c.l.b16 %v1580
      %v1694 = vunpack.c.l.b16 %v1590
      %v1695 = vunpack.c.l.b16 %v1604
      %v1696 = vunpack.c.l.b16 %v1614
      %v1697 = vunpack.c.l.b16 %v1628
      %v1698 = vunpack.c.l.b16 %v1638
      %v1699 = vunpack.c.l.b16 %v1652
      %v1700 = vunpack.c.l.b16 %v1662
      %v1701 = vunpack.c.l.b16 %v1676
      %v1702 = vunpack.c.l.b16 %v1686
      %v1703 = vpack.c.b16 %v1688, %v1687
      %v1704 = vpack.c.b16 %v1690, %v1689
      %v1705 = vpack.c.b16 %v1692, %v1691
      %v1706 = vpack.c.b16 %v1694, %v1693
      %v1707 = vpack.c.b16 %v1696, %v1695
      %v1708 = vpack.c.b16 %v1698, %v1697
      %v1709 = vpack.c.b16 %v1700, %v1699
      %v1710 = vpack.c.b16 %v1702, %v1701
      %1711 = vrot.lane.b32.xlu0 %v1703, 4
      %v1712 = vpop.permute.xlu0 %1711
      %1713 = vrot.lane.b32.xlu0 %v1704, 4
      %v1714 = vpop.permute.xlu0 %1713
      %1715 = vrot.lane.b32.xlu0 %v1705, 4
      %v1716 = vpop.permute.xlu0 %1715
      %1717 = vrot.lane.b32.xlu0 %v1706, 4
      %v1718 = vpop.permute.xlu0 %1717
      %1719 = vrot.lane.b32.xlu0 %v1707, 4
      %v1720 = vpop.permute.xlu0 %1719
      %1721 = vrot.lane.b32.xlu0 %v1708, 4
      %v1722 = vpop.permute.xlu0 %1721
      %1723 = vrot.lane.b32.xlu0 %v1709, 4
      %v1724 = vpop.permute.xlu0 %1723
      %1725 = vrot.lane.b32.xlu0 %v1710, 4
      %v1726 = vpop.permute.xlu0 %1725
      %vm1735 = vcmask 64544
      %1736 = vst.msk [vmem:[#allocation3] sm:$0xff] %vm1735, %v1712
      %1737 = vst.msk [vmem:[#allocation3 + $0x8] sm:$0xff] %vm1735, %v1714
      %1738 = vst.msk [vmem:[#allocation3 + $0x10] sm:$0xff] %vm1735, %v1716
      %1739 = vst.msk [vmem:[#allocation3 + $0x18] sm:$0xff] %vm1735, %v1718
      %1740 = vst.msk [vmem:[#allocation3 + $0x20] sm:$0xff] %vm1735, %v1720
      %1741 = vst.msk [vmem:[#allocation3 + $0x28] sm:$0xff] %vm1735, %v1722
      %1742 = vst.msk [vmem:[#allocation3 + $0x30] sm:$0xff] %vm1735, %v1724
      %1743 = vst.msk [vmem:[#allocation3 + $0x38] sm:$0xff] %vm1735, %v1726
      %v1744 = vld [vmem:[#allocation2] sm:$0xe]
      %v1745 = vld [vmem:[#allocation2 + $0x4] sm:$0xf]
      %v1746 = vld [vmem:[#allocation2 + $0x8] sm:$0x1]
      %v1747 = vld [vmem:[#allocation2 + $0xc] sm:$0xe]
      %v1748 = vld [vmem:[#allocation2 + $0x10] sm:$0xf]
      %v1749 = vld [vmem:[#allocation2 + $0x14] sm:$0x1]
      %v1750 = vld [vmem:[#allocation2 + $0x18] sm:$0xe]
      %v1751 = vld [vmem:[#allocation2 + $0x1c] sm:$0xf]
      %v1752 = vld [vmem:[#allocation2 + $0x20] sm:$0x1]
      %v1753 = vld [vmem:[#allocation2 + $0x24] sm:$0xe]
      %v1754 = vld [vmem:[#allocation2 + $0x28] sm:$0xf]
      %v1755 = vld [vmem:[#allocation2 + $0x2c] sm:$0x1]
      %v1756 = vld [vmem:[#allocation2 + $0x30] sm:$0xe]
      %v1757 = vld [vmem:[#allocation2 + $0x34] sm:$0xf]
      %v1758 = vld [vmem:[#allocation2 + $0x38] sm:$0x1]
      %v1759 = vld [vmem:[#allocation2 + $0x3c] sm:$0xe]
      %v1760 = vld [vmem:[#allocation2 + $0x40] sm:$0xf]
      %v1761 = vld [vmem:[#allocation2 + $0x44] sm:$0x1]
      %v1762 = vld [vmem:[#allocation2 + $0x48] sm:$0xe]
      %v1763 = vld [vmem:[#allocation2 + $0x4c] sm:$0xf]
      %v1764 = vld [vmem:[#allocation2 + $0x50] sm:$0x1]
      %v1765 = vld [vmem:[#allocation2 + $0x54] sm:$0xe]
      %v1766 = vld [vmem:[#allocation2 + $0x58] sm:$0xf]
      %v1767 = vld [vmem:[#allocation2 + $0x5c] sm:$0x1]
      %vm1792 = vcmask 1042432
      %vm1793 = vcmask 1046532
      %vm1794 = vmor %vm1792, %vm1793
      %v1795 = vrot.slane %v1744, 5
      %v1796 = vrot.slane %v1795, 4
      %v1797 = vrot.slane %v1745, 5
      %v1798 = vsel %vm1794, %v1796, %v1797
      %v1799 = vrot.slane %v1797, 4
      %v1800 = vrot.slane %v1746, 5
      %v1801 = vsel %vm1794, %v1799, %v1800
      %v1802 = vrot.slane %v1747, 5
      %v1803 = vrot.slane %v1802, 4
      %v1804 = vrot.slane %v1748, 5
      %v1805 = vsel %vm1794, %v1803, %v1804
      %v1806 = vrot.slane %v1804, 4
      %v1807 = vrot.slane %v1749, 5
      %v1808 = vsel %vm1794, %v1806, %v1807
      %v1809 = vrot.slane %v1750, 5
      %v1810 = vrot.slane %v1809, 4
      %v1811 = vrot.slane %v1751, 5
      %v1812 = vsel %vm1794, %v1810, %v1811
      %v1813 = vrot.slane %v1811, 4
      %v1814 = vrot.slane %v1752, 5
      %v1815 = vsel %vm1794, %v1813, %v1814
      %v1816 = vrot.slane %v1753, 5
      %v1817 = vrot.slane %v1816, 4
      %v1818 = vrot.slane %v1754, 5
      %v1819 = vsel %vm1794, %v1817, %v1818
      %v1820 = vrot.slane %v1818, 4
      %v1821 = vrot.slane %v1755, 5
      %v1822 = vsel %vm1794, %v1820, %v1821
      %v1823 = vrot.slane %v1756, 5
      %v1824 = vrot.slane %v1823, 4
      %v1825 = vrot.slane %v1757, 5
      %v1826 = vsel %vm1794, %v1824, %v1825
      %v1827 = vrot.slane %v1825, 4
      %v1828 = vrot.slane %v1758, 5
      %v1829 = vsel %vm1794, %v1827, %v1828
      %v1830 = vrot.slane %v1759, 5
      %v1831 = vrot.slane %v1830, 4
      %v1832 = vrot.slane %v1760, 5
      %v1833 = vsel %vm1794, %v1831, %v1832
      %v1834 = vrot.slane %v1832, 4
      %v1835 = vrot.slane %v1761, 5
      %v1836 = vsel %vm1794, %v1834, %v1835
      %v1837 = vrot.slane %v1762, 5
      %v1838 = vrot.slane %v1837, 4
      %v1839 = vrot.slane %v1763, 5
      %v1840 = vsel %vm1794, %v1838, %v1839
      %v1841 = vrot.slane %v1839, 4
      %v1842 = vrot.slane %v1764, 5
      %v1843 = vsel %vm1794, %v1841, %v1842
      %v1844 = vrot.slane %v1765, 5
      %v1845 = vrot.slane %v1844, 4
      %v1846 = vrot.slane %v1766, 5
      %v1847 = vsel %vm1794, %v1845, %v1846
      %v1848 = vrot.slane %v1846, 4
      %v1849 = vrot.slane %v1767, 5
      %v1850 = vsel %vm1794, %v1848, %v1849
      %v1851 = vunpack.c.l.b16 %v1798
      %v1852 = vunpack.c.l.b16 %v1801
      %v1853 = vunpack.c.l.b16 %v1805
      %v1854 = vunpack.c.l.b16 %v1808
      %v1855 = vunpack.c.l.b16 %v1812
      %v1856 = vunpack.c.l.b16 %v1815
      %v1857 = vunpack.c.l.b16 %v1819
      %v1858 = vunpack.c.l.b16 %v1822
      %v1859 = vunpack.c.l.b16 %v1826
      %v1860 = vunpack.c.l.b16 %v1829
      %v1861 = vunpack.c.l.b16 %v1833
      %v1862 = vunpack.c.l.b16 %v1836
      %v1863 = vunpack.c.l.b16 %v1840
      %v1864 = vunpack.c.l.b16 %v1843
      %v1865 = vunpack.c.l.b16 %v1847
      %v1866 = vunpack.c.l.b16 %v1850
      %v1867 = vpack.c.b16 %v1852, %v1851
      %v1868 = vpack.c.b16 %v1854, %v1853
      %v1869 = vpack.c.b16 %v1856, %v1855
      %v1870 = vpack.c.b16 %v1858, %v1857
      %v1871 = vpack.c.b16 %v1860, %v1859
      %v1872 = vpack.c.b16 %v1862, %v1861
      %v1873 = vpack.c.b16 %v1864, %v1863
      %v1874 = vpack.c.b16 %v1866, %v1865
      %1875 = vrot.lane.b32.xlu0 %v1867, 8
      %v1876 = vpop.permute.xlu0 %1875
      %1877 = vrot.lane.b32.xlu0 %v1868, 8
      %v1878 = vpop.permute.xlu0 %1877
      %1879 = vrot.lane.b32.xlu0 %v1869, 8
      %v1880 = vpop.permute.xlu0 %1879
      %1881 = vrot.lane.b32.xlu0 %v1870, 8
      %v1882 = vpop.permute.xlu0 %1881
      %1883 = vrot.lane.b32.xlu0 %v1871, 8
      %v1884 = vpop.permute.xlu0 %1883
      %1885 = vrot.lane.b32.xlu0 %v1872, 8
      %v1886 = vpop.permute.xlu0 %1885
      %1887 = vrot.lane.b32.xlu0 %v1873, 8
      %v1888 = vpop.permute.xlu0 %1887
      %1889 = vrot.lane.b32.xlu0 %v1874, 8
      %v1890 = vpop.permute.xlu0 %1889
      %vm1899 = vcmask 97344
      %1900 = vst.msk [vmem:[#allocation3] sm:$0xff] %vm1899, %v1876
      %1901 = vst.msk [vmem:[#allocation3 + $0x8] sm:$0xff] %vm1899, %v1878
      %1902 = vst.msk [vmem:[#allocation3 + $0x10] sm:$0xff] %vm1899, %v1880
      %1903 = vst.msk [vmem:[#allocation3 + $0x18] sm:$0xff] %vm1899, %v1882
      %1904 = vst.msk [vmem:[#allocation3 + $0x20] sm:$0xff] %vm1899, %v1884
      %1905 = vst.msk [vmem:[#allocation3 + $0x28] sm:$0xff] %vm1899, %v1886
      %1906 = vst.msk [vmem:[#allocation3 + $0x30] sm:$0xff] %vm1899, %v1888
      %1907 = vst.msk [vmem:[#allocation3 + $0x38] sm:$0xff] %vm1899, %v1890
      %s1908 = scalar_lea.vmem [#allocation2], 12
      %v1909 = vld [vmem:[%s1908] sm:$0xf]
      %v1910 = vld [vmem:[%s1908 + $0x4] sm:$0xf]
      %v1911 = vld [vmem:[%s1908 + $0xc] sm:$0xf]
      %v1912 = vld [vmem:[%s1908 + $0x10] sm:$0xf]
      %v1913 = vld [vmem:[%s1908 + $0x18] sm:$0xf]
      %v1914 = vld [vmem:[%s1908 + $0x1c] sm:$0xf]
      %v1915 = vld [vmem:[%s1908 + $0x24] sm:$0xf]
      %v1916 = vld [vmem:[%s1908 + $0x28] sm:$0xf]
      %v1917 = vld [vmem:[%s1908 + $0x30] sm:$0xf]
      %v1918 = vld [vmem:[%s1908 + $0x34] sm:$0xf]
      %v1919 = vld [vmem:[%s1908 + $0x3c] sm:$0xf]
      %v1920 = vld [vmem:[%s1908 + $0x40] sm:$0xf]
      %v1921 = vld [vmem:[%s1908 + $0x48] sm:$0xf]
      %v1922 = vld [vmem:[%s1908 + $0x4c] sm:$0xf]
      %v1923 = vld [vmem:[%s1908 + $0x54] sm:$0xf]
      %v1924 = vld [vmem:[%s1908 + $0x58] sm:$0xf]
      %v1941 = vunpack.c.l.b16 %v1909
      %v1942 = vunpack.c.l.b16 %v1910
      %v1943 = vunpack.c.l.b16 %v1911
      %v1944 = vunpack.c.l.b16 %v1912
      %v1945 = vunpack.c.l.b16 %v1913
      %v1946 = vunpack.c.l.b16 %v1914
      %v1947 = vunpack.c.l.b16 %v1915
      %v1948 = vunpack.c.l.b16 %v1916
      %v1949 = vunpack.c.l.b16 %v1917
      %v1950 = vunpack.c.l.b16 %v1918
      %v1951 = vunpack.c.l.b16 %v1919
      %v1952 = vunpack.c.l.b16 %v1920
      %v1953 = vunpack.c.l.b16 %v1921
      %v1954 = vunpack.c.l.b16 %v1922
      %v1955 = vunpack.c.l.b16 %v1923
      %v1956 = vunpack.c.l.b16 %v1924
      %v1957 = vpack.c.b16 %v1942, %v1941
      %v1958 = vpack.c.b16 %v1944, %v1943
      %v1959 = vpack.c.b16 %v1946, %v1945
      %v1960 = vpack.c.b16 %v1948, %v1947
      %v1961 = vpack.c.b16 %v1950, %v1949
      %v1962 = vpack.c.b16 %v1952, %v1951
      %v1963 = vpack.c.b16 %v1954, %v1953
      %v1964 = vpack.c.b16 %v1956, %v1955
      %1965 = vrot.lane.b32.xlu0 %v1957, 12
      %v1966 = vpop.permute.xlu0 %1965
      %1967 = vrot.lane.b32.xlu0 %v1958, 12
      %v1968 = vpop.permute.xlu0 %1967
      %1969 = vrot.lane.b32.xlu0 %v1959, 12
      %v1970 = vpop.permute.xlu0 %1969
      %1971 = vrot.lane.b32.xlu0 %v1960, 12
      %v1972 = vpop.permute.xlu0 %1971
      %1973 = vrot.lane.b32.xlu0 %v1961, 12
      %v1974 = vpop.permute.xlu0 %1973
      %1975 = vrot.lane.b32.xlu0 %v1962, 12
      %v1976 = vpop.permute.xlu0 %1975
      %1977 = vrot.lane.b32.xlu0 %v1963, 12
      %v1978 = vpop.permute.xlu0 %1977
      %1979 = vrot.lane.b32.xlu0 %v1964, 12
      %v1980 = vpop.permute.xlu0 %1979
      %vm1989 = vcmask 130144
      %1990 = vst.msk [vmem:[#allocation3] sm:$0xff] %vm1989, %v1966
      %1991 = vst.msk [vmem:[#allocation3 + $0x8] sm:$0xff] %vm1989, %v1968
      %1992 = vst.msk [vmem:[#allocation3 + $0x10] sm:$0xff] %vm1989, %v1970
      %1993 = vst.msk [vmem:[#allocation3 + $0x18] sm:$0xff] %vm1989, %v1972
      %1994 = vst.msk [vmem:[#allocation3 + $0x20] sm:$0xff] %vm1989, %v1974
      %1995 = vst.msk [vmem:[#allocation3 + $0x28] sm:$0xff] %vm1989, %v1976
      %1996 = vst.msk [vmem:[#allocation3 + $0x30] sm:$0xff] %vm1989, %v1978
      %1997 = vst.msk [vmem:[#allocation3 + $0x38] sm:$0xff] %vm1989, %v1980
      %v1998 = vld [vmem:[%s1908] sm:$0xf]
      %v1999 = vld [vmem:[%s1908 + $0x4] sm:$0xf]
      %v2000 = vld [vmem:[%s1908 + $0x8] sm:$0x1]
      %v2001 = vld [vmem:[%s1908 + $0xc] sm:$0xf]
      %v2002 = vld [vmem:[%s1908 + $0x10] sm:$0xf]
      %v2003 = vld [vmem:[%s1908 + $0x14] sm:$0x1]
      %v2004 = vld [vmem:[%s1908 + $0x18] sm:$0xf]
      %v2005 = vld [vmem:[%s1908 + $0x1c] sm:$0xf]
      %v2006 = vld [vmem:[%s1908 + $0x20] sm:$0x1]
      %v2007 = vld [vmem:[%s1908 + $0x24] sm:$0xf]
      %v2008 = vld [vmem:[%s1908 + $0x28] sm:$0xf]
      %v2009 = vld [vmem:[%s1908 + $0x2c] sm:$0x1]
      %v2010 = vld [vmem:[%s1908 + $0x30] sm:$0xf]
      %v2011 = vld [vmem:[%s1908 + $0x34] sm:$0xf]
      %v2012 = vld [vmem:[%s1908 + $0x38] sm:$0x1]
      %v2013 = vld [vmem:[%s1908 + $0x3c] sm:$0xf]
      %v2014 = vld [vmem:[%s1908 + $0x40] sm:$0xf]
      %v2015 = vld [vmem:[%s1908 + $0x44] sm:$0x1]
      %v2016 = vld [vmem:[%s1908 + $0x48] sm:$0xf]
      %v2017 = vld [vmem:[%s1908 + $0x4c] sm:$0xf]
      %v2018 = vld [vmem:[%s1908 + $0x50] sm:$0x1]
      %v2019 = vld [vmem:[%s1908 + $0x54] sm:$0xf]
      %v2020 = vld [vmem:[%s1908 + $0x58] sm:$0xf]
      %v2021 = vld [vmem:[%s1908 + $0x5c] sm:$0x1]
      %v2023 = vshrl.u32 %v1998, 16
      %v2025 = vrot.slane %v2023, 4
      %v2026 = vshll.u32 %v1998, 16
      %v2028 = vrot.slane %v2026, 5
      %v2029 = vor.u32 %v2025, %v2028
      %v2030 = vrot.slane %v2029, 4
      %v2032 = vshll.u32 %v1999, 16
      %v2034 = vrot.slane %v2032, 5
      %v2035 = vsel %vm1494, %v2030, %v2034
      %v2036 = vshrl.u32 %v1999, 16
      %v2038 = vrot.slane %v2036, 4
      %v2039 = vor.u32 %v2038, %v2034
      %v2040 = vrot.slane %v2039, 4
      %v2042 = vshll.u32 %v2000, 16
      %v2044 = vrot.slane %v2042, 5
      %v2045 = vsel %vm1494, %v2040, %v2044
      %v2047 = vshrl.u32 %v2001, 16
      %v2049 = vrot.slane %v2047, 4
      %v2050 = vshll.u32 %v2001, 16
      %v2052 = vrot.slane %v2050, 5
      %v2053 = vor.u32 %v2049, %v2052
      %v2054 = vrot.slane %v2053, 4
      %v2056 = vshll.u32 %v2002, 16
      %v2058 = vrot.slane %v2056, 5
      %v2059 = vsel %vm1494, %v2054, %v2058
      %v2060 = vshrl.u32 %v2002, 16
      %v2062 = vrot.slane %v2060, 4
      %v2063 = vor.u32 %v2062, %v2058
      %v2064 = vrot.slane %v2063, 4
      %v2066 = vshll.u32 %v2003, 16
      %v2068 = vrot.slane %v2066, 5
      %v2069 = vsel %vm1494, %v2064, %v2068
      %v2071 = vshrl.u32 %v2004, 16
      %v2073 = vrot.slane %v2071, 4
      %v2074 = vshll.u32 %v2004, 16
      %v2076 = vrot.slane %v2074, 5
      %v2077 = vor.u32 %v2073, %v2076
      %v2078 = vrot.slane %v2077, 4
      %v2080 = vshll.u32 %v2005, 16
      %v2082 = vrot.slane %v2080, 5
      %v2083 = vsel %vm1494, %v2078, %v2082
      %v2084 = vshrl.u32 %v2005, 16
      %v2086 = vrot.slane %v2084, 4
      %v2087 = vor.u32 %v2086, %v2082
      %v2088 = vrot.slane %v2087, 4
      %v2090 = vshll.u32 %v2006, 16
      %v2092 = vrot.slane %v2090, 5
      %v2093 = vsel %vm1494, %v2088, %v2092
      %v2095 = vshrl.u32 %v2007, 16
      %v2097 = vrot.slane %v2095, 4
      %v2098 = vshll.u32 %v2007, 16
      %v2100 = vrot.slane %v2098, 5
      %v2101 = vor.u32 %v2097, %v2100
      %v2102 = vrot.slane %v2101, 4
      %v2104 = vshll.u32 %v2008, 16
      %v2106 = vrot.slane %v2104, 5
      %v2107 = vsel %vm1494, %v2102, %v2106
      %v2108 = vshrl.u32 %v2008, 16
      %v2110 = vrot.slane %v2108, 4
      %v2111 = vor.u32 %v2110, %v2106
      %v2112 = vrot.slane %v2111, 4
      %v2114 = vshll.u32 %v2009, 16
      %v2116 = vrot.slane %v2114, 5
      %v2117 = vsel %vm1494, %v2112, %v2116
      %v2119 = vshrl.u32 %v2010, 16
      %v2121 = vrot.slane %v2119, 4
      %v2122 = vshll.u32 %v2010, 16
      %v2124 = vrot.slane %v2122, 5
      %v2125 = vor.u32 %v2121, %v2124
      %v2126 = vrot.slane %v2125, 4
      %v2128 = vshll.u32 %v2011, 16
      %v2130 = vrot.slane %v2128, 5
      %v2131 = vsel %vm1494, %v2126, %v2130
      %v2132 = vshrl.u32 %v2011, 16
      %v2134 = vrot.slane %v2132, 4
      %v2135 = vor.u32 %v2134, %v2130
      %v2136 = vrot.slane %v2135, 4
      %v2138 = vshll.u32 %v2012, 16
      %v2140 = vrot.slane %v2138, 5
      %v2141 = vsel %vm1494, %v2136, %v2140
      %v2143 = vshrl.u32 %v2013, 16
      %v2145 = vrot.slane %v2143, 4
      %v2146 = vshll.u32 %v2013, 16
      %v2148 = vrot.slane %v2146, 5
      %v2149 = vor.u32 %v2145, %v2148
      %v2150 = vrot.slane %v2149, 4
      %v2152 = vshll.u32 %v2014, 16
      %v2154 = vrot.slane %v2152, 5
      %v2155 = vsel %vm1494, %v2150, %v2154
      %v2156 = vshrl.u32 %v2014, 16
      %v2158 = vrot.slane %v2156, 4
      %v2159 = vor.u32 %v2158, %v2154
      %v2160 = vrot.slane %v2159, 4
      %v2162 = vshll.u32 %v2015, 16
      %v2164 = vrot.slane %v2162, 5
      %v2165 = vsel %vm1494, %v2160, %v2164
      %v2167 = vshrl.u32 %v2016, 16
      %v2169 = vrot.slane %v2167, 4
      %v2170 = vshll.u32 %v2016, 16
      %v2172 = vrot.slane %v2170, 5
      %v2173 = vor.u32 %v2169, %v2172
      %v2174 = vrot.slane %v2173, 4
      %v2176 = vshll.u32 %v2017, 16
      %v2178 = vrot.slane %v2176, 5
      %v2179 = vsel %vm1494, %v2174, %v2178
      %v2180 = vshrl.u32 %v2017, 16
      %v2182 = vrot.slane %v2180, 4
      %v2183 = vor.u32 %v2182, %v2178
      %v2184 = vrot.slane %v2183, 4
      %v2186 = vshll.u32 %v2018, 16
      %v2188 = vrot.slane %v2186, 5
      %v2189 = vsel %vm1494, %v2184, %v2188
      %v2191 = vshrl.u32 %v2019, 16
      %v2193 = vrot.slane %v2191, 4
      %v2194 = vshll.u32 %v2019, 16
      %v2196 = vrot.slane %v2194, 5
      %v2197 = vor.u32 %v2193, %v2196
      %v2198 = vrot.slane %v2197, 4
      %v2200 = vshll.u32 %v2020, 16
      %v2202 = vrot.slane %v2200, 5
      %v2203 = vsel %vm1494, %v2198, %v2202
      %v2204 = vshrl.u32 %v2020, 16
      %v2206 = vrot.slane %v2204, 4
      %v2207 = vor.u32 %v2206, %v2202
      %v2208 = vrot.slane %v2207, 4
      %v2210 = vshll.u32 %v2021, 16
      %v2212 = vrot.slane %v2210, 5
      %v2213 = vsel %vm1494, %v2208, %v2212
      %v2214 = vunpack.c.l.b16 %v2035
      %v2215 = vunpack.c.l.b16 %v2045
      %v2216 = vunpack.c.l.b16 %v2059
      %v2217 = vunpack.c.l.b16 %v2069
      %v2218 = vunpack.c.l.b16 %v2083
      %v2219 = vunpack.c.l.b16 %v2093
      %v2220 = vunpack.c.l.b16 %v2107
      %v2221 = vunpack.c.l.b16 %v2117
      %v2222 = vunpack.c.l.b16 %v2131
      %v2223 = vunpack.c.l.b16 %v2141
      %v2224 = vunpack.c.l.b16 %v2155
      %v2225 = vunpack.c.l.b16 %v2165
      %v2226 = vunpack.c.l.b16 %v2179
      %v2227 = vunpack.c.l.b16 %v2189
      %v2228 = vunpack.c.l.b16 %v2203
      %v2229 = vunpack.c.l.b16 %v2213
      %v2230 = vpack.c.b16 %v2215, %v2214
      %v2231 = vpack.c.b16 %v2217, %v2216
      %v2232 = vpack.c.b16 %v2219, %v2218
      %v2233 = vpack.c.b16 %v2221, %v2220
      %v2234 = vpack.c.b16 %v2223, %v2222
      %v2235 = vpack.c.b16 %v2225, %v2224
      %v2236 = vpack.c.b16 %v2227, %v2226
      %v2237 = vpack.c.b16 %v2229, %v2228
      %2238 = vrot.lane.b32.xlu0 %v2230, 16
      %v2239 = vpop.permute.xlu0 %2238
      %2240 = vrot.lane.b32.xlu0 %v2231, 16
      %v2241 = vpop.permute.xlu0 %2240
      %2242 = vrot.lane.b32.xlu0 %v2232, 16
      %v2243 = vpop.permute.xlu0 %2242
      %2244 = vrot.lane.b32.xlu0 %v2233, 16
      %v2245 = vpop.permute.xlu0 %2244
      %2246 = vrot.lane.b32.xlu0 %v2234, 16
      %v2247 = vpop.permute.xlu0 %2246
      %2248 = vrot.lane.b32.xlu0 %v2235, 16
      %v2249 = vpop.permute.xlu0 %2248
      %2250 = vrot.lane.b32.xlu0 %v2236, 16
      %v2251 = vpop.permute.xlu0 %2250
      %2252 = vrot.lane.b32.xlu0 %v2237, 16
      %v2253 = vpop.permute.xlu0 %2252
      %vm2262 = vcmask 162944
      %2263 = vst.msk [vmem:[#allocation3] sm:$0xff] %vm2262, %v2239
      %2264 = vst.msk [vmem:[#allocation3 + $0x8] sm:$0xff] %vm2262, %v2241
      %2265 = vst.msk [vmem:[#allocation3 + $0x10] sm:$0xff] %vm2262, %v2243
      %2266 = vst.msk [vmem:[#allocation3 + $0x18] sm:$0xff] %vm2262, %v2245
      %2267 = vst.msk [vmem:[#allocation3 + $0x20] sm:$0xff] %vm2262, %v2247
      %2268 = vst.msk [vmem:[#allocation3 + $0x28] sm:$0xff] %vm2262, %v2249
      %2269 = vst.msk [vmem:[#allocation3 + $0x30] sm:$0xff] %vm2262, %v2251
      %2270 = vst.msk [vmem:[#allocation3 + $0x38] sm:$0xff] %vm2262, %v2253
      %v2271 = vld [vmem:[%s1908] sm:$0xe]
      %v2272 = vld [vmem:[%s1908 + $0x4] sm:$0xf]
      %v2273 = vld [vmem:[%s1908 + $0x8] sm:$0x1]
      %v2274 = vld [vmem:[%s1908 + $0xc] sm:$0xe]
      %v2275 = vld [vmem:[%s1908 + $0x10] sm:$0xf]
      %v2276 = vld [vmem:[%s1908 + $0x14] sm:$0x1]
      %v2277 = vld [vmem:[%s1908 + $0x18] sm:$0xe]
      %v2278 = vld [vmem:[%s1908 + $0x1c] sm:$0xf]
      %v2279 = vld [vmem:[%s1908 + $0x20] sm:$0x1]
      %v2280 = vld [vmem:[%s1908 + $0x24] sm:$0xe]
      %v2281 = vld [vmem:[%s1908 + $0x28] sm:$0xf]
      %v2282 = vld [vmem:[%s1908 + $0x2c] sm:$0x1]
      %v2283 = vld [vmem:[%s1908 + $0x30] sm:$0xe]
      %v2284 = vld [vmem:[%s1908 + $0x34] sm:$0xf]
      %v2285 = vld [vmem:[%s1908 + $0x38] sm:$0x1]
      %v2286 = vld [vmem:[%s1908 + $0x3c] sm:$0xe]
      %v2287 = vld [vmem:[%s1908 + $0x40] sm:$0xf]
      %v2288 = vld [vmem:[%s1908 + $0x44] sm:$0x1]
      %v2289 = vld [vmem:[%s1908 + $0x48] sm:$0xe]
      %v2290 = vld [vmem:[%s1908 + $0x4c] sm:$0xf]
      %v2291 = vld [vmem:[%s1908 + $0x50] sm:$0x1]
      %v2292 = vld [vmem:[%s1908 + $0x54] sm:$0xe]
      %v2293 = vld [vmem:[%s1908 + $0x58] sm:$0xf]
      %v2294 = vld [vmem:[%s1908 + $0x5c] sm:$0x1]
      %v2319 = vrot.slane %v2271, 5
      %v2320 = vrot.slane %v2319, 4
      %v2321 = vrot.slane %v2272, 5
      %v2322 = vsel %vm1794, %v2320, %v2321
      %v2323 = vrot.slane %v2321, 4
      %v2324 = vrot.slane %v2273, 5
      %v2325 = vsel %vm1794, %v2323, %v2324
      %v2326 = vrot.slane %v2274, 5
      %v2327 = vrot.slane %v2326, 4
      %v2328 = vrot.slane %v2275, 5
      %v2329 = vsel %vm1794, %v2327, %v2328
      %v2330 = vrot.slane %v2328, 4
      %v2331 = vrot.slane %v2276, 5
      %v2332 = vsel %vm1794, %v2330, %v2331
      %v2333 = vrot.slane %v2277, 5
      %v2334 = vrot.slane %v2333, 4
      %v2335 = vrot.slane %v2278, 5
      %v2336 = vsel %vm1794, %v2334, %v2335
      %v2337 = vrot.slane %v2335, 4
      %v2338 = vrot.slane %v2279, 5
      %v2339 = vsel %vm1794, %v2337, %v2338
      %v2340 = vrot.slane %v2280, 5
      %v2341 = vrot.slane %v2340, 4
      %v2342 = vrot.slane %v2281, 5
      %v2343 = vsel %vm1794, %v2341, %v2342
      %v2344 = vrot.slane %v2342, 4
      %v2345 = vrot.slane %v2282, 5
      %v2346 = vsel %vm1794, %v2344, %v2345
      %v2347 = vrot.slane %v2283, 5
      %v2348 = vrot.slane %v2347, 4
      %v2349 = vrot.slane %v2284, 5
      %v2350 = vsel %vm1794, %v2348, %v2349
      %v2351 = vrot.slane %v2349, 4
      %v2352 = vrot.slane %v2285, 5
      %v2353 = vsel %vm1794, %v2351, %v2352
      %v2354 = vrot.slane %v2286, 5
      %v2355 = vrot.slane %v2354, 4
      %v2356 = vrot.slane %v2287, 5
      %v2357 = vsel %vm1794, %v2355, %v2356
      %v2358 = vrot.slane %v2356, 4
      %v2359 = vrot.slane %v2288, 5
      %v2360 = vsel %vm1794, %v2358, %v2359
      %v2361 = vrot.slane %v2289, 5
      %v2362 = vrot.slane %v2361, 4
      %v2363 = vrot.slane %v2290, 5
      %v2364 = vsel %vm1794, %v2362, %v2363
      %v2365 = vrot.slane %v2363, 4
      %v2366 = vrot.slane %v2291, 5
      %v2367 = vsel %vm1794, %v2365, %v2366
      %v2368 = vrot.slane %v2292, 5
      %v2369 = vrot.slane %v2368, 4
      %v2370 = vrot.slane %v2293, 5
      %v2371 = vsel %vm1794, %v2369, %v2370
      %v2372 = vrot.slane %v2370, 4
      %v2373 = vrot.slane %v2294, 5
      %v2374 = vsel %vm1794, %v2372, %v2373
      %v2375 = vunpack.c.l.b16 %v2322
      %v2376 = vunpack.c.l.b16 %v2325
      %v2377 = vunpack.c.l.b16 %v2329
      %v2378 = vunpack.c.l.b16 %v2332
      %v2379 = vunpack.c.l.b16 %v2336
      %v2380 = vunpack.c.l.b16 %v2339
      %v2381 = vunpack.c.l.b16 %v2343
      %v2382 = vunpack.c.l.b16 %v2346
      %v2383 = vunpack.c.l.b16 %v2350
      %v2384 = vunpack.c.l.b16 %v2353
      %v2385 = vunpack.c.l.b16 %v2357
      %v2386 = vunpack.c.l.b16 %v2360
      %v2387 = vunpack.c.l.b16 %v2364
      %v2388 = vunpack.c.l.b16 %v2367
      %v2389 = vunpack.c.l.b16 %v2371
      %v2390 = vunpack.c.l.b16 %v2374
      %v2391 = vpack.c.b16 %v2376, %v2375
      %v2392 = vpack.c.b16 %v2378, %v2377
      %v2393 = vpack.c.b16 %v2380, %v2379
      %v2394 = vpack.c.b16 %v2382, %v2381
      %v2395 = vpack.c.b16 %v2384, %v2383
      %v2396 = vpack.c.b16 %v2386, %v2385
      %v2397 = vpack.c.b16 %v2388, %v2387
      %v2398 = vpack.c.b16 %v2390, %v2389
      %2399 = vrot.lane.b32.xlu0 %v2391, 20
      %v2400 = vpop.permute.xlu0 %2399
      %2401 = vrot.lane.b32.xlu0 %v2392, 20
      %v2402 = vpop.permute.xlu0 %2401
      %2403 = vrot.lane.b32.xlu0 %v2393, 20
      %v2404 = vpop.permute.xlu0 %2403
      %2405 = vrot.lane.b32.xlu0 %v2394, 20
      %v2406 = vpop.permute.xlu0 %2405
      %2407 = vrot.lane.b32.xlu0 %v2395, 20
      %v2408 = vpop.permute.xlu0 %2407
      %2409 = vrot.lane.b32.xlu0 %v2396, 20
      %v2410 = vpop.permute.xlu0 %2409
      %2411 = vrot.lane.b32.xlu0 %v2397, 20
      %v2412 = vpop.permute.xlu0 %2411
      %2413 = vrot.lane.b32.xlu0 %v2398, 20
      %v2414 = vpop.permute.xlu0 %2413
      %vm2423 = vcmask 195744
      %2424 = vst.msk [vmem:[#allocation3] sm:$0xff] %vm2423, %v2400
      %2425 = vst.msk [vmem:[#allocation3 + $0x8] sm:$0xff] %vm2423, %v2402
      %2426 = vst.msk [vmem:[#allocation3 + $0x10] sm:$0xff] %vm2423, %v2404
      %2427 = vst.msk [vmem:[#allocation3 + $0x18] sm:$0xff] %vm2423, %v2406
      %2428 = vst.msk [vmem:[#allocation3 + $0x20] sm:$0xff] %vm2423, %v2408
      %2429 = vst.msk [vmem:[#allocation3 + $0x28] sm:$0xff] %vm2423, %v2410
      %2430 = vst.msk [vmem:[#allocation3 + $0x30] sm:$0xff] %vm2423, %v2412
      %2431 = vst.msk [vmem:[#allocation3 + $0x38] sm:$0xff] %vm2423, %v2414
      %s2432 = scalar_lea.vmem [#allocation2], 24
      %v2433 = vld [vmem:[%s2432] sm:$0xf]
      %v2434 = vld [vmem:[%s2432 + $0x4] sm:$0xf]
      %v2435 = vld [vmem:[%s2432 + $0xc] sm:$0xf]
      %v2436 = vld [vmem:[%s2432 + $0x10] sm:$0xf]
      %v2437 = vld [vmem:[%s2432 + $0x18] sm:$0xf]
      %v2438 = vld [vmem:[%s2432 + $0x1c] sm:$0xf]
      %v2439 = vld [vmem:[%s2432 + $0x24] sm:$0xf]
      %v2440 = vld [vmem:[%s2432 + $0x28] sm:$0xf]
      %v2441 = vld [vmem:[%s2432 + $0x30] sm:$0xf]
      %v2442 = vld [vmem:[%s2432 + $0x34] sm:$0xf]
      %v2443 = vld [vmem:[%s2432 + $0x3c] sm:$0xf]
      %v2444 = vld [vmem:[%s2432 + $0x40] sm:$0xf]
      %v2445 = vld [vmem:[%s2432 + $0x48] sm:$0xf]
      %v2446 = vld [vmem:[%s2432 + $0x4c] sm:$0xf]
      %v2447 = vld [vmem:[%s2432 + $0x54] sm:$0xf]
      %v2448 = vld [vmem:[%s2432 + $0x58] sm:$0xf]
      %v2465 = vunpack.c.l.b16 %v2433
      %v2466 = vunpack.c.l.b16 %v2434
      %v2467 = vunpack.c.l.b16 %v2435
      %v2468 = vunpack.c.l.b16 %v2436
      %v2469 = vunpack.c.l.b16 %v2437
      %v2470 = vunpack.c.l.b16 %v2438
      %v2471 = vunpack.c.l.b16 %v2439
      %v2472 = vunpack.c.l.b16 %v2440
      %v2473 = vunpack.c.l.b16 %v2441
      %v2474 = vunpack.c.l.b16 %v2442
      %v2475 = vunpack.c.l.b16 %v2443
      %v2476 = vunpack.c.l.b16 %v2444
      %v2477 = vunpack.c.l.b16 %v2445
      %v2478 = vunpack.c.l.b16 %v2446
      %v2479 = vunpack.c.l.b16 %v2447
      %v2480 = vunpack.c.l.b16 %v2448
      %v2481 = vpack.c.b16 %v2466, %v2465
      %v2482 = vpack.c.b16 %v2468, %v2467
      %v2483 = vpack.c.b16 %v2470, %v2469
      %v2484 = vpack.c.b16 %v2472, %v2471
      %v2485 = vpack.c.b16 %v2474, %v2473
      %v2486 = vpack.c.b16 %v2476, %v2475
      %v2487 = vpack.c.b16 %v2478, %v2477
      %v2488 = vpack.c.b16 %v2480, %v2479
      %2489 = vrot.lane.b32.xlu0 %v2481, 24
      %v2490 = vpop.permute.xlu0 %2489
      %2491 = vrot.lane.b32.xlu0 %v2482, 24
      %v2492 = vpop.permute.xlu0 %2491
      %2493 = vrot.lane.b32.xlu0 %v2483, 24
      %v2494 = vpop.permute.xlu0 %2493
      %2495 = vrot.lane.b32.xlu0 %v2484, 24
      %v2496 = vpop.permute.xlu0 %2495
      %2497 = vrot.lane.b32.xlu0 %v2485, 24
      %v2498 = vpop.permute.xlu0 %2497
      %2499 = vrot.lane.b32.xlu0 %v2486, 24
      %v2500 = vpop.permute.xlu0 %2499
      %2501 = vrot.lane.b32.xlu0 %v2487, 24
      %v2502 = vpop.permute.xlu0 %2501
      %2503 = vrot.lane.b32.xlu0 %v2488, 24
      %v2504 = vpop.permute.xlu0 %2503
      %vm2513 = vcmask 228544
      %2514 = vst.msk [vmem:[#allocation3] sm:$0xff] %vm2513, %v2490
      %2515 = vst.msk [vmem:[#allocation3 + $0x8] sm:$0xff] %vm2513, %v2492
      %2516 = vst.msk [vmem:[#allocation3 + $0x10] sm:$0xff] %vm2513, %v2494
      %2517 = vst.msk [vmem:[#allocation3 + $0x18] sm:$0xff] %vm2513, %v2496
      %2518 = vst.msk [vmem:[#allocation3 + $0x20] sm:$0xff] %vm2513, %v2498
      %2519 = vst.msk [vmem:[#allocation3 + $0x28] sm:$0xff] %vm2513, %v2500
      %2520 = vst.msk [vmem:[#allocation3 + $0x30] sm:$0xff] %vm2513, %v2502
      %2521 = vst.msk [vmem:[#allocation3 + $0x38] sm:$0xff] %vm2513, %v2504
      %v2522 = vld [vmem:[%s2432] sm:$0xf]
      %v2523 = vld [vmem:[%s2432 + $0x4] sm:$0xf]
      %v2524 = vld [vmem:[%s2432 + $0x8] sm:$0x1]
      %v2525 = vld [vmem:[%s2432 + $0xc] sm:$0xf]
      %v2526 = vld [vmem:[%s2432 + $0x10] sm:$0xf]
      %v2527 = vld [vmem:[%s2432 + $0x14] sm:$0x1]
      %v2528 = vld [vmem:[%s2432 + $0x18] sm:$0xf]
      %v2529 = vld [vmem:[%s2432 + $0x1c] sm:$0xf]
      %v2530 = vld [vmem:[%s2432 + $0x20] sm:$0x1]
      %v2531 = vld [vmem:[%s2432 + $0x24] sm:$0xf]
      %v2532 = vld [vmem:[%s2432 + $0x28] sm:$0xf]
      %v2533 = vld [vmem:[%s2432 + $0x2c] sm:$0x1]
      %v2534 = vld [vmem:[%s2432 + $0x30] sm:$0xf]
      %v2535 = vld [vmem:[%s2432 + $0x34] sm:$0xf]
      %v2536 = vld [vmem:[%s2432 + $0x38] sm:$0x1]
      %v2537 = vld [vmem:[%s2432 + $0x3c] sm:$0xf]
      %v2538 = vld [vmem:[%s2432 + $0x40] sm:$0xf]
      %v2539 = vld [vmem:[%s2432 + $0x44] sm:$0x1]
      %v2540 = vld [vmem:[%s2432 + $0x48] sm:$0xf]
      %v2541 = vld [vmem:[%s2432 + $0x4c] sm:$0xf]
      %v2542 = vld [vmem:[%s2432 + $0x50] sm:$0x1]
      %v2543 = vld [vmem:[%s2432 + $0x54] sm:$0xf]
      %v2544 = vld [vmem:[%s2432 + $0x58] sm:$0xf]
      %v2545 = vld [vmem:[%s2432 + $0x5c] sm:$0x1]
      %v2547 = vshrl.u32 %v2522, 16
      %v2549 = vrot.slane %v2547, 4
      %v2550 = vshll.u32 %v2522, 16
      %v2552 = vrot.slane %v2550, 5
      %v2553 = vor.u32 %v2549, %v2552
      %v2554 = vrot.slane %v2553, 4
      %v2556 = vshll.u32 %v2523, 16
      %v2558 = vrot.slane %v2556, 5
      %v2559 = vsel %vm1494, %v2554, %v2558
      %v2560 = vshrl.u32 %v2523, 16
      %v2562 = vrot.slane %v2560, 4
      %v2563 = vor.u32 %v2562, %v2558
      %v2564 = vrot.slane %v2563, 4
      %v2566 = vshll.u32 %v2524, 16
      %v2568 = vrot.slane %v2566, 5
      %v2569 = vsel %vm1494, %v2564, %v2568
      %v2571 = vshrl.u32 %v2525, 16
      %v2573 = vrot.slane %v2571, 4
      %v2574 = vshll.u32 %v2525, 16
      %v2576 = vrot.slane %v2574, 5
      %v2577 = vor.u32 %v2573, %v2576
      %v2578 = vrot.slane %v2577, 4
      %v2580 = vshll.u32 %v2526, 16
      %v2582 = vrot.slane %v2580, 5
      %v2583 = vsel %vm1494, %v2578, %v2582
      %v2584 = vshrl.u32 %v2526, 16
      %v2586 = vrot.slane %v2584, 4
      %v2587 = vor.u32 %v2586, %v2582
      %v2588 = vrot.slane %v2587, 4
      %v2590 = vshll.u32 %v2527, 16
      %v2592 = vrot.slane %v2590, 5
      %v2593 = vsel %vm1494, %v2588, %v2592
      %v2595 = vshrl.u32 %v2528, 16
      %v2597 = vrot.slane %v2595, 4
      %v2598 = vshll.u32 %v2528, 16
      %v2600 = vrot.slane %v2598, 5
      %v2601 = vor.u32 %v2597, %v2600
      %v2602 = vrot.slane %v2601, 4
      %v2604 = vshll.u32 %v2529, 16
      %v2606 = vrot.slane %v2604, 5
      %v2607 = vsel %vm1494, %v2602, %v2606
      %v2608 = vshrl.u32 %v2529, 16
      %v2610 = vrot.slane %v2608, 4
      %v2611 = vor.u32 %v2610, %v2606
      %v2612 = vrot.slane %v2611, 4
      %v2614 = vshll.u32 %v2530, 16
      %v2616 = vrot.slane %v2614, 5
      %v2617 = vsel %vm1494, %v2612, %v2616
      %v2619 = vshrl.u32 %v2531, 16
      %v2621 = vrot.slane %v2619, 4
      %v2622 = vshll.u32 %v2531, 16
      %v2624 = vrot.slane %v2622, 5
      %v2625 = vor.u32 %v2621, %v2624
      %v2626 = vrot.slane %v2625, 4
      %v2628 = vshll.u32 %v2532, 16
      %v2630 = vrot.slane %v2628, 5
      %v2631 = vsel %vm1494, %v2626, %v2630
      %v2632 = vshrl.u32 %v2532, 16
      %v2634 = vrot.slane %v2632, 4
      %v2635 = vor.u32 %v2634, %v2630
      %v2636 = vrot.slane %v2635, 4
      %v2638 = vshll.u32 %v2533, 16
      %v2640 = vrot.slane %v2638, 5
      %v2641 = vsel %vm1494, %v2636, %v2640
      %v2643 = vshrl.u32 %v2534, 16
      %v2645 = vrot.slane %v2643, 4
      %v2646 = vshll.u32 %v2534, 16
      %v2648 = vrot.slane %v2646, 5
      %v2649 = vor.u32 %v2645, %v2648
      %v2650 = vrot.slane %v2649, 4
      %v2652 = vshll.u32 %v2535, 16
      %v2654 = vrot.slane %v2652, 5
      %v2655 = vsel %vm1494, %v2650, %v2654
      %v2656 = vshrl.u32 %v2535, 16
      %v2658 = vrot.slane %v2656, 4
      %v2659 = vor.u32 %v2658, %v2654
      %v2660 = vrot.slane %v2659, 4
      %v2662 = vshll.u32 %v2536, 16
      %v2664 = vrot.slane %v2662, 5
      %v2665 = vsel %vm1494, %v2660, %v2664
      %v2667 = vshrl.u32 %v2537, 16
      %v2669 = vrot.slane %v2667, 4
      %v2670 = vshll.u32 %v2537, 16
      %v2672 = vrot.slane %v2670, 5
      %v2673 = vor.u32 %v2669, %v2672
      %v2674 = vrot.slane %v2673, 4
      %v2676 = vshll.u32 %v2538, 16
      %v2678 = vrot.slane %v2676, 5
      %v2679 = vsel %vm1494, %v2674, %v2678
      %v2680 = vshrl.u32 %v2538, 16
      %v2682 = vrot.slane %v2680, 4
      %v2683 = vor.u32 %v2682, %v2678
      %v2684 = vrot.slane %v2683, 4
      %v2686 = vshll.u32 %v2539, 16
      %v2688 = vrot.slane %v2686, 5
      %v2689 = vsel %vm1494, %v2684, %v2688
      %v2691 = vshrl.u32 %v2540, 16
      %v2693 = vrot.slane %v2691, 4
      %v2694 = vshll.u32 %v2540, 16
      %v2696 = vrot.slane %v2694, 5
      %v2697 = vor.u32 %v2693, %v2696
      %v2698 = vrot.slane %v2697, 4
      %v2700 = vshll.u32 %v2541, 16
      %v2702 = vrot.slane %v2700, 5
      %v2703 = vsel %vm1494, %v2698, %v2702
      %v2704 = vshrl.u32 %v2541, 16
      %v2706 = vrot.slane %v2704, 4
      %v2707 = vor.u32 %v2706, %v2702
      %v2708 = vrot.slane %v2707, 4
      %v2710 = vshll.u32 %v2542, 16
      %v2712 = vrot.slane %v2710, 5
      %v2713 = vsel %vm1494, %v2708, %v2712
      %v2715 = vshrl.u32 %v2543, 16
      %v2717 = vrot.slane %v2715, 4
      %v2718 = vshll.u32 %v2543, 16
      %v2720 = vrot.slane %v2718, 5
      %v2721 = vor.u32 %v2717, %v2720
      %v2722 = vrot.slane %v2721, 4
      %v2724 = vshll.u32 %v2544, 16
      %v2726 = vrot.slane %v2724, 5
      %v2727 = vsel %vm1494, %v2722, %v2726
      %v2728 = vshrl.u32 %v2544, 16
      %v2730 = vrot.slane %v2728, 4
      %v2731 = vor.u32 %v2730, %v2726
      %v2732 = vrot.slane %v2731, 4
      %v2734 = vshll.u32 %v2545, 16
      %v2736 = vrot.slane %v2734, 5
      %v2737 = vsel %vm1494, %v2732, %v2736
      %v2738 = vunpack.c.l.b16 %v2559
      %v2739 = vunpack.c.l.b16 %v2569
      %v2740 = vunpack.c.l.b16 %v2583
      %v2741 = vunpack.c.l.b16 %v2593
      %v2742 = vunpack.c.l.b16 %v2607
      %v2743 = vunpack.c.l.b16 %v2617
      %v2744 = vunpack.c.l.b16 %v2631
      %v2745 = vunpack.c.l.b16 %v2641
      %v2746 = vunpack.c.l.b16 %v2655
      %v2747 = vunpack.c.l.b16 %v2665
      %v2748 = vunpack.c.l.b16 %v2679
      %v2749 = vunpack.c.l.b16 %v2689
      %v2750 = vunpack.c.l.b16 %v2703
      %v2751 = vunpack.c.l.b16 %v2713
      %v2752 = vunpack.c.l.b16 %v2727
      %v2753 = vunpack.c.l.b16 %v2737
      %v2754 = vpack.c.b16 %v2739, %v2738
      %v2755 = vpack.c.b16 %v2741, %v2740
      %v2756 = vpack.c.b16 %v2743, %v2742
      %v2757 = vpack.c.b16 %v2745, %v2744
      %v2758 = vpack.c.b16 %v2747, %v2746
      %v2759 = vpack.c.b16 %v2749, %v2748
      %v2760 = vpack.c.b16 %v2751, %v2750
      %v2761 = vpack.c.b16 %v2753, %v2752
      %2762 = vrot.lane.b32.xlu0 %v2754, 28
      %v2763 = vpop.permute.xlu0 %2762
      %2764 = vrot.lane.b32.xlu0 %v2755, 28
      %v2765 = vpop.permute.xlu0 %2764
      %2766 = vrot.lane.b32.xlu0 %v2756, 28
      %v2767 = vpop.permute.xlu0 %2766
      %2768 = vrot.lane.b32.xlu0 %v2757, 28
      %v2769 = vpop.permute.xlu0 %2768
      %2770 = vrot.lane.b32.xlu0 %v2758, 28
      %v2771 = vpop.permute.xlu0 %2770
      %2772 = vrot.lane.b32.xlu0 %v2759, 28
      %v2773 = vpop.permute.xlu0 %2772
      %2774 = vrot.lane.b32.xlu0 %v2760, 28
      %v2775 = vpop.permute.xlu0 %2774
      %2776 = vrot.lane.b32.xlu0 %v2761, 28
      %v2777 = vpop.permute.xlu0 %2776
      %vm2786 = vcmask 261344
      %2787 = vst.msk [vmem:[#allocation3] sm:$0xff] %vm2786, %v2763
      %2788 = vst.msk [vmem:[#allocation3 + $0x8] sm:$0xff] %vm2786, %v2765
      %2789 = vst.msk [vmem:[#allocation3 + $0x10] sm:$0xff] %vm2786, %v2767
      %2790 = vst.msk [vmem:[#allocation3 + $0x18] sm:$0xff] %vm2786, %v2769
      %2791 = vst.msk [vmem:[#allocation3 + $0x20] sm:$0xff] %vm2786, %v2771
      %2792 = vst.msk [vmem:[#allocation3 + $0x28] sm:$0xff] %vm2786, %v2773
      %2793 = vst.msk [vmem:[#allocation3 + $0x30] sm:$0xff] %vm2786, %v2775
      %2794 = vst.msk [vmem:[#allocation3 + $0x38] sm:$0xff] %vm2786, %v2777
      %v2795 = vld [vmem:[%s2432] sm:$0xe]
      %v2796 = vld [vmem:[%s2432 + $0x4] sm:$0xf]
      %v2797 = vld [vmem:[%s2432 + $0x8] sm:$0x1]
      %v2798 = vld [vmem:[%s2432 + $0xc] sm:$0xe]
      %v2799 = vld [vmem:[%s2432 + $0x10] sm:$0xf]
      %v2800 = vld [vmem:[%s2432 + $0x14] sm:$0x1]
      %v2801 = vld [vmem:[%s2432 + $0x18] sm:$0xe]
      %v2802 = vld [vmem:[%s2432 + $0x1c] sm:$0xf]
      %v2803 = vld [vmem:[%s2432 + $0x20] sm:$0x1]
      %v2804 = vld [vmem:[%s2432 + $0x24] sm:$0xe]
      %v2805 = vld [vmem:[%s2432 + $0x28] sm:$0xf]
      %v2806 = vld [vmem:[%s2432 + $0x2c] sm:$0x1]
      %v2807 = vld [vmem:[%s2432 + $0x30] sm:$0xe]
      %v2808 = vld [vmem:[%s2432 + $0x34] sm:$0xf]
      %v2809 = vld [vmem:[%s2432 + $0x38] sm:$0x1]
      %v2810 = vld [vmem:[%s2432 + $0x3c] sm:$0xe]
      %v2811 = vld [vmem:[%s2432 + $0x40] sm:$0xf]
      %v2812 = vld [vmem:[%s2432 + $0x44] sm:$0x1]
      %v2813 = vld [vmem:[%s2432 + $0x48] sm:$0xe]
      %v2814 = vld [vmem:[%s2432 + $0x4c] sm:$0xf]
      %v2815 = vld [vmem:[%s2432 + $0x50] sm:$0x1]
      %v2816 = vld [vmem:[%s2432 + $0x54] sm:$0xe]
      %v2817 = vld [vmem:[%s2432 + $0x58] sm:$0xf]
      %v2818 = vld [vmem:[%s2432 + $0x5c] sm:$0x1]
      %v2843 = vrot.slane %v2795, 5
      %v2844 = vrot.slane %v2843, 4
      %v2845 = vrot.slane %v2796, 5
      %v2846 = vsel %vm1794, %v2844, %v2845
      %v2847 = vrot.slane %v2845, 4
      %v2848 = vrot.slane %v2797, 5
      %v2849 = vsel %vm1794, %v2847, %v2848
      %v2850 = vrot.slane %v2798, 5
      %v2851 = vrot.slane %v2850, 4
      %v2852 = vrot.slane %v2799, 5
      %v2853 = vsel %vm1794, %v2851, %v2852
      %v2854 = vrot.slane %v2852, 4
      %v2855 = vrot.slane %v2800, 5
      %v2856 = vsel %vm1794, %v2854, %v2855
      %v2857 = vrot.slane %v2801, 5
      %v2858 = vrot.slane %v2857, 4
      %v2859 = vrot.slane %v2802, 5
      %v2860 = vsel %vm1794, %v2858, %v2859
      %v2861 = vrot.slane %v2859, 4
      %v2862 = vrot.slane %v2803, 5
      %v2863 = vsel %vm1794, %v2861, %v2862
      %v2864 = vrot.slane %v2804, 5
      %v2865 = vrot.slane %v2864, 4
      %v2866 = vrot.slane %v2805, 5
      %v2867 = vsel %vm1794, %v2865, %v2866
      %v2868 = vrot.slane %v2866, 4
      %v2869 = vrot.slane %v2806, 5
      %v2870 = vsel %vm1794, %v2868, %v2869
      %v2871 = vrot.slane %v2807, 5
      %v2872 = vrot.slane %v2871, 4
      %v2873 = vrot.slane %v2808, 5
      %v2874 = vsel %vm1794, %v2872, %v2873
      %v2875 = vrot.slane %v2873, 4
      %v2876 = vrot.slane %v2809, 5
      %v2877 = vsel %vm1794, %v2875, %v2876
      %v2878 = vrot.slane %v2810, 5
      %v2879 = vrot.slane %v2878, 4
      %v2880 = vrot.slane %v2811, 5
      %v2881 = vsel %vm1794, %v2879, %v2880
      %v2882 = vrot.slane %v2880, 4
      %v2883 = vrot.slane %v2812, 5
      %v2884 = vsel %vm1794, %v2882, %v2883
      %v2885 = vrot.slane %v2813, 5
      %v2886 = vrot.slane %v2885, 4
      %v2887 = vrot.slane %v2814, 5
      %v2888 = vsel %vm1794, %v2886, %v2887
      %v2889 = vrot.slane %v2887, 4
      %v2890 = vrot.slane %v2815, 5
      %v2891 = vsel %vm1794, %v2889, %v2890
      %v2892 = vrot.slane %v2816, 5
      %v2893 = vrot.slane %v2892, 4
      %v2894 = vrot.slane %v2817, 5
      %v2895 = vsel %vm1794, %v2893, %v2894
      %v2896 = vrot.slane %v2894, 4
      %v2897 = vrot.slane %v2818, 5
      %v2898 = vsel %vm1794, %v2896, %v2897
      %v2899 = vunpack.c.l.b16 %v2846
      %v2900 = vunpack.c.l.b16 %v2849
      %v2901 = vunpack.c.l.b16 %v2853
      %v2902 = vunpack.c.l.b16 %v2856
      %v2903 = vunpack.c.l.b16 %v2860
      %v2904 = vunpack.c.l.b16 %v2863
      %v2905 = vunpack.c.l.b16 %v2867
      %v2906 = vunpack.c.l.b16 %v2870
      %v2907 = vunpack.c.l.b16 %v2874
      %v2908 = vunpack.c.l.b16 %v2877
      %v2909 = vunpack.c.l.b16 %v2881
      %v2910 = vunpack.c.l.b16 %v2884
      %v2911 = vunpack.c.l.b16 %v2888
      %v2912 = vunpack.c.l.b16 %v2891
      %v2913 = vunpack.c.l.b16 %v2895
      %v2914 = vunpack.c.l.b16 %v2898
      %v2915 = vpack.c.b16 %v2900, %v2899
      %v2916 = vpack.c.b16 %v2902, %v2901
      %v2917 = vpack.c.b16 %v2904, %v2903
      %v2918 = vpack.c.b16 %v2906, %v2905
      %v2919 = vpack.c.b16 %v2908, %v2907
      %v2920 = vpack.c.b16 %v2910, %v2909
      %v2921 = vpack.c.b16 %v2912, %v2911
      %v2922 = vpack.c.b16 %v2914, %v2913
      %2923 = vrot.lane.b32.xlu0 %v2915, 32
      %v2924 = vpop.permute.xlu0 %2923
      %2925 = vrot.lane.b32.xlu0 %v2916, 32
      %v2926 = vpop.permute.xlu0 %2925
      %2927 = vrot.lane.b32.xlu0 %v2917, 32
      %v2928 = vpop.permute.xlu0 %2927
      %2929 = vrot.lane.b32.xlu0 %v2918, 32
      %v2930 = vpop.permute.xlu0 %2929
      %2931 = vrot.lane.b32.xlu0 %v2919, 32
      %v2932 = vpop.permute.xlu0 %2931
      %2933 = vrot.lane.b32.xlu0 %v2920, 32
      %v2934 = vpop.permute.xlu0 %2933
      %2935 = vrot.lane.b32.xlu0 %v2921, 32
      %v2936 = vpop.permute.xlu0 %2935
      %2937 = vrot.lane.b32.xlu0 %v2922, 32
      %v2938 = vpop.permute.xlu0 %2937
      %vm2947 = vcmask 294144
      %2948 = vst.msk [vmem:[#allocation3] sm:$0xff] %vm2947, %v2924
      %2949 = vst.msk [vmem:[#allocation3 + $0x8] sm:$0xff] %vm2947, %v2926
      %2950 = vst.msk [vmem:[#allocation3 + $0x10] sm:$0xff] %vm2947, %v2928
      %2951 = vst.msk [vmem:[#allocation3 + $0x18] sm:$0xff] %vm2947, %v2930
      %2952 = vst.msk [vmem:[#allocation3 + $0x20] sm:$0xff] %vm2947, %v2932
      %2953 = vst.msk [vmem:[#allocation3 + $0x28] sm:$0xff] %vm2947, %v2934
      %2954 = vst.msk [vmem:[#allocation3 + $0x30] sm:$0xff] %vm2947, %v2936
      %2955 = vst.msk [vmem:[#allocation3 + $0x38] sm:$0xff] %vm2947, %v2938
      %v2956 = vld [vmem:[#allocation3] sm:$0xff]
      %v2957 = vld [vmem:[#allocation3 + $0x8] sm:$0xff]
      %v2958 = vld [vmem:[#allocation3 + $0x10] sm:$0xff]
      %v2959 = vld [vmem:[#allocation3 + $0x18] sm:$0xff]
      %v2960 = vld [vmem:[#allocation3 + $0x20] sm:$0xff]
      %v2961 = vld [vmem:[#allocation3 + $0x28] sm:$0xff]
      %v2962 = vld [vmem:[#allocation3 + $0x30] sm:$0xff]
      %v2963 = vld [vmem:[#allocation3 + $0x38] sm:$0xff]
      %v2964 = vld [vmem:[%s7] sm:$0xf]
      %v2965 = vld [vmem:[%s7 + $0x4] sm:$0xf]
      %v2966 = vld [vmem:[%s7 + $0x8] sm:$0xf]
      %v2967 = vld [vmem:[%s7 + $0xc] sm:$0xf]
      %v2968 = vld [vmem:[%s7 + $0x10] sm:$0x3]
      %v2969 = vld [vmem:[%s8] sm:$0x1]
      %v2971 = vlaneseq
      %v2972 = vshrl.u32 %v2971, 7
      %v2973 = vsub.s32 0, %v2972
      %v2974 = vrot.slane %v2969, %v2973
      %v2981 = vunpack.c.l.b16 %v2964
      %v2982 = vunpack.c.l.b16 %v2965
      %v2983 = vunpack.c.l.b16 %v2966
      %v2984 = vunpack.c.l.b16 %v2967
      %v2985 = vunpack.c.l.b16 %v2968
      %v2986 = vpack.c.b16 %v2982, %v2981
      %v2987 = vpack.c.b16 %v2984, %v2983
      %v2988 = vpack.c.b16 %v2985, %v2985
      %vm2991 = vcmask 293888
      %v2993 = vsel %vm2991, %v2956, 0
      %v2996 = vsel %vm2991, %v2957, 0
      %v2999 = vsel %vm2991, %v2958, 0
      %v3002 = vsel %vm2991, %v2959, 0
      %v3005 = vsel %vm2991, %v2960, 0
      %v3008 = vsel %vm2991, %v2961, 0
      %v3011 = vsel %vm2991, %v2962, 0
      %v3014 = vsel %vm2991, %v2963, 0
      %vm3016 = vcmask 1041408
      %v3018 = vsel %vm3016, %v2988, 0
      %3020 = vmatprep.subr.bf16.mxu0 0
      %3021 = vmatpush1.bf16.msra.mxu0 %v2986
      %3022 = vmatprep.subr.bf16.mxu0 0
      %3023 = vmatpush1.bf16.msra.mxu0 %v2987
      %3024 = vmatprep.subr.bf16.mxu0 0
      %3025 = vmatpush1.bf16.msra.mxu0 %v3018
      %3026 = vmatprep.subr.bf16.mxu0 0
      %3027 = vmatpush1.bf16.msra.mxu0 0
      %3028 = vmatprep.subr.bf16.mxu0 0
      %3029 = vmatpush1.bf16.msra.mxu0 0
      %3030 = vmatprep.subr.bf16.mxu0 0
      %3031 = vmatpush1.bf16.msra.mxu0 0
      %3032 = vmatprep.subr.bf16.mxu0 0
      %3033 = vmatpush1.bf16.msra.mxu0 0
      %3034 = vmatprep.subr.bf16.mxu0 0
      %3035 = vmatpush1.bf16.msra.mxu0 0
      %3036 = vmatprep.subr.bf16.mxu0 0
      %3037 = vmatpush1.bf16.msra.mxu0 0
      %3038 = vmatprep.subr.bf16.mxu0 0
      %3039 = vmatpush1.bf16.msra.mxu0 0
      %3040 = vmatprep.subr.bf16.mxu0 0
      %3041 = vmatpush1.bf16.msra.mxu0 0
      %3042 = vmatprep.subr.bf16.mxu0 0
      %3043 = vmatpush1.bf16.msra.mxu0 0
      %3044 = vmatprep.subr.bf16.mxu0 0
      %3045 = vmatpush1.bf16.msra.mxu0 0
      %3046 = vmatprep.subr.bf16.mxu0 0
      %3047 = vmatpush1.bf16.msra.mxu0 0
      %3048 = vmatprep.subr.bf16.mxu0 0
      %3049 = vmatpush1.bf16.msra.mxu0 0
      %3050 = vmatprep.subr.bf16.mxu0 0
      %3051 = vmatpush1.bf16.msra.mxu0 0
      %3052 = vmatprep.mubr.bf16.mxu0 0
      %3053 = vmatmul.mubr.bf16.gmra.mrb[0].mxu0 %v2993
      %v3054 = vpop.f32.mrb[0].mxu0
      %v3055 = vadd.f32 %v2974, %v3054
      %v3056 = vpop.f32.mrb[0].mxu0
      %v3057 = vpop.f32.mrb[0].mxu0
      %v3058 = vadd.f32 %v2974, %v3057
      %v3059 = vpop.f32.mrb[0].mxu0
      %3060 = vmatprep.mubr.bf16.mxu0 0
      %3061 = vmatmul.mubr.bf16.gmra.mrb[0].mxu0 %v2996
      %v3062 = vpop.f32.mrb[0].mxu0
      %v3063 = vadd.f32 %v2974, %v3062
      %v3064 = vpop.f32.mrb[0].mxu0
      %v3065 = vpop.f32.mrb[0].mxu0
      %v3066 = vadd.f32 %v2974, %v3065
      %v3067 = vpop.f32.mrb[0].mxu0
      %3068 = vmatprep.mubr.bf16.mxu0 0
      %3069 = vmatmul.mubr.bf16.gmra.mrb[0].mxu0 %v2999
      %v3070 = vpop.f32.mrb[0].mxu0
      %v3071 = vadd.f32 %v2974, %v3070
      %v3072 = vpop.f32.mrb[0].mxu0
      %v3073 = vpop.f32.mrb[0].mxu0
      %v3074 = vadd.f32 %v2974, %v3073
      %v3075 = vpop.f32.mrb[0].mxu0
      %3076 = vmatprep.mubr.bf16.mxu0 0
      %3077 = vmatmul.mubr.bf16.gmra.mrb[0].mxu0 %v3002
      %v3078 = vpop.f32.mrb[0].mxu0
      %v3079 = vadd.f32 %v2974, %v3078
      %v3080 = vpop.f32.mrb[0].mxu0
      %v3081 = vpop.f32.mrb[0].mxu0
      %v3082 = vadd.f32 %v2974, %v3081
      %v3083 = vpop.f32.mrb[0].mxu0
      %3084 = vmatprep.mubr.bf16.mxu0 0
      %3085 = vmatmul.mubr.bf16.gmra.mrb[0].mxu0 %v3005
      %v3086 = vpop.f32.mrb[0].mxu0
      %v3087 = vadd.f32 %v2974, %v3086
      %v3088 = vpop.f32.mrb[0].mxu0
      %v3089 = vpop.f32.mrb[0].mxu0
      %v3090 = vadd.f32 %v2974, %v3089
      %v3091 = vpop.f32.mrb[0].mxu0
      %3092 = vmatprep.mubr.bf16.mxu0 0
      %3093 = vmatmul.mubr.bf16.gmra.mrb[0].mxu0 %v3008
      %v3094 = vpop.f32.mrb[0].mxu0
      %v3095 = vadd.f32 %v2974, %v3094
      %v3096 = vpop.f32.mrb[0].mxu0
      %v3097 = vpop.f32.mrb[0].mxu0
      %v3098 = vadd.f32 %v2974, %v3097
      %v3099 = vpop.f32.mrb[0].mxu0
      %3100 = vmatprep.mubr.bf16.mxu0 0
      %3101 = vmatmul.mubr.bf16.gmra.mrb[0].mxu0 %v3011
      %v3102 = vpop.f32.mrb[0].mxu0
      %v3103 = vadd.f32 %v2974, %v3102
      %v3104 = vpop.f32.mrb[0].mxu0
      %v3105 = vpop.f32.mrb[0].mxu0
      %v3106 = vadd.f32 %v2974, %v3105
      %v3107 = vpop.f32.mrb[0].mxu0
      %3108 = vmatprep.mubr.bf16.mxu0 0
      %3109 = vmatmul.mubr.bf16.gmra.mrb[0].mxu0 %v3014
      %v3110 = vpop.f32.mrb[0].mxu0
      %v3111 = vadd.f32 %v2974, %v3110
      %v3112 = vpop.f32.mrb[0].mxu0
      %v3113 = vpop.f32.mrb[0].mxu0
      %v3114 = vadd.f32 %v2974, %v3113
      %v3115 = vpop.f32.mrb[0].mxu0
      %3116 = vdwg.mxu0
      %v3117 = vmax.f32 %v3055, 0.0
      %v3118 = vmax.f32 %v3058, 0.0
      %v3119 = vmax.f32 %v3063, 0.0
      %v3120 = vmax.f32 %v3066, 0.0
      %v3121 = vmax.f32 %v3071, 0.0
      %v3122 = vmax.f32 %v3074, 0.0
      %v3123 = vmax.f32 %v3079, 0.0
      %v3124 = vmax.f32 %v3082, 0.0
      %v3125 = vmax.f32 %v3087, 0.0
      %v3126 = vmax.f32 %v3090, 0.0
      %v3127 = vmax.f32 %v3095, 0.0
      %v3128 = vmax.f32 %v3098, 0.0
      %v3129 = vmax.f32 %v3103, 0.0
      %v3130 = vmax.f32 %v3106, 0.0
      %v3131 = vmax.f32 %v3111, 0.0
      %v3132 = vmax.f32 %v3114, 0.0
      %v3133 = vpack.c.bf16 %v3118, %v3117
      %v3134 = vpack.c.bf16 %v3120, %v3119
      %v3135 = vpack.c.bf16 %v3122, %v3121
      %v3136 = vpack.c.bf16 %v3124, %v3123
      %v3137 = vpack.c.bf16 %v3126, %v3125
      %v3138 = vpack.c.bf16 %v3128, %v3127
      %v3139 = vpack.c.bf16 %v3130, %v3129
      %v3140 = vpack.c.bf16 %v3132, %v3131
      %v3141 = vld [vmem:[%s9] sm:$0x3]
      %v3143 = vsel %vm1459, %v3133, 0
      %v3146 = vsel %vm1459, %v3134, 0
      %v3149 = vsel %vm1459, %v3135, 0
      %v3152 = vsel %vm1459, %v3136, 0
      %v3155 = vsel %vm1459, %v3137, 0
      %v3158 = vsel %vm1459, %v3138, 0
      %v3161 = vsel %vm1459, %v3139, 0
      %v3164 = vsel %vm1459, %v3140, 0
      %v3167 = vsel %vm3016, %v3141, 0
      %3169 = vmatprep.subr.bf16.mxu0 0
      %3170 = vmatpush1.bf16.msra.mxu0 %v3167
      %3171 = vmatprep.subr.bf16.mxu0 0
      %3172 = vmatpush1.bf16.msra.mxu0 0
      %3173 = vmatprep.subr.bf16.mxu0 0
      %3174 = vmatpush1.bf16.msra.mxu0 0
      %3175 = vmatprep.subr.bf16.mxu0 0
      %3176 = vmatpush1.bf16.msra.mxu0 0
      %3177 = vmatprep.subr.bf16.mxu0 0
      %3178 = vmatpush1.bf16.msra.mxu0 0
      %3179 = vmatprep.subr.bf16.mxu0 0
      %3180 = vmatpush1.bf16.msra.mxu0 0
      %3181 = vmatprep.subr.bf16.mxu0 0
      %3182 = vmatpush1.bf16.msra.mxu0 0
      %3183 = vmatprep.subr.bf16.mxu0 0
      %3184 = vmatpush1.bf16.msra.mxu0 0
      %3185 = vmatprep.subr.bf16.mxu0 0
      %3186 = vmatpush1.bf16.msra.mxu0 0
      %3187 = vmatprep.subr.bf16.mxu0 0
      %3188 = vmatpush1.bf16.msra.mxu0 0
      %3189 = vmatprep.subr.bf16.mxu0 0
      %3190 = vmatpush1.bf16.msra.mxu0 0
      %3191 = vmatprep.subr.bf16.mxu0 0
      %3192 = vmatpush1.bf16.msra.mxu0 0
      %3193 = vmatprep.subr.bf16.mxu0 0
      %3194 = vmatpush1.bf16.msra.mxu0 0
      %3195 = vmatprep.subr.bf16.mxu0 0
      %3196 = vmatpush1.bf16.msra.mxu0 0
      %3197 = vmatprep.subr.bf16.mxu0 0
      %3198 = vmatpush1.bf16.msra.mxu0 0
      %3199 = vmatprep.subr.bf16.mxu0 0
      %3200 = vmatpush1.bf16.msra.mxu0 0
      %3201 = vmatprep.mubr.bf16.mxu0 0
      %3202 = vmatmul.mubr.bf16.gmra.mrb[0].mxu0 %v3143
      %v3203 = vpop.f32.mrb[0].mxu0
      %v3204 = vadd.f32 0.0, %v3203
      %v3205 = vpop.f32.mrb[0].mxu0
      %v3206 = vpop.f32.mrb[0].mxu0
      %v3207 = vadd.f32 0.0, %v3206
      %v3208 = vpop.f32.mrb[0].mxu0
      %3209 = vmatprep.mubr.bf16.mxu0 0
      %3210 = vmatmul.mubr.bf16.gmra.mrb[0].mxu0 %v3146
      %v3211 = vpop.f32.mrb[0].mxu0
      %v3212 = vadd.f32 0.0, %v3211
      %v3213 = vpop.f32.mrb[0].mxu0
      %v3214 = vpop.f32.mrb[0].mxu0
      %v3215 = vadd.f32 0.0, %v3214
      %v3216 = vpop.f32.mrb[0].mxu0
      %3217 = vmatprep.mubr.bf16.mxu0 0
      %3218 = vmatmul.mubr.bf16.gmra.mrb[0].mxu0 %v3149
      %v3219 = vpop.f32.mrb[0].mxu0
      %v3220 = vadd.f32 0.0, %v3219
      %v3221 = vpop.f32.mrb[0].mxu0
      %v3222 = vpop.f32.mrb[0].mxu0
      %v3223 = vadd.f32 0.0, %v3222
      %v3224 = vpop.f32.mrb[0].mxu0
      %3225 = vmatprep.mubr.bf16.mxu0 0
      %3226 = vmatmul.mubr.bf16.gmra.mrb[0].mxu0 %v3152
      %v3227 = vpop.f32.mrb[0].mxu0
      %v3228 = vadd.f32 0.0, %v3227
      %v3229 = vpop.f32.mrb[0].mxu0
      %v3230 = vpop.f32.mrb[0].mxu0
      %v3231 = vadd.f32 0.0, %v3230
      %v3232 = vpop.f32.mrb[0].mxu0
      %3233 = vmatprep.mubr.bf16.mxu0 0
      %3234 = vmatmul.mubr.bf16.gmra.mrb[0].mxu0 %v3155
      %v3235 = vpop.f32.mrb[0].mxu0
      %v3236 = vadd.f32 0.0, %v3235
      %v3237 = vpop.f32.mrb[0].mxu0
      %v3238 = vpop.f32.mrb[0].mxu0
      %v3239 = vadd.f32 0.0, %v3238
      %v3240 = vpop.f32.mrb[0].mxu0
      %3241 = vmatprep.mubr.bf16.mxu0 0
      %3242 = vmatmul.mubr.bf16.gmra.mrb[0].mxu0 %v3158
      %v3243 = vpop.f32.mrb[0].mxu0
      %v3244 = vadd.f32 0.0, %v3243
      %v3245 = vpop.f32.mrb[0].mxu0
      %v3246 = vpop.f32.mrb[0].mxu0
      %v3247 = vadd.f32 0.0, %v3246
      %v3248 = vpop.f32.mrb[0].mxu0
      %3249 = vmatprep.mubr.bf16.mxu0 0
      %3250 = vmatmul.mubr.bf16.gmra.mrb[0].mxu0 %v3161
      %v3251 = vpop.f32.mrb[0].mxu0
      %v3252 = vadd.f32 0.0, %v3251
      %v3253 = vpop.f32.mrb[0].mxu0
      %v3254 = vpop.f32.mrb[0].mxu0
      %v3255 = vadd.f32 0.0, %v3254
      %v3256 = vpop.f32.mrb[0].mxu0
      %3257 = vmatprep.mubr.bf16.mxu0 0
      %3258 = vmatmul.mubr.bf16.gmra.mrb[0].mxu0 %v3164
      %v3259 = vpop.f32.mrb[0].mxu0
      %v3260 = vadd.f32 0.0, %v3259
      %v3261 = vpop.f32.mrb[0].mxu0
      %v3262 = vpop.f32.mrb[0].mxu0
      %v3263 = vadd.f32 0.0, %v3262
      %v3264 = vpop.f32.mrb[0].mxu0
      %3265 = vdwg.mxu0
      %v3266 = vld [vmem:[%s551] sm:$0xff]
      %v3267 = vld [vmem:[%s551 + $0x8] sm:$0xff]
      %v3268 = vld [vmem:[%s551 + $0x10] sm:$0xff]
      %v3269 = vld [vmem:[%s551 + $0x18] sm:$0xff]
      %v3270 = vld [vmem:[%s551 + $0x20] sm:$0xff]
      %v3271 = vld [vmem:[%s551 + $0x28] sm:$0xff]
      %v3272 = vld [vmem:[%s551 + $0x30] sm:$0xff]
      %v3273 = vld [vmem:[%s551 + $0x38] sm:$0xff]
      %v3274 = vld [vmem:[%s551 + $0x40] sm:$0xff]
      %v3275 = vld [vmem:[%s551 + $0x48] sm:$0xff]
      %v3276 = vld [vmem:[%s551 + $0x50] sm:$0xff]
      %v3277 = vld [vmem:[%s551 + $0x58] sm:$0xff]
      %v3278 = vld [vmem:[%s551 + $0x60] sm:$0xff]
      %v3279 = vld [vmem:[%s551 + $0x68] sm:$0xff]
      %v3280 = vld [vmem:[%s551 + $0x70] sm:$0xff]
      %v3281 = vld [vmem:[%s551 + $0x78] sm:$0xff]
      %v3282 = vadd.f32 %v3266, %v3204
      %v3283 = vadd.f32 %v3267, %v3207
      %v3284 = vadd.f32 %v3268, %v3212
      %v3285 = vadd.f32 %v3269, %v3215
      %v3286 = vadd.f32 %v3270, %v3220
      %v3287 = vadd.f32 %v3271, %v3223
      %v3288 = vadd.f32 %v3272, %v3228
      %v3289 = vadd.f32 %v3273, %v3231
      %v3290 = vadd.f32 %v3274, %v3236
      %v3291 = vadd.f32 %v3275, %v3239
      %v3292 = vadd.f32 %v3276, %v3244
      %v3293 = vadd.f32 %v3277, %v3247
      %v3294 = vadd.f32 %v3278, %v3252
      %v3295 = vadd.f32 %v3279, %v3255
      %v3296 = vadd.f32 %v3280, %v3260
      %v3297 = vadd.f32 %v3281, %v3263
      %3298 = vst.msk [vmem:[%s551] sm:$0xff] %vm803, %v3282
      %3299 = vst.msk [vmem:[%s551 + $0x8] sm:$0xff] %vm803, %v3283
      %3300 = vst.msk [vmem:[%s551 + $0x10] sm:$0xff] %vm803, %v3284
      %3301 = vst.msk [vmem:[%s551 + $0x18] sm:$0xff] %vm803, %v3285
      %3302 = vst.msk [vmem:[%s551 + $0x20] sm:$0xff] %vm803, %v3286
      %3303 = vst.msk [vmem:[%s551 + $0x28] sm:$0xff] %vm803, %v3287
      %3304 = vst.msk [vmem:[%s551 + $0x30] sm:$0xff] %vm803, %v3288
      %3305 = vst.msk [vmem:[%s551 + $0x38] sm:$0xff] %vm803, %v3289
      %3306 = vst.msk [vmem:[%s551 + $0x40] sm:$0xff] %vm803, %v3290
      %3307 = vst.msk [vmem:[%s551 + $0x48] sm:$0xff] %vm803, %v3291
      %3308 = vst.msk [vmem:[%s551 + $0x50] sm:$0xff] %vm803, %v3292
      %3309 = vst.msk [vmem:[%s551 + $0x58] sm:$0xff] %vm803, %v3293
      %3310 = vst.msk [vmem:[%s551 + $0x60] sm:$0xff] %vm803, %v3294
      %3311 = vst.msk [vmem:[%s551 + $0x68] sm:$0xff] %vm803, %v3295
      %3312 = vst.msk [vmem:[%s551 + $0x70] sm:$0xff] %vm803, %v3296
      %3313 = vst.msk [vmem:[%s551 + $0x78] sm:$0xff] %vm803, %v3297
      %s3314 = smul.u32 16, %s27
      %p3315 = scmp.lt.s32.totalorder %s26, 1
      %s3316 = scalar_select %p3315, %s26, 1
      %p3317 = scmp.lt.s32.totalorder %s3314, 31
      %s3318 = scalar_select %p3317, %s3314, 31
      %s3319 = smul.addr %s3316, 32
      %s3320 = sadd.s32 %s3318, %s3319
      %s3321 = smul.addr %s3320, 8
      %s3322 = scalar_lea.vmem %s11, %s3321
      // Predicated region
      $region73: #{tpu_custom_call.1} parent=63 // pred_check
        %p3323 = pneg %p322
      $region74: #{tpu_custom_call.1} parent=63 // pred_check_branch
        %3325 = sbr.rel (%p3323) target = $region76
      $region75: #{tpu_custom_call.1} parent=63 // pred_region
        %s3326 = smul.u32 16, %s27
      $region76: #{tpu_custom_call.1} parent=63 // pred_fallthru
        _
    $region64: #{tpu_custom_call.1} parent=5 // pred_fallthru
      _
    %p3327 = scmp.le.s32.totalorder 2, %s17
    // Predicated region
    $region77: #{tpu_custom_call.1} parent=5 // pred_check
      %p3328 = pneg %p3327
    $region78: #{tpu_custom_call.1} parent=5 // pred_check_branch
      %3330 = sbr.rel (%p3328) target = $region80
    $region79: #{tpu_custom_call.1} parent=5 // pred_region
      %s3331 = ssub.s32 %s17, 2
      // Predicated region
      $region81: #{tpu_custom_call.1} parent=79 // pred_check
        %p3332 = pneg %p328
      $region82: #{tpu_custom_call.1} parent=79 // pred_check_branch
        %3334 = sbr.rel (%p3332) target = $region84
      $region83: #{tpu_custom_call.1} parent=79 // pred_region
        %s3335 = smul.u32 16, %s29
        %p3336 = scmp.lt.s32.totalorder %s28, 1
        %s3337 = scalar_select %p3336, %s28, 1
        %p3338 = scmp.lt.s32.totalorder %s3335, 31
        %s3339 = scalar_select %p3338, %s3335, 31
        %s3340 = smul.addr %s3337, 32
        %s3341 = sadd.s32 %s3339, %s3340
        %s3342 = smul.addr %s3341, 8
        %s3343 = scalar_lea.vmem %s11, %s3342
      $region84: #{tpu_custom_call.1} parent=79 // pred_fallthru
        _
    $region80: #{tpu_custom_call.1} parent=5 // pred_fallthru
      _
  $region6: #{tpu_custom_call.1} parent=0 // loop_footer
    %s21 = sadd.s32 1, %s17
  $region7: #{tpu_custom_call.1} parent=0 // loop_footer_branch
    %16 = sbr.rel target = $region3
  $region8: #{tpu_custom_call.1} parent=0 // loop_exit
    _

</llo_original>
